<compile_context>
chip_gen: v6e
topology: v6e:2x2x1
jax: 0.10.0
libtpu: 0.0.40
codegen_flags: <defaults>
</compile_context>

<pallas_src>
import numpy as np
import jax
import jax.numpy as jnp
from jax.experimental import pallas as pl
from jax.experimental.pallas import tpu as pltpu

N_IN = 34                 # input features
N_DIMS = 1                # output dims of both heads
N_DIMS1 = 34 + 1 - 19     # = 16, input to lin4 (1 col true_ch4 + first 15 cols of x)
NEURONS = 800
NEURONS2 = 200

# lane-aligned padded hidden sizes (padding is exact zeros -> same math)
NP = 896                  # 800 padded up to a multiple of 128
NP2 = 256                 # 200 padded up to a multiple of 128
OUT_W = 128               # packed lane-dense output width


def _round_up(n, m):
    return ((n + m - 1) // m) * m


def _net_kernel(x_ref, tc_ref,
                w1_ref, b1_ref, w2_ref, b2_ref, w3_ref,
                w4x_ref, w4t_ref, b4_ref, w5_ref, b5_ref, w7_ref,
                b37_ref, out_ref):
    """Fused dual-head MLP forward for one batch tile.

    x_ref:  (tb, 34)  bf16     tc_ref: (tb, 1) f32 (true_ch4)
    weights are bf16, biases / 1-col projection rows are f32.
    out_ref: (tb, 128) f32, col 0 = |ch4_conc|, col 1 = |ch4_emm|, rest 0.
    """
    x = x_ref[...]        # (tb, 34) bf16
    tc = tc_ref[...]      # (tb, 1)  f32

    # --- concentration head: lin1 -> relu -> lin2 -> relu -> (lin3 as lane reduce) ---
    y = jnp.dot(x, w1_ref[...], preferred_element_type=jnp.float32) + b1_ref[...]
    y = jnp.maximum(y, 0.0)
    y = jnp.dot(y.astype(jnp.bfloat16), w2_ref[...],
                preferred_element_type=jnp.float32) + b2_ref[...]
    y = jnp.maximum(y, 0.0)
    conc = jnp.sum(y * w3_ref[...], axis=-1, keepdims=True)          # (tb, 1) f32

    # --- emission head: lin4(cat(true_ch4, x[:, :15])) folded into two terms ---
    z = jnp.dot(x, w4x_ref[...], preferred_element_type=jnp.float32)  # rows >=15 of w4x are 0
    z = z + tc * w4t_ref[...] + b4_ref[...]
    z = jnp.maximum(z, 0.0)
    z = jnp.dot(z.astype(jnp.bfloat16), w5_ref[...],
                preferred_element_type=jnp.float32) + b5_ref[...]
    z = jnp.maximum(z, 0.0)
    emm = jnp.sum(z * w7_ref[...], axis=-1, keepdims=True)           # (tb, 1) f32

    # --- pack both heads into one lane-dense (tb, 128) slab; add bias, then abs ---
    tb = out_ref.shape[0]
    lane = jax.lax.broadcasted_iota(jnp.int32, (tb, OUT_W), 1)
    packed = jnp.where(lane == 0, conc, jnp.where(lane == 1, emm, 0.0)) + b37_ref[...]
    out_ref[...] = jnp.abs(packed).astype(out_ref.dtype)


def _pad2(a, shape, dtype=None):
    """Zero-pad 2-D array `a` into `shape` (top-left corner), optional dtype cast."""
    dtype = a.dtype if dtype is None else dtype
    out = jnp.zeros(shape, dtype)
    return out.at[: a.shape[0], : a.shape[1]].set(a.astype(dtype))


def prepare_params(params):
    """Pad/cast raw [in, out] f32 params to the kernel layout (bf16 matmul weights)."""
    bf = jnp.bfloat16
    w1p = _pad2(params["w1"], (N_IN, NP), bf)
    b1p = _pad2(params["b1"], (1, NP))
    w2p = _pad2(params["w2"], (NP, NP), bf)
    b2p = _pad2(params["b2"], (1, NP))
    w3row = _pad2(params["w3"].T, (1, NP))                    # f32, lane-reduce weights
    w4xp = _pad2(params["w4"][1:N_DIMS1, :], (N_IN, NP2), bf)  # rows 0..14 real, 15..33 zero
    w4tc = _pad2(params["w4"][0:1, :], (1, NP2))               # true_ch4 column of lin4
    b4p = _pad2(params["b4"], (1, NP2))
    w5p = _pad2(params["w5"], (NP2, NP2), bf)
    b5p = _pad2(params["b5"], (1, NP2))
    w7row = _pad2(params["w7"].T, (1, NP2))
    b37 = (jnp.zeros((1, OUT_W), jnp.float32)
           .at[0, 0].set(params["b3"][0, 0])
           .at[0, 1].set(params["b7"][0, 0]))
    return (w1p, b1p, w2p, b2p, w3row, w4xp, w4tc, b4p, w5p, b5p, w7row, b37)


def net_forward(params, x, t, true_ch4, *, tile_b=256):
    """Mirrors Net.forward(x, t, true_ch4) -> (ch4_conc, ch4_emm). `t` is unused."""
    del t  # unused in forward, exactly as in the PyTorch module
    B = x.shape[0]
    weight_args = prepare_params(params)

    tb = min(tile_b, _round_up(B, 8))          # batch tile (multiple of 8 sublanes)
    grid = (pl.cdiv(B, tb),)

    x_bf = x.astype(jnp.bfloat16)
    tc = true_ch4.astype(jnp.float32)

    data_specs = [
        pl.BlockSpec((tb, N_IN), lambda i: (i, 0)),   # x tile
        pl.BlockSpec((tb, 1), lambda i: (i, 0)),      # true_ch4 tile
    ]
    # weights/biases: full array as one block, constant index -> resident across grid
    weight_specs = [pl.BlockSpec(w.shape, lambda i: (0, 0)) for w in weight_args]

    packed = pl.pallas_call(
        _net_kernel,
        grid=grid,
        in_specs=data_specs + weight_specs,
        out_specs=pl.BlockSpec((tb, OUT_W), lambda i: (i, 0)),
        out_shape=jax.ShapeDtypeStruct((B, OUT_W), jnp.float32),
        compiler_params=pltpu.CompilerParams(
            dimension_semantics=("parallel",)),
    )(x_bf, tc, *weight_args)

    ch4_conc = packed[:, 0:1]
    ch4_emm = packed[:, 1:2]
    return ch4_conc, ch4_emm


def init_params(key):
    """PyTorch nn.Linear-style init (U[-1/sqrt(in), 1/sqrt(in)]), stored as [in, out].

    Only layers used in forward are materialized (lin22, lin222, lin6 unused).
    """
    def linear(k, fan_in, fan_out):
        kw, kb = jax.random.split(k)
        lim = 1.0 / np.sqrt(fan_in)
        w = jax.random.uniform(kw, (fan_in, fan_out), jnp.float32, -lim, lim)
        b = jax.random.uniform(kb, (1, fan_out), jnp.float32, -lim, lim)
        return w, b

    keys = jax.random.split(key, 6)
    w1, b1 = linear(keys[0], N_IN, NEURONS)
    w2, b2 = linear(keys[1], NEURONS, NEURONS)
    w3, b3 = linear(keys[2], NEURONS, N_DIMS)
    w4, b4 = linear(keys[3], N_DIMS1, NEURONS2)
    w5, b5 = linear(keys[4], NEURONS2, NEURONS2)
    w7, b7 = linear(keys[5], NEURONS2, N_DIMS)
    return dict(w1=w1, b1=b1, w2=w2, b2=b2, w3=w3, b3=b3,
                w4=w4, b4=b4, w5=w5, b5=b5, w7=w7, b7=b7)


def net_forward_ref(params, x, t, true_ch4):
    """Pure-JAX f32 reference (original module math)."""
    del t
    relu = lambda v: jnp.maximum(v, 0.0)
    y = relu(x @ params["w1"] + params["b1"])
    y = relu(y @ params["w2"] + params["b2"])
    ch4_conc = jnp.abs(y @ params["w3"] + params["b3"])
    dc = jnp.concatenate([true_ch4, x[:, :15]], axis=1)
    z = relu(dc @ params["w4"] + params["b4"])
    z = relu(z @ params["w5"] + params["b5"])
    ch4_emm = jnp.abs(z @ params["w7"] + params["b7"])
    return ch4_conc, ch4_emm


def net_forward_ref_bf16(params, x, t, true_ch4):
    """Reference mimicking the kernel's bf16-weight / f32-accumulate numerics."""
    del t
    bf, f32 = jnp.bfloat16, jnp.float32
    dot = lambda a, b: jnp.dot(a, b.astype(bf), preferred_element_type=f32)
    xb = x.astype(bf)
    y = jnp.maximum(dot(xb, params["w1"]) + params["b1"], 0.0)
    y = jnp.maximum(dot(y.astype(bf), params["w2"]) + params["b2"], 0.0)
    ch4_conc = jnp.abs(y @ params["w3"] + params["b3"])
    z = dot(xb[:, :15], params["w4"][1:N_DIMS1]) + true_ch4 * params["w4"][0:1] + params["b4"]
    z = jnp.maximum(z, 0.0)
    z = jnp.maximum(dot(z.astype(bf), params["w5"]) + params["b5"], 0.0)
    ch4_emm = jnp.abs(z @ params["w7"] + params["b7"])
    return ch4_conc, ch4_emm


if __name__ == "__main__":
    key = jax.random.PRNGKey(0)
    kp, kx, kt, kc = jax.random.split(key, 4)

    B = 64  # small batch; tile_b=32 -> 2-step grid exercises pipelining + resident weights
    params = init_params(kp)
    x = jax.random.normal(kx, (B, N_IN), jnp.float32)
    t = jax.random.normal(kt, (B, 1), jnp.float32)          # unused by forward
    true_ch4 = jax.random.normal(kc, (B, 1), jnp.float32)

    ch4_conc, ch4_emm = net_forward(params, x, t, true_ch4, tile_b=32)
    jax.block_until_ready((ch4_conc, ch4_emm))

    # Tight check against a reference using the same bf16-weight / f32-accumulate numerics.
    rc_q, re_q = net_forward_ref_bf16(params, x, t, true_ch4)
    np.testing.assert_allclose(np.asarray(ch4_conc), np.asarray(rc_q), rtol=1e-2, atol=1e-2)
    np.testing.assert_allclose(np.asarray(ch4_emm), np.asarray(re_q), rtol=1e-2, atol=1e-2)

    # Loose check against the original full-f32 module math (bf16 quantization error).
    rc_f, re_f = net_forward_ref(params, x, t, true_ch4)
    np.testing.assert_allclose(np.asarray(ch4_conc), np.asarray(rc_f), rtol=1e-1, atol=1e-1)
    np.testing.assert_allclose(np.asarray(ch4_emm), np.asarray(re_f), rtol=1e-1, atol=1e-1)

    assert ch4_conc.shape == (B, N_DIMS) and ch4_emm.shape == (B, N_DIMS)
    print("KERNEL_OK")
</pallas_src>

<mosaic_0001>
module attributes {stable_mosaic.version = 11 : i64} {
  func.func @_net_kernel(%arg0: i32, %arg1: memref<32x34xbf16, #tpu.memory_space<vmem>>, %arg2: memref<32x1xf32, #tpu.memory_space<vmem>>, %arg3: memref<34x896xbf16, #tpu.memory_space<vmem>>, %arg4: memref<1x896xf32, #tpu.memory_space<vmem>>, %arg5: memref<896x896xbf16, #tpu.memory_space<vmem>>, %arg6: memref<1x896xf32, #tpu.memory_space<vmem>>, %arg7: memref<1x896xf32, #tpu.memory_space<vmem>>, %arg8: memref<34x256xbf16, #tpu.memory_space<vmem>>, %arg9: memref<1x256xf32, #tpu.memory_space<vmem>>, %arg10: memref<1x256xf32, #tpu.memory_space<vmem>>, %arg11: memref<256x256xbf16, #tpu.memory_space<vmem>>, %arg12: memref<1x256xf32, #tpu.memory_space<vmem>>, %arg13: memref<1x256xf32, #tpu.memory_space<vmem>>, %arg14: memref<1x128xf32, #tpu.memory_space<vmem>>, %arg15: memref<32x128xf32, #tpu.memory_space<vmem>>) attributes {dimension_semantics = [#tpu.dimension_semantics<parallel>], iteration_bounds = array<i64: 2>, scalar_prefetch = 0 : i64, scratch_operands = 0 : i64, tpu.core_type = #tpu.core_type<tc>, window_params = [{transform_indices = @transform_0, window_bounds = array<i64: 32, 34>}, {transform_indices = @transform_1, window_bounds = array<i64: 32, 1>}, {pipeline_mode = #tpu.pipeline_mode<synchronous>, transform_indices = @transform_2, window_bounds = array<i64: 34, 896>}, {pipeline_mode = #tpu.pipeline_mode<synchronous>, transform_indices = @transform_3, window_bounds = array<i64: 1, 896>}, {pipeline_mode = #tpu.pipeline_mode<synchronous>, transform_indices = @transform_4, window_bounds = array<i64: 896, 896>}, {pipeline_mode = #tpu.pipeline_mode<synchronous>, transform_indices = @transform_5, window_bounds = array<i64: 1, 896>}, {pipeline_mode = #tpu.pipeline_mode<synchronous>, transform_indices = @transform_6, window_bounds = array<i64: 1, 896>}, {pipeline_mode = #tpu.pipeline_mode<synchronous>, transform_indices = @transform_7, window_bounds = array<i64: 34, 256>}, {pipeline_mode = #tpu.pipeline_mode<synchronous>, transform_indices = @transform_8, window_bounds = array<i64: 1, 256>}, {pipeline_mode = #tpu.pipeline_mode<synchronous>, transform_indices = @transform_9, window_bounds = array<i64: 1, 256>}, {pipeline_mode = #tpu.pipeline_mode<synchronous>, transform_indices = @transform_10, window_bounds = array<i64: 256, 256>}, {pipeline_mode = #tpu.pipeline_mode<synchronous>, transform_indices = @transform_11, window_bounds = array<i64: 1, 256>}, {pipeline_mode = #tpu.pipeline_mode<synchronous>, transform_indices = @transform_12, window_bounds = array<i64: 1, 256>}, {pipeline_mode = #tpu.pipeline_mode<synchronous>, transform_indices = @transform_13, window_bounds = array<i64: 1, 128>}, {transform_indices = @transform_14, window_bounds = array<i64: 32, 128>}]} {
    %c0 = arith.constant 0 : index
    %c0_0 = arith.constant 0 : index
    %0 = vector.load %arg1[%c0, %c0_0] : memref<32x34xbf16, #tpu.memory_space<vmem>>, vector<32x34xbf16>
    %c0_1 = arith.constant 0 : index
    %c0_2 = arith.constant 0 : index
    %1 = vector.load %arg2[%c0_1, %c0_2] : memref<32x1xf32, #tpu.memory_space<vmem>>, vector<32x1xf32>
    %c0_3 = arith.constant 0 : index
    %c0_4 = arith.constant 0 : index
    %2 = vector.load %arg3[%c0_3, %c0_4] : memref<34x896xbf16, #tpu.memory_space<vmem>>, vector<34x896xbf16>
    %cst = arith.constant dense<0.000000e+00> : vector<32x896xf32>
    %3 = tpu.matmul %0, %2, %cst {dimension_numbers = #tpu.dot_dimension_numbers<[1], [0], [0], [1], [0, 0, 1, 1], [], []>} : vector<32x34xbf16>, vector<34x896xbf16>, vector<32x896xf32> -> vector<32x896xf32>
    %c0_5 = arith.constant 0 : index
    %c0_6 = arith.constant 0 : index
    %4 = vector.load %arg4[%c0_5, %c0_6] : memref<1x896xf32, #tpu.memory_space<vmem>>, vector<1x896xf32>
    %5 = vector.broadcast %4 : vector<1x896xf32> to vector<32x896xf32>
    %6 = arith.addf %3, %5 : vector<32x896xf32>
    %cst_7 = arith.constant 0.000000e+00 : f32
    %7 = vector.broadcast %cst_7 : f32 to vector<32x896xf32>
    %8 = arith.maximumf %6, %7 : vector<32x896xf32>
    %9 = arith.truncf %8 : vector<32x896xf32> to vector<32x896xbf16>
    %c0_8 = arith.constant 0 : index
    %c0_9 = arith.constant 0 : index
    %10 = vector.load %arg5[%c0_8, %c0_9] : memref<896x896xbf16, #tpu.memory_space<vmem>>, vector<896x896xbf16>
    %cst_10 = arith.constant dense<0.000000e+00> : vector<32x896xf32>
    %11 = tpu.matmul %9, %10, %cst_10 {dimension_numbers = #tpu.dot_dimension_numbers<[1], [0], [0], [1], [0, 0, 1, 1], [], []>} : vector<32x896xbf16>, vector<896x896xbf16>, vector<32x896xf32> -> vector<32x896xf32>
    %c0_11 = arith.constant 0 : index
    %c0_12 = arith.constant 0 : index
    %12 = vector.load %arg6[%c0_11, %c0_12] : memref<1x896xf32, #tpu.memory_space<vmem>>, vector<1x896xf32>
    %13 = vector.broadcast %12 : vector<1x896xf32> to vector<32x896xf32>
    %14 = arith.addf %11, %13 : vector<32x896xf32>
    %cst_13 = arith.constant 0.000000e+00 : f32
    %15 = vector.broadcast %cst_13 : f32 to vector<32x896xf32>
    %16 = arith.maximumf %14, %15 : vector<32x896xf32>
    %c0_14 = arith.constant 0 : index
    %c0_15 = arith.constant 0 : index
    %17 = vector.load %arg7[%c0_14, %c0_15] : memref<1x896xf32, #tpu.memory_space<vmem>>, vector<1x896xf32>
    %18 = vector.broadcast %17 : vector<1x896xf32> to vector<32x896xf32>
    %19 = arith.mulf %16, %18 : vector<32x896xf32>
    %cst_16 = arith.constant dense<0.000000e+00> : vector<32xf32>
    %20 = vector.multi_reduction <add>, %19, %cst_16 [1] : vector<32x896xf32> to vector<32xf32>
    %21 = vector.shape_cast %20 : vector<32xf32> to vector<32x1xf32>
    %c0_17 = arith.constant 0 : index
    %c0_18 = arith.constant 0 : index
    %22 = vector.load %arg8[%c0_17, %c0_18] : memref<34x256xbf16, #tpu.memory_space<vmem>>, vector<34x256xbf16>
    %cst_19 = arith.constant dense<0.000000e+00> : vector<32x256xf32>
    %23 = tpu.matmul %0, %22, %cst_19 {dimension_numbers = #tpu.dot_dimension_numbers<[1], [0], [0], [1], [0, 0, 1, 1], [], []>} : vector<32x34xbf16>, vector<34x256xbf16>, vector<32x256xf32> -> vector<32x256xf32>
    %c0_20 = arith.constant 0 : index
    %c0_21 = arith.constant 0 : index
    %24 = vector.load %arg9[%c0_20, %c0_21] : memref<1x256xf32, #tpu.memory_space<vmem>>, vector<1x256xf32>
    %25 = vector.broadcast %1 : vector<32x1xf32> to vector<32x256xf32>
    %26 = vector.broadcast %24 : vector<1x256xf32> to vector<32x256xf32>
    %27 = arith.mulf %25, %26 : vector<32x256xf32>
    %28 = arith.addf %23, %27 : vector<32x256xf32>
    %c0_22 = arith.constant 0 : index
    %c0_23 = arith.constant 0 : index
    %29 = vector.load %arg10[%c0_22, %c0_23] : memref<1x256xf32, #tpu.memory_space<vmem>>, vector<1x256xf32>
    %30 = vector.broadcast %29 : vector<1x256xf32> to vector<32x256xf32>
    %31 = arith.addf %28, %30 : vector<32x256xf32>
    %cst_24 = arith.constant 0.000000e+00 : f32
    %32 = vector.broadcast %cst_24 : f32 to vector<32x256xf32>
    %33 = arith.maximumf %31, %32 : vector<32x256xf32>
    %34 = arith.truncf %33 : vector<32x256xf32> to vector<32x256xbf16>
    %c0_25 = arith.constant 0 : index
    %c0_26 = arith.constant 0 : index
    %35 = vector.load %arg11[%c0_25, %c0_26] : memref<256x256xbf16, #tpu.memory_space<vmem>>, vector<256x256xbf16>
    %cst_27 = arith.constant dense<0.000000e+00> : vector<32x256xf32>
    %36 = tpu.matmul %34, %35, %cst_27 {dimension_numbers = #tpu.dot_dimension_numbers<[1], [0], [0], [1], [0, 0, 1, 1], [], []>} : vector<32x256xbf16>, vector<256x256xbf16>, vector<32x256xf32> -> vector<32x256xf32>
    %c0_28 = arith.constant 0 : index
    %c0_29 = arith.constant 0 : index
    %37 = vector.load %arg12[%c0_28, %c0_29] : memref<1x256xf32, #tpu.memory_space<vmem>>, vector<1x256xf32>
    %38 = vector.broadcast %37 : vector<1x256xf32> to vector<32x256xf32>
    %39 = arith.addf %36, %38 : vector<32x256xf32>
    %cst_30 = arith.constant 0.000000e+00 : f32
    %40 = vector.broadcast %cst_30 : f32 to vector<32x256xf32>
    %41 = arith.maximumf %39, %40 : vector<32x256xf32>
    %c0_31 = arith.constant 0 : index
    %c0_32 = arith.constant 0 : index
    %42 = vector.load %arg13[%c0_31, %c0_32] : memref<1x256xf32, #tpu.memory_space<vmem>>, vector<1x256xf32>
    %43 = vector.broadcast %42 : vector<1x256xf32> to vector<32x256xf32>
    %44 = arith.mulf %41, %43 : vector<32x256xf32>
    %cst_33 = arith.constant dense<0.000000e+00> : vector<32xf32>
    %45 = vector.multi_reduction <add>, %44, %cst_33 [1] : vector<32x256xf32> to vector<32xf32>
    %46 = vector.shape_cast %45 : vector<32xf32> to vector<32x1xf32>
    %47 = tpu.iota {dimensions = array<i32: 1>} : vector<32x128xi32>
    %c0_i32 = arith.constant 0 : i32
    %48 = vector.broadcast %c0_i32 : i32 to vector<32x128xi32>
    %49 = arith.cmpi eq, %47, %48 : vector<32x128xi32>
    %c1_i32 = arith.constant 1 : i32
    %50 = vector.broadcast %c1_i32 : i32 to vector<32x128xi32>
    %51 = arith.cmpi eq, %47, %50 : vector<32x128xi32>
    %cst_34 = arith.constant 0.000000e+00 : f32
    %52 = vector.shape_cast %46 : vector<32x1xf32> to vector<32x1xf32>
    %53 = vector.broadcast %52 : vector<32x1xf32> to vector<32x128xf32>
    %54 = vector.broadcast %cst_34 : f32 to vector<32x128xf32>
    %55 = arith.select %51, %53, %54 : vector<32x128xi1>, vector<32x128xf32>
    %56 = vector.shape_cast %21 : vector<32x1xf32> to vector<32x1xf32>
    %57 = vector.broadcast %56 : vector<32x1xf32> to vector<32x128xf32>
    %58 = arith.select %49, %57, %55 : vector<32x128xi1>, vector<32x128xf32>
    %c0_35 = arith.constant 0 : index
    %c0_36 = arith.constant 0 : index
    %59 = vector.load %arg14[%c0_35, %c0_36] : memref<1x128xf32, #tpu.memory_space<vmem>>, vector<1x128xf32>
    %60 = vector.broadcast %59 : vector<1x128xf32> to vector<32x128xf32>
    %61 = arith.addf %58, %60 : vector<32x128xf32>
    %62 = math.absf %61 : vector<32x128xf32>
    %c0_37 = arith.constant 0 : index
    %c0_38 = arith.constant 0 : index
    %63 = vector.load %arg15[%c0_37, %c0_38] : memref<32x128xf32, #tpu.memory_space<vmem>>, vector<32x128xf32>
    tpu.vector_store %arg15[%c0_37, %c0_38], %62 {strides = array<i32>} : memref<32x128xf32, #tpu.memory_space<vmem>>, vector<32x128xf32>,
    return
  }
  func.func @transform_0(%arg0: i32) -> (i32, i32) {
    %c0_i32 = arith.constant 0 : i32
    %c0_i32_0 = arith.constant 0 : i32
    return %arg0, %c0_i32 : i32, i32
  }
  func.func @transform_1(%arg0: i32) -> (i32, i32) {
    %c0_i32 = arith.constant 0 : i32
    %c0_i32_0 = arith.constant 0 : i32
    return %arg0, %c0_i32 : i32, i32
  }
  func.func @transform_2(%arg0: i32) -> (i32, i32) {
    %c0_i32 = arith.constant 0 : i32
    %c0_i32_0 = arith.constant 0 : i32
    %c0_i32_1 = arith.constant 0 : i32
    return %c0_i32, %c0_i32_0 : i32, i32
  }
  func.func @transform_3(%arg0: i32) -> (i32, i32) {
    %c0_i32 = arith.constant 0 : i32
    %c0_i32_0 = arith.constant 0 : i32
    %c0_i32_1 = arith.constant 0 : i32
    return %c0_i32, %c0_i32_0 : i32, i32
  }
  func.func @transform_4(%arg0: i32) -> (i32, i32) {
    %c0_i32 = arith.constant 0 : i32
    %c0_i32_0 = arith.constant 0 : i32
    %c0_i32_1 = arith.constant 0 : i32
    return %c0_i32, %c0_i32_0 : i32, i32
  }
  func.func @transform_5(%arg0: i32) -> (i32, i32) {
    %c0_i32 = arith.constant 0 : i32
    %c0_i32_0 = arith.constant 0 : i32
    %c0_i32_1 = arith.constant 0 : i32
    return %c0_i32, %c0_i32_0 : i32, i32
  }
  func.func @transform_6(%arg0: i32) -> (i32, i32) {
    %c0_i32 = arith.constant 0 : i32
    %c0_i32_0 = arith.constant 0 : i32
    %c0_i32_1 = arith.constant 0 : i32
    return %c0_i32, %c0_i32_0 : i32, i32
  }
  func.func @transform_7(%arg0: i32) -> (i32, i32) {
    %c0_i32 = arith.constant 0 : i32
    %c0_i32_0 = arith.constant 0 : i32
    %c0_i32_1 = arith.constant 0 : i32
    return %c0_i32, %c0_i32_0 : i32, i32
  }
  func.func @transform_8(%arg0: i32) -> (i32, i32) {
    %c0_i32 = arith.constant 0 : i32
    %c0_i32_0 = arith.constant 0 : i32
    %c0_i32_1 = arith.constant 0 : i32
    return %c0_i32, %c0_i32_0 : i32, i32
  }
  func.func @transform_9(%arg0: i32) -> (i32, i32) {
    %c0_i32 = arith.constant 0 : i32
    %c0_i32_0 = arith.constant 0 : i32
    %c0_i32_1 = arith.constant 0 : i32
    return %c0_i32, %c0_i32_0 : i32, i32
  }
  func.func @transform_10(%arg0: i32) -> (i32, i32) {
    %c0_i32 = arith.constant 0 : i32
    %c0_i32_0 = arith.constant 0 : i32
    %c0_i32_1 = arith.constant 0 : i32
    return %c0_i32, %c0_i32_0 : i32, i32
  }
  func.func @transform_11(%arg0: i32) -> (i32, i32) {
    %c0_i32 = arith.constant 0 : i32
    %c0_i32_0 = arith.constant 0 : i32
    %c0_i32_1 = arith.constant 0 : i32
    return %c0_i32, %c0_i32_0 : i32, i32
  }
  func.func @transform_12(%arg0: i32) -> (i32, i32) {
    %c0_i32 = arith.constant 0 : i32
    %c0_i32_0 = arith.constant 0 : i32
    %c0_i32_1 = arith.constant 0 : i32
    return %c0_i32, %c0_i32_0 : i32, i32
  }
  func.func @transform_13(%arg0: i32) -> (i32, i32) {
    %c0_i32 = arith.constant 0 : i32
    %c0_i32_0 = arith.constant 0 : i32
    %c0_i32_1 = arith.constant 0 : i32
    return %c0_i32, %c0_i32_0 : i32, i32
  }
  func.func @transform_14(%arg0: i32) -> (i32, i32) {
    %c0_i32 = arith.constant 0 : i32
    %c0_i32_0 = arith.constant 0 : i32
    return %arg0, %c0_i32 : i32, i32
  }
}

</mosaic_0001>

<llo_original>
// kernel: tpu_custom_call.1
$region0: #{tpu_custom_call.1}
  #allocation0 [shape = 'u32[]', space=smem, size = 0x4, offset = 0x4, fixed_abs, tag = 'smem constant byte address 0x4 - core index']
  #allocation1 [shape = 'u32[144,128]{1,0:T(1,128)}', space=vmem, size = 0x12000, scoped, tag = 'internal scratch']
  %s0 = inlined_call_operand.vmem [shape: bf16[64,34], index: 0, kind: input, shape index: {}]
  %s1 = inlined_call_operand.vmem [shape: f32[64,1], index: 1, kind: input, shape index: {}]
  %s2 = inlined_call_operand.hbm [shape: bf16[34,896], index: 2, kind: input, shape index: {}]
  %s3 = inlined_call_operand.hbm [shape: f32[1,896], index: 3, kind: input, shape index: {}]
  %s4 = inlined_call_operand.hbm [shape: bf16[896,896], index: 4, kind: input, shape index: {}]
  %s5 = inlined_call_operand.hbm [shape: f32[1,896], index: 5, kind: input, shape index: {}]
  %s6 = inlined_call_operand.hbm [shape: f32[1,896], index: 6, kind: input, shape index: {}]
  %s7 = inlined_call_operand.hbm [shape: bf16[34,256], index: 7, kind: input, shape index: {}]
  %s8 = inlined_call_operand.hbm [shape: f32[1,256], index: 8, kind: input, shape index: {}]
  %s9 = inlined_call_operand.hbm [shape: f32[1,256], index: 9, kind: input, shape index: {}]
  %s10 = inlined_call_operand.hbm [shape: bf16[256,256], index: 10, kind: input, shape index: {}]
  %s11 = inlined_call_operand.hbm [shape: f32[1,256], index: 11, kind: input, shape index: {}]
  %s12 = inlined_call_operand.hbm [shape: f32[1,256], index: 12, kind: input, shape index: {}]
  %s13 = inlined_call_operand.hbm [shape: f32[1,128], index: 13, kind: input, shape index: {}]
  %s14 = inlined_call_operand.hbm [shape: f32[64,128], index: 14, kind: output, shape index: {}]
  %s15 = sld [smem:[#allocation0]]
  $region137: #{tpu_custom_call.1} parent=0
    _
  %s17 = ssub.s32 1, %s15
  %s18 = scalar_select 0, %s17, %s15
  $region1: #{tpu_custom_call.1} parent=0
    #allocation2 [shape = 'u8[71680]{0}', space=vmem, size = 0x11800, scoped, tag = 'input window, operand 2, single buffered']
    #allocation3 [shape = 's32[2]{0}', space=sflag, size = 0x8, scoped, tag = 'scoped memory for tpu_custom_call.1']
    #allocation4 [shape = 's32[2]{0}', space=sflag, size = 0x8, scoped, tag = 'scoped memory for tpu_custom_call.1']
    #allocation5 [shape = 'u8[3584]{0}', space=vmem, size = 0x1000, scoped, tag = 'input window, operand 3, single buffered']
    #allocation6 [shape = 's32[1]{0}', space=sflag, size = 0x4, scoped, tag = 'scoped memory for tpu_custom_call.1']
    #allocation7 [shape = 'u8[1605632]{0}', space=vmem, size = 0x188000, scoped, tag = 'input window, operand 4, single buffered']
    #allocation8 [shape = 'u8[3584]{0}', space=vmem, size = 0x1000, scoped, tag = 'input window, operand 5, single buffered']
    #allocation9 [shape = 's32[1]{0}', space=sflag, size = 0x4, scoped, tag = 'scoped memory for tpu_custom_call.1']
    #allocation10 [shape = 'u8[3584]{0}', space=vmem, size = 0x1000, scoped, tag = 'input window, operand 6, single buffered']
    #allocation11 [shape = 'u8[20480]{0}', space=vmem, size = 0x5000, scoped, tag = 'input window, operand 7, single buffered']
    #allocation12 [shape = 's32[1]{0}', space=sflag, size = 0x4, scoped, tag = 'scoped memory for tpu_custom_call.1']
    #allocation13 [shape = 'u8[1024]{0}', space=vmem, size = 0x400, scoped, tag = 'input window, operand 8, single buffered']
    #allocation14 [shape = 'u8[1024]{0}', space=vmem, size = 0x400, scoped, tag = 'input window, operand 9, single buffered']
    #allocation15 [shape = 's32[1]{0}', space=sflag, size = 0x4, scoped, tag = 'scoped memory for tpu_custom_call.1']
    #allocation16 [shape = 'u8[131072]{0}', space=vmem, size = 0x20000, scoped, tag = 'input window, operand 10, single buffered']
    #allocation17 [shape = 'u8[1024]{0}', space=vmem, size = 0x400, scoped, tag = 'input window, operand 11, single buffered']
    #allocation18 [shape = 's32[1]{0}', space=sflag, size = 0x4, scoped, tag = 'scoped memory for tpu_custom_call.1']
    #allocation19 [shape = 'u8[1024]{0}', space=vmem, size = 0x400, scoped, tag = 'input window, operand 12, single buffered']
    #allocation20 [shape = 'u8[512]{0}', space=vmem, size = 0x400, scoped, tag = 'input window, operand 13, single buffered']
    #allocation21 [shape = 's32[1]{0}', space=sflag, size = 0x4, scoped, tag = 'scoped memory for tpu_custom_call.1']
    #allocation22 [shape = 'u8[32768]{0}', space=vmem, size = 0x8000, scoped, tag = 'output window, operand 0']
    %19 = vsyncpa [#allocation3], 0
    %20 = vsyncpa [#allocation6], 0
    %21 = vsyncpa [#allocation9], 0
    %22 = vsyncpa [#allocation12], 0
    %23 = vsyncpa [#allocation15], 0
    %24 = vsyncpa [#allocation18], 0
    %25 = vsyncpa [#allocation21], 0
    %26 = vsyncpa [#allocation4], 0
    %s27 = scalar_lea.sflag [#allocation4], 1
    %28 = vsyncpa %s27, 0
    loop: start=0, step=1, limit=4
    $region2: #{tpu_custom_call.1} parent=1 // loop_pre_header
      _
    $region3: #{tpu_custom_call.1} parent=1 // loop_header
      %s30 = sphi 0, %s34
      %p31 = scmp.ge.s32.totalorder %s30, 4
      %s40 = sphi 0, %s42
      %s43 = sphi 0, %s40
      %s44 = sphi 0, %s43
      %s60 = sphi 0, %s44
      %s66 = sphi 0, %s68
      %s69 = sphi 0, %s66
      %s70 = sphi 0, %s69
      %s86 = sphi 0, %s70
      %s90 = sphi 0, %s90
      %s92 = sphi 0, %s90
      %s93 = sphi 0, %s92
      %s107 = sphi 0, %s93
      %s111 = sphi 0, %s111
      %s113 = sphi 0, %s111
      %s114 = sphi 0, %s113
      %s128 = sphi 0, %s114
      %s132 = sphi 0, %s132
      %s134 = sphi 0, %s132
      %s135 = sphi 0, %s134
      %s149 = sphi 0, %s135
      %s153 = sphi 0, %s153
      %s155 = sphi 0, %s153
      %s156 = sphi 0, %s155
      %s170 = sphi 0, %s156
      %s174 = sphi 0, %s174
      %s176 = sphi 0, %s174
      %s177 = sphi 0, %s176
      %s191 = sphi 0, %s177
      %s195 = sphi 0, %s195
      %s197 = sphi 0, %s195
      %s198 = sphi 0, %s197
      %s212 = sphi 0, %s198
      %s216 = sphi 0, %s216
      %s218 = sphi 0, %s216
      %s219 = sphi 0, %s218
      %s233 = sphi 0, %s219
      %s237 = sphi 0, %s237
      %s239 = sphi 0, %s237
      %s240 = sphi 0, %s239
      %s254 = sphi 0, %s240
      %s258 = sphi 0, %s258
      %s260 = sphi 0, %s258
      %s261 = sphi 0, %s260
      %s275 = sphi 0, %s261
      %s279 = sphi 0, %s279
      %s281 = sphi 0, %s279
      %s282 = sphi 0, %s281
      %s296 = sphi 0, %s282
      %s300 = sphi 0, %s300
      %s302 = sphi 0, %s300
      %s303 = sphi 0, %s302
      %s317 = sphi 0, %s303
      %s321 = sphi 0, %s321
      %s323 = sphi 0, %s321
      %s324 = sphi 0, %s323
      %s338 = sphi 0, %s324
      %s344 = sphi 0, %s346
      %s347 = sphi 0, %s344
      %s348 = sphi 0, %s347
      %s364 = sphi 0, %s348
    $region4: #{tpu_custom_call.1} parent=1 // loop_header_branch
      %33 = sbr.rel (%p31) target = $region8
    $region5: #{tpu_custom_call.1} parent=1 // loop_body
      %s35 = ssub.s32 %s30, 1
      %s36 = ssub.s32 %s30, 2
      %s37 = sadd.s32 %s30, 1
      %s38 = ssub.s32 %s30, %s37
      %p39 = scmp.eq.s32.totalorder %s38, 0
      %s41 = sadd.s32 %s40, 1
      %s42 = scalar_select %p39, %s40, %s41
      %p45 = pneg %p39
      %p46 = scmp.eq.s32.totalorder %s30, 1
      %p47 = por %p45, %p46
      %p48 = scmp.ne.s32.totalorder %s40, %s43
      %p49 = scmp.eq.s32.totalorder %s30, 0
      %p50 = por %p48, %p49
      %p51 = scmp.ne.s32.totalorder %s40, %s43
      %p52 = scmp.eq.s32.totalorder %s35, 1
      %p53 = por %p51, %p52
      %p54 = scmp.ne.s32.totalorder %s43, %s44
      %p55 = scmp.eq.s32.totalorder %s35, 0
      %p56 = por %p54, %p55
      %p57 = scmp.ne.s32.totalorder %s43, %s44
      %p58 = scmp.eq.s32.totalorder %s36, 1
      %p59 = por %p57, %p58
      %p61 = scmp.ne.s32.totalorder %s44, %s60
      %p62 = scmp.eq.s32.totalorder %s36, 0
      %p63 = por %p61, %p62
      %s64 = ssub.s32 %s30, %s37
      %p65 = scmp.eq.s32.totalorder %s64, 0
      %s67 = sadd.s32 %s66, 1
      %s68 = scalar_select %p65, %s66, %s67
      %p71 = pneg %p65
      %p72 = scmp.eq.s32.totalorder %s30, 1
      %p73 = por %p71, %p72
      %p74 = scmp.ne.s32.totalorder %s66, %s69
      %p75 = scmp.eq.s32.totalorder %s30, 0
      %p76 = por %p74, %p75
      %p77 = scmp.ne.s32.totalorder %s66, %s69
      %p78 = scmp.eq.s32.totalorder %s35, 1
      %p79 = por %p77, %p78
      %p80 = scmp.ne.s32.totalorder %s69, %s70
      %p81 = scmp.eq.s32.totalorder %s35, 0
      %p82 = por %p80, %p81
      %p83 = scmp.ne.s32.totalorder %s69, %s70
      %p84 = scmp.eq.s32.totalorder %s36, 1
      %p85 = por %p83, %p84
      %p87 = scmp.ne.s32.totalorder %s70, %s86
      %p88 = scmp.eq.s32.totalorder %s36, 0
      %p89 = por %p87, %p88
      %s91 = sadd.s32 %s90, 1
      %p94 = scmp.eq.s32.totalorder %s30, 1
      %p95 = scmp.ne.s32.totalorder %s90, %s92
      %p96 = scmp.eq.s32.totalorder %s30, 0
      %p97 = por %p95, %p96
      %p98 = scmp.ne.s32.totalorder %s90, %s92
      %p99 = scmp.eq.s32.totalorder %s35, 1
      %p100 = por %p98, %p99
      %p101 = scmp.ne.s32.totalorder %s92, %s93
      %p102 = scmp.eq.s32.totalorder %s35, 0
      %p103 = por %p101, %p102
      %p104 = scmp.ne.s32.totalorder %s92, %s93
      %p105 = scmp.eq.s32.totalorder %s36, 1
      %p106 = por %p104, %p105
      %p108 = scmp.ne.s32.totalorder %s93, %s107
      %p109 = scmp.eq.s32.totalorder %s36, 0
      %p110 = por %p108, %p109
      %s112 = sadd.s32 %s111, 1
      %p115 = scmp.eq.s32.totalorder %s30, 1
      %p116 = scmp.ne.s32.totalorder %s111, %s113
      %p117 = scmp.eq.s32.totalorder %s30, 0
      %p118 = por %p116, %p117
      %p119 = scmp.ne.s32.totalorder %s111, %s113
      %p120 = scmp.eq.s32.totalorder %s35, 1
      %p121 = por %p119, %p120
      %p122 = scmp.ne.s32.totalorder %s113, %s114
      %p123 = scmp.eq.s32.totalorder %s35, 0
      %p124 = por %p122, %p123
      %p125 = scmp.ne.s32.totalorder %s113, %s114
      %p126 = scmp.eq.s32.totalorder %s36, 1
      %p127 = por %p125, %p126
      %p129 = scmp.ne.s32.totalorder %s114, %s128
      %p130 = scmp.eq.s32.totalorder %s36, 0
      %p131 = por %p129, %p130
      %s133 = sadd.s32 %s132, 1
      %p136 = scmp.eq.s32.totalorder %s30, 1
      %p137 = scmp.ne.s32.totalorder %s132, %s134
      %p138 = scmp.eq.s32.totalorder %s30, 0
      %p139 = por %p137, %p138
      %p140 = scmp.ne.s32.totalorder %s132, %s134
      %p141 = scmp.eq.s32.totalorder %s35, 1
      %p142 = por %p140, %p141
      %p143 = scmp.ne.s32.totalorder %s134, %s135
      %p144 = scmp.eq.s32.totalorder %s35, 0
      %p145 = por %p143, %p144
      %p146 = scmp.ne.s32.totalorder %s134, %s135
      %p147 = scmp.eq.s32.totalorder %s36, 1
      %p148 = por %p146, %p147
      %p150 = scmp.ne.s32.totalorder %s135, %s149
      %p151 = scmp.eq.s32.totalorder %s36, 0
      %p152 = por %p150, %p151
      %s154 = sadd.s32 %s153, 1
      %p157 = scmp.eq.s32.totalorder %s30, 1
      %p158 = scmp.ne.s32.totalorder %s153, %s155
      %p159 = scmp.eq.s32.totalorder %s30, 0
      %p160 = por %p158, %p159
      %p161 = scmp.ne.s32.totalorder %s153, %s155
      %p162 = scmp.eq.s32.totalorder %s35, 1
      %p163 = por %p161, %p162
      %p164 = scmp.ne.s32.totalorder %s155, %s156
      %p165 = scmp.eq.s32.totalorder %s35, 0
      %p166 = por %p164, %p165
      %p167 = scmp.ne.s32.totalorder %s155, %s156
      %p168 = scmp.eq.s32.totalorder %s36, 1
      %p169 = por %p167, %p168
      %p171 = scmp.ne.s32.totalorder %s156, %s170
      %p172 = scmp.eq.s32.totalorder %s36, 0
      %p173 = por %p171, %p172
      %s175 = sadd.s32 %s174, 1
      %p178 = scmp.eq.s32.totalorder %s30, 1
      %p179 = scmp.ne.s32.totalorder %s174, %s176
      %p180 = scmp.eq.s32.totalorder %s30, 0
      %p181 = por %p179, %p180
      %p182 = scmp.ne.s32.totalorder %s174, %s176
      %p183 = scmp.eq.s32.totalorder %s35, 1
      %p184 = por %p182, %p183
      %p185 = scmp.ne.s32.totalorder %s176, %s177
      %p186 = scmp.eq.s32.totalorder %s35, 0
      %p187 = por %p185, %p186
      %p188 = scmp.ne.s32.totalorder %s176, %s177
      %p189 = scmp.eq.s32.totalorder %s36, 1
      %p190 = por %p188, %p189
      %p192 = scmp.ne.s32.totalorder %s177, %s191
      %p193 = scmp.eq.s32.totalorder %s36, 0
      %p194 = por %p192, %p193
      %s196 = sadd.s32 %s195, 1
      %p199 = scmp.eq.s32.totalorder %s30, 1
      %p200 = scmp.ne.s32.totalorder %s195, %s197
      %p201 = scmp.eq.s32.totalorder %s30, 0
      %p202 = por %p200, %p201
      %p203 = scmp.ne.s32.totalorder %s195, %s197
      %p204 = scmp.eq.s32.totalorder %s35, 1
      %p205 = por %p203, %p204
      %p206 = scmp.ne.s32.totalorder %s197, %s198
      %p207 = scmp.eq.s32.totalorder %s35, 0
      %p208 = por %p206, %p207
      %p209 = scmp.ne.s32.totalorder %s197, %s198
      %p210 = scmp.eq.s32.totalorder %s36, 1
      %p211 = por %p209, %p210
      %p213 = scmp.ne.s32.totalorder %s198, %s212
      %p214 = scmp.eq.s32.totalorder %s36, 0
      %p215 = por %p213, %p214
      %s217 = sadd.s32 %s216, 1
      %p220 = scmp.eq.s32.totalorder %s30, 1
      %p221 = scmp.ne.s32.totalorder %s216, %s218
      %p222 = scmp.eq.s32.totalorder %s30, 0
      %p223 = por %p221, %p222
      %p224 = scmp.ne.s32.totalorder %s216, %s218
      %p225 = scmp.eq.s32.totalorder %s35, 1
      %p226 = por %p224, %p225
      %p227 = scmp.ne.s32.totalorder %s218, %s219
      %p228 = scmp.eq.s32.totalorder %s35, 0
      %p229 = por %p227, %p228
      %p230 = scmp.ne.s32.totalorder %s218, %s219
      %p231 = scmp.eq.s32.totalorder %s36, 1
      %p232 = por %p230, %p231
      %p234 = scmp.ne.s32.totalorder %s219, %s233
      %p235 = scmp.eq.s32.totalorder %s36, 0
      %p236 = por %p234, %p235
      %s238 = sadd.s32 %s237, 1
      %p241 = scmp.eq.s32.totalorder %s30, 1
      %p242 = scmp.ne.s32.totalorder %s237, %s239
      %p243 = scmp.eq.s32.totalorder %s30, 0
      %p244 = por %p242, %p243
      %p245 = scmp.ne.s32.totalorder %s237, %s239
      %p246 = scmp.eq.s32.totalorder %s35, 1
      %p247 = por %p245, %p246
      %p248 = scmp.ne.s32.totalorder %s239, %s240
      %p249 = scmp.eq.s32.totalorder %s35, 0
      %p250 = por %p248, %p249
      %p251 = scmp.ne.s32.totalorder %s239, %s240
      %p252 = scmp.eq.s32.totalorder %s36, 1
      %p253 = por %p251, %p252
      %p255 = scmp.ne.s32.totalorder %s240, %s254
      %p256 = scmp.eq.s32.totalorder %s36, 0
      %p257 = por %p255, %p256
      %s259 = sadd.s32 %s258, 1
      %p262 = scmp.eq.s32.totalorder %s30, 1
      %p263 = scmp.ne.s32.totalorder %s258, %s260
      %p264 = scmp.eq.s32.totalorder %s30, 0
      %p265 = por %p263, %p264
      %p266 = scmp.ne.s32.totalorder %s258, %s260
      %p267 = scmp.eq.s32.totalorder %s35, 1
      %p268 = por %p266, %p267
      %p269 = scmp.ne.s32.totalorder %s260, %s261
      %p270 = scmp.eq.s32.totalorder %s35, 0
      %p271 = por %p269, %p270
      %p272 = scmp.ne.s32.totalorder %s260, %s261
      %p273 = scmp.eq.s32.totalorder %s36, 1
      %p274 = por %p272, %p273
      %p276 = scmp.ne.s32.totalorder %s261, %s275
      %p277 = scmp.eq.s32.totalorder %s36, 0
      %p278 = por %p276, %p277
      %s280 = sadd.s32 %s279, 1
      %p283 = scmp.eq.s32.totalorder %s30, 1
      %p284 = scmp.ne.s32.totalorder %s279, %s281
      %p285 = scmp.eq.s32.totalorder %s30, 0
      %p286 = por %p284, %p285
      %p287 = scmp.ne.s32.totalorder %s279, %s281
      %p288 = scmp.eq.s32.totalorder %s35, 1
      %p289 = por %p287, %p288
      %p290 = scmp.ne.s32.totalorder %s281, %s282
      %p291 = scmp.eq.s32.totalorder %s35, 0
      %p292 = por %p290, %p291
      %p293 = scmp.ne.s32.totalorder %s281, %s282
      %p294 = scmp.eq.s32.totalorder %s36, 1
      %p295 = por %p293, %p294
      %p297 = scmp.ne.s32.totalorder %s282, %s296
      %p298 = scmp.eq.s32.totalorder %s36, 0
      %p299 = por %p297, %p298
      %s301 = sadd.s32 %s300, 1
      %p304 = scmp.eq.s32.totalorder %s30, 1
      %p305 = scmp.ne.s32.totalorder %s300, %s302
      %p306 = scmp.eq.s32.totalorder %s30, 0
      %p307 = por %p305, %p306
      %p308 = scmp.ne.s32.totalorder %s300, %s302
      %p309 = scmp.eq.s32.totalorder %s35, 1
      %p310 = por %p308, %p309
      %p311 = scmp.ne.s32.totalorder %s302, %s303
      %p312 = scmp.eq.s32.totalorder %s35, 0
      %p313 = por %p311, %p312
      %p314 = scmp.ne.s32.totalorder %s302, %s303
      %p315 = scmp.eq.s32.totalorder %s36, 1
      %p316 = por %p314, %p315
      %p318 = scmp.ne.s32.totalorder %s303, %s317
      %p319 = scmp.eq.s32.totalorder %s36, 0
      %p320 = por %p318, %p319
      %s322 = sadd.s32 %s321, 1
      %p325 = scmp.eq.s32.totalorder %s30, 1
      %p326 = scmp.ne.s32.totalorder %s321, %s323
      %p327 = scmp.eq.s32.totalorder %s30, 0
      %p328 = por %p326, %p327
      %p329 = scmp.ne.s32.totalorder %s321, %s323
      %p330 = scmp.eq.s32.totalorder %s35, 1
      %p331 = por %p329, %p330
      %p332 = scmp.ne.s32.totalorder %s323, %s324
      %p333 = scmp.eq.s32.totalorder %s35, 0
      %p334 = por %p332, %p333
      %p335 = scmp.ne.s32.totalorder %s323, %s324
      %p336 = scmp.eq.s32.totalorder %s36, 1
      %p337 = por %p335, %p336
      %p339 = scmp.ne.s32.totalorder %s324, %s338
      %p340 = scmp.eq.s32.totalorder %s36, 0
      %p341 = por %p339, %p340
      %s342 = ssub.s32 %s30, %s37
      %p343 = scmp.eq.s32.totalorder %s342, 0
      %s345 = sadd.s32 %s344, 1
      %s346 = scalar_select %p343, %s344, %s345
      %p349 = pneg %p343
      %p350 = scmp.eq.s32.totalorder %s30, 1
      %p351 = por %p349, %p350
      %p352 = scmp.ne.s32.totalorder %s344, %s347
      %p353 = scmp.eq.s32.totalorder %s30, 0
      %p354 = por %p352, %p353
      %p355 = scmp.ne.s32.totalorder %s344, %s347
      %p356 = scmp.eq.s32.totalorder %s35, 1
      %p357 = por %p355, %p356
      %p358 = scmp.ne.s32.totalorder %s347, %s348
      %p359 = scmp.eq.s32.totalorder %s35, 0
      %p360 = por %p358, %p359
      %p361 = scmp.ne.s32.totalorder %s347, %s348
      %p362 = scmp.eq.s32.totalorder %s36, 1
      %p363 = por %p361, %p362
      %p365 = scmp.ne.s32.totalorder %s348, %s364
      %p366 = scmp.eq.s32.totalorder %s36, 0
      %p367 = por %p365, %p366
      %p368 = scmp.le.s32.totalorder 1, %s30
      %p369 = scmp.lt.s32.totalorder %s30, 3
      %p370 = pnand %p368, %p369
      %p371 = pneg %p370
      // Predicated region
      $region9: #{tpu_custom_call.1} parent=5 // pred_check
        _
      $region10: #{tpu_custom_call.1} parent=5 // pred_check_branch
        %373 = sbr.rel (%p370) target = $region12
      $region11: #{tpu_custom_call.1} parent=5 // pred_region
        %s374 = ssub.s32 %s30, 1
        // Predicated region
        $region13: #{tpu_custom_call.1} parent=11 // pred_check
          %p375 = pneg %p103
        $region14: #{tpu_custom_call.1} parent=11 // pred_check_branch
          %377 = sbr.rel (%p375) target = $region16
        $region15: #{tpu_custom_call.1} parent=11 // pred_region
          %s379 = ssub.s32 2240, 2240
          %380 = vsyncadd [#allocation3], %s379
          %s381 = sshll.u32 [#allocation2], 4
          %s382 = int_to_ptr.vmem [resolvable:$true] %s381
          %387 = dma.hbm_to_vmem [thread:$0]  %s2, 2240, %s382, [#allocation3], 448, 448, 28
        $region16: #{tpu_custom_call.1} parent=11 // pred_fallthru
          _
        // Predicated region
        $region17: #{tpu_custom_call.1} parent=11 // pred_check
          %p388 = pneg %p124
        $region18: #{tpu_custom_call.1} parent=11 // pred_check_branch
          %390 = sbr.rel (%p388) target = $region20
        $region19: #{tpu_custom_call.1} parent=11 // pred_region
          %s392 = ssub.s32 112, 112
          %393 = vsyncadd [#allocation6], %s392
          %s395 = sshll.u32 [#allocation5], 4
          %s396 = int_to_ptr.vmem [resolvable:$true] %s395
          %398 = dma.hbm_to_vmem [thread:$0]  %s3, 112, %s396, [#allocation6]
        $region20: #{tpu_custom_call.1} parent=11 // pred_fallthru
          _
        // Predicated region
        $region21: #{tpu_custom_call.1} parent=11 // pred_check
          %p399 = pneg %p145
        $region22: #{tpu_custom_call.1} parent=11 // pred_check_branch
          %401 = sbr.rel (%p399) target = $region24
        $region23: #{tpu_custom_call.1} parent=11 // pred_region
          %s403 = ssub.s32 50176, 50176
          %404 = vsyncadd [#allocation6], %s403
          %s405 = sshll.u32 [#allocation7], 4
          %s406 = int_to_ptr.vmem [resolvable:$true] %s405
          %411 = dma.hbm_to_vmem [thread:$0]  %s4, 50176, %s406, [#allocation6], 448, 448, 28
        $region24: #{tpu_custom_call.1} parent=11 // pred_fallthru
          _
        // Predicated region
        $region25: #{tpu_custom_call.1} parent=11 // pred_check
          %p412 = pneg %p166
        $region26: #{tpu_custom_call.1} parent=11 // pred_check_branch
          %414 = sbr.rel (%p412) target = $region28
        $region27: #{tpu_custom_call.1} parent=11 // pred_region
          %s416 = ssub.s32 112, 112
          %417 = vsyncadd [#allocation9], %s416
          %s419 = sshll.u32 [#allocation8], 4
          %s420 = int_to_ptr.vmem [resolvable:$true] %s419
          %422 = dma.hbm_to_vmem [thread:$0]  %s5, 112, %s420, [#allocation9]
        $region28: #{tpu_custom_call.1} parent=11 // pred_fallthru
          _
        // Predicated region
        $region29: #{tpu_custom_call.1} parent=11 // pred_check
          %p423 = pneg %p187
        $region30: #{tpu_custom_call.1} parent=11 // pred_check_branch
          %425 = sbr.rel (%p423) target = $region32
        $region31: #{tpu_custom_call.1} parent=11 // pred_region
          %s427 = ssub.s32 112, 112
          %428 = vsyncadd [#allocation9], %s427
          %s430 = sshll.u32 [#allocation10], 4
          %s431 = int_to_ptr.vmem [resolvable:$true] %s430
          %433 = dma.hbm_to_vmem [thread:$0]  %s6, 112, %s431, [#allocation9]
        $region32: #{tpu_custom_call.1} parent=11 // pred_fallthru
          _
        // Predicated region
        $region33: #{tpu_custom_call.1} parent=11 // pred_check
          %p434 = pneg %p208
        $region34: #{tpu_custom_call.1} parent=11 // pred_check_branch
          %436 = sbr.rel (%p434) target = $region36
        $region35: #{tpu_custom_call.1} parent=11 // pred_region
          %s438 = ssub.s32 640, 640
          %439 = vsyncadd [#allocation12], %s438
          %s440 = sshll.u32 [#allocation11], 4
          %s441 = int_to_ptr.vmem [resolvable:$true] %s440
          %446 = dma.hbm_to_vmem [thread:$0]  %s7, 640, %s441, [#allocation12], 128, 128, 8
        $region36: #{tpu_custom_call.1} parent=11 // pred_fallthru
          _
        // Predicated region
        $region37: #{tpu_custom_call.1} parent=11 // pred_check
          %p447 = pneg %p229
        $region38: #{tpu_custom_call.1} parent=11 // pred_check_branch
          %449 = sbr.rel (%p447) target = $region40
        $region39: #{tpu_custom_call.1} parent=11 // pred_region
          %s451 = ssub.s32 32, 32
          %452 = vsyncadd [#allocation12], %s451
          %s454 = sshll.u32 [#allocation13], 4
          %s455 = int_to_ptr.vmem [resolvable:$true] %s454
          %457 = dma.hbm_to_vmem [thread:$0]  %s8, 32, %s455, [#allocation12]
        $region40: #{tpu_custom_call.1} parent=11 // pred_fallthru
          _
        // Predicated region
        $region41: #{tpu_custom_call.1} parent=11 // pred_check
          %p458 = pneg %p250
        $region42: #{tpu_custom_call.1} parent=11 // pred_check_branch
          %460 = sbr.rel (%p458) target = $region44
        $region43: #{tpu_custom_call.1} parent=11 // pred_region
          %s462 = ssub.s32 32, 32
          %463 = vsyncadd [#allocation15], %s462
          %s465 = sshll.u32 [#allocation14], 4
          %s466 = int_to_ptr.vmem [resolvable:$true] %s465
          %468 = dma.hbm_to_vmem [thread:$0]  %s9, 32, %s466, [#allocation15]
        $region44: #{tpu_custom_call.1} parent=11 // pred_fallthru
          _
        // Predicated region
        $region45: #{tpu_custom_call.1} parent=11 // pred_check
          %p469 = pneg %p271
        $region46: #{tpu_custom_call.1} parent=11 // pred_check_branch
          %471 = sbr.rel (%p469) target = $region48
        $region47: #{tpu_custom_call.1} parent=11 // pred_region
          %s473 = ssub.s32 4096, 4096
          %474 = vsyncadd [#allocation15], %s473
          %s475 = sshll.u32 [#allocation16], 4
          %s476 = int_to_ptr.vmem [resolvable:$true] %s475
          %481 = dma.hbm_to_vmem [thread:$0]  %s10, 4096, %s476, [#allocation15], 128, 128, 8
        $region48: #{tpu_custom_call.1} parent=11 // pred_fallthru
          _
        // Predicated region
        $region49: #{tpu_custom_call.1} parent=11 // pred_check
          %p482 = pneg %p292
        $region50: #{tpu_custom_call.1} parent=11 // pred_check_branch
          %484 = sbr.rel (%p482) target = $region52
        $region51: #{tpu_custom_call.1} parent=11 // pred_region
          %s486 = ssub.s32 32, 32
          %487 = vsyncadd [#allocation18], %s486
          %s489 = sshll.u32 [#allocation17], 4
          %s490 = int_to_ptr.vmem [resolvable:$true] %s489
          %492 = dma.hbm_to_vmem [thread:$0]  %s11, 32, %s490, [#allocation18]
        $region52: #{tpu_custom_call.1} parent=11 // pred_fallthru
          _
        // Predicated region
        $region53: #{tpu_custom_call.1} parent=11 // pred_check
          %p493 = pneg %p313
        $region54: #{tpu_custom_call.1} parent=11 // pred_check_branch
          %495 = sbr.rel (%p493) target = $region56
        $region55: #{tpu_custom_call.1} parent=11 // pred_region
          %s497 = ssub.s32 32, 32
          %498 = vsyncadd [#allocation18], %s497
          %s500 = sshll.u32 [#allocation19], 4
          %s501 = int_to_ptr.vmem [resolvable:$true] %s500
          %503 = dma.hbm_to_vmem [thread:$0]  %s12, 32, %s501, [#allocation18]
        $region56: #{tpu_custom_call.1} parent=11 // pred_fallthru
          _
        // Predicated region
        $region57: #{tpu_custom_call.1} parent=11 // pred_check
          %p504 = pneg %p334
        $region58: #{tpu_custom_call.1} parent=11 // pred_check_branch
          %506 = sbr.rel (%p504) target = $region60
        $region59: #{tpu_custom_call.1} parent=11 // pred_region
          %s508 = ssub.s32 16, 16
          %509 = vsyncadd [#allocation21], %s508
          %s511 = sshll.u32 [#allocation20], 4
          %s512 = int_to_ptr.vmem [resolvable:$true] %s511
          %514 = dma.hbm_to_vmem [thread:$0]  %s13, 16, %s512, [#allocation21]
        $region60: #{tpu_custom_call.1} parent=11 // pred_fallthru
          _
      $region12: #{tpu_custom_call.1} parent=5 // pred_fallthru
        _
      %p515 = scmp.lt.s32.totalorder %s30, 2
      // Predicated region
      $region61: #{tpu_custom_call.1} parent=5 // pred_check
        %p516 = pneg %p515
      $region62: #{tpu_custom_call.1} parent=5 // pred_check_branch
        %518 = sbr.rel (%p516) target = $region64
      $region63: #{tpu_custom_call.1} parent=5 // pred_region
        // Predicated region
        $region65: #{tpu_custom_call.1} parent=63 // pred_check
          %p519 = pneg %p50
        $region66: #{tpu_custom_call.1} parent=63 // pred_check_branch
          %521 = sbr.rel (%p519) target = $region68
        $region67: #{tpu_custom_call.1} parent=63 // pred_region
          %s522 = smul.u32 4, %s30
          %p523 = scmp.lt.s32.totalorder %s522, 7
          %s524 = scalar_select %p523, %s522, 7
          %s525 = smul.addr %s524, 4
          %s526 = scalar_lea.vmem %s0, %s525
          %s527 = smul.u32 4, %s30
        $region68: #{tpu_custom_call.1} parent=63 // pred_fallthru
          _
        // Predicated region
        $region69: #{tpu_custom_call.1} parent=63 // pred_check
          %p528 = pneg %p76
        $region70: #{tpu_custom_call.1} parent=63 // pred_check_branch
          %530 = sbr.rel (%p528) target = $region72
        $region71: #{tpu_custom_call.1} parent=63 // pred_region
          %s531 = smul.u32 4, %s30
          %p532 = scmp.lt.s32.totalorder %s531, 7
          %s533 = scalar_select %p532, %s531, 7
          %s534 = smul.addr %s533, 8
          %s535 = scalar_lea.vmem %s1, %s534
          %s536 = smul.u32 4, %s30
        $region72: #{tpu_custom_call.1} parent=63 // pred_fallthru
          _
      $region64: #{tpu_custom_call.1} parent=5 // pred_fallthru
        _
      %p537 = scmp.le.s32.totalorder 1, %s30
      %p538 = scmp.lt.s32.totalorder %s30, 3
      %p539 = pnand %p537, %p538
      %p540 = pneg %p539
      // Predicated region
      $region73: #{tpu_custom_call.1} parent=5 // pred_check
        _
      $region74: #{tpu_custom_call.1} parent=5 // pred_check_branch
        %542 = sbr.rel (%p539) target = $region76
      $region75: #{tpu_custom_call.1} parent=5 // pred_region
        %s543 = ssub.s32 %s30, 1
        // Predicated region
        $region77: #{tpu_custom_call.1} parent=75 // pred_check
          %p544 = pneg %p103
        $region78: #{tpu_custom_call.1} parent=75 // pred_check_branch
          %546 = sbr.rel (%p544) target = $region80
        $region79: #{tpu_custom_call.1} parent=75 // pred_region
          %547 = dma.done [#allocation3], 2240
        $region80: #{tpu_custom_call.1} parent=75 // pred_fallthru
          _
        // Predicated region
        $region81: #{tpu_custom_call.1} parent=75 // pred_check
          %p548 = pneg %p124
        $region82: #{tpu_custom_call.1} parent=75 // pred_check_branch
          %550 = sbr.rel (%p548) target = $region84
        $region83: #{tpu_custom_call.1} parent=75 // pred_region
          %551 = dma.done [#allocation6], 112
        $region84: #{tpu_custom_call.1} parent=75 // pred_fallthru
          _
        // Predicated region
        $region85: #{tpu_custom_call.1} parent=75 // pred_check
          %p552 = pneg %p145
        $region86: #{tpu_custom_call.1} parent=75 // pred_check_branch
          %554 = sbr.rel (%p552) target = $region88
        $region87: #{tpu_custom_call.1} parent=75 // pred_region
          %555 = dma.done [#allocation6], 50176
        $region88: #{tpu_custom_call.1} parent=75 // pred_fallthru
          _
        // Predicated region
        $region89: #{tpu_custom_call.1} parent=75 // pred_check
          %p556 = pneg %p166
        $region90: #{tpu_custom_call.1} parent=75 // pred_check_branch
          %558 = sbr.rel (%p556) target = $region92
        $region91: #{tpu_custom_call.1} parent=75 // pred_region
          %559 = dma.done [#allocation9], 112
        $region92: #{tpu_custom_call.1} parent=75 // pred_fallthru
          _
        // Predicated region
        $region93: #{tpu_custom_call.1} parent=75 // pred_check
          %p560 = pneg %p187
        $region94: #{tpu_custom_call.1} parent=75 // pred_check_branch
          %562 = sbr.rel (%p560) target = $region96
        $region95: #{tpu_custom_call.1} parent=75 // pred_region
          %563 = dma.done [#allocation9], 112
        $region96: #{tpu_custom_call.1} parent=75 // pred_fallthru
          _
        // Predicated region
        $region97: #{tpu_custom_call.1} parent=75 // pred_check
          %p564 = pneg %p208
        $region98: #{tpu_custom_call.1} parent=75 // pred_check_branch
          %566 = sbr.rel (%p564) target = $region100
        $region99: #{tpu_custom_call.1} parent=75 // pred_region
          %567 = dma.done [#allocation12], 640
        $region100: #{tpu_custom_call.1} parent=75 // pred_fallthru
          _
        // Predicated region
        $region101: #{tpu_custom_call.1} parent=75 // pred_check
          %p568 = pneg %p229
        $region102: #{tpu_custom_call.1} parent=75 // pred_check_branch
          %570 = sbr.rel (%p568) target = $region104
        $region103: #{tpu_custom_call.1} parent=75 // pred_region
          %571 = dma.done [#allocation12], 32
        $region104: #{tpu_custom_call.1} parent=75 // pred_fallthru
          _
        // Predicated region
        $region105: #{tpu_custom_call.1} parent=75 // pred_check
          %p572 = pneg %p250
        $region106: #{tpu_custom_call.1} parent=75 // pred_check_branch
          %574 = sbr.rel (%p572) target = $region108
        $region107: #{tpu_custom_call.1} parent=75 // pred_region
          %575 = dma.done [#allocation15], 32
        $region108: #{tpu_custom_call.1} parent=75 // pred_fallthru
          _
        // Predicated region
        $region109: #{tpu_custom_call.1} parent=75 // pred_check
          %p576 = pneg %p271
        $region110: #{tpu_custom_call.1} parent=75 // pred_check_branch
          %578 = sbr.rel (%p576) target = $region112
        $region111: #{tpu_custom_call.1} parent=75 // pred_region
          %579 = dma.done [#allocation15], 4096
        $region112: #{tpu_custom_call.1} parent=75 // pred_fallthru
          _
        // Predicated region
        $region113: #{tpu_custom_call.1} parent=75 // pred_check
          %p580 = pneg %p292
        $region114: #{tpu_custom_call.1} parent=75 // pred_check_branch
          %582 = sbr.rel (%p580) target = $region116
        $region115: #{tpu_custom_call.1} parent=75 // pred_region
          %583 = dma.done [#allocation18], 32
        $region116: #{tpu_custom_call.1} parent=75 // pred_fallthru
          _
        // Predicated region
        $region117: #{tpu_custom_call.1} parent=75 // pred_check
          %p584 = pneg %p313
        $region118: #{tpu_custom_call.1} parent=75 // pred_check_branch
          %586 = sbr.rel (%p584) target = $region120
        $region119: #{tpu_custom_call.1} parent=75 // pred_region
          %587 = dma.done [#allocation18], 32
        $region120: #{tpu_custom_call.1} parent=75 // pred_fallthru
          _
        // Predicated region
        $region121: #{tpu_custom_call.1} parent=75 // pred_check
          %p588 = pneg %p334
        $region122: #{tpu_custom_call.1} parent=75 // pred_check_branch
          %590 = sbr.rel (%p588) target = $region124
        $region123: #{tpu_custom_call.1} parent=75 // pred_region
          %591 = dma.done [#allocation21], 16
        $region124: #{tpu_custom_call.1} parent=75 // pred_fallthru
          _
        %s592 = smul.u32 4, %s35
        %p593 = scmp.lt.s32.totalorder %s592, 7
        %s594 = scalar_select %p593, %s592, 7
        %s595 = smul.addr %s594, 4
        %s596 = scalar_lea.vmem %s0, %s595
        %p597 = pneg %p56
        %p598 = pneg %p53
        %s599 = smul.u32 4, %s35
        %p600 = scmp.lt.s32.totalorder %s599, 7
        %s601 = scalar_select %p600, %s599, 7
        %s602 = smul.addr %s601, 8
        %s603 = scalar_lea.vmem %s1, %s602
        %p604 = pneg %p82
        %p605 = pneg %p79
        %p606 = pneg %p103
        %p607 = pneg %p100
        %p608 = pneg %p124
        %p609 = pneg %p121
        %p610 = pneg %p145
        %p611 = pneg %p142
        %p612 = pneg %p166
        %p613 = pneg %p163
        %p614 = pneg %p187
        %p615 = pneg %p184
        %p616 = pneg %p208
        %p617 = pneg %p205
        %p618 = pneg %p229
        %p619 = pneg %p226
        %p620 = pneg %p250
        %p621 = pneg %p247
        %p622 = pneg %p271
        %p623 = pneg %p268
        %p624 = pneg %p292
        %p625 = pneg %p289
        %p626 = pneg %p313
        %p627 = pneg %p310
        %p628 = pneg %p334
        %p629 = pneg %p331
        %p630 = pneg %p360
        %p631 = pneg %p357
        %s632 = sand.u32 %s347, 1
        %s633 = scalar_lea.sflag [#allocation4], %s632
        %s634 = sand.u32 %s347, 1
        %s635 = smul.addr %s634, 32
        %s636 = scalar_lea.vmem [#allocation22], %s635
        %s637 = smul.u32 4, %s35
        %p638 = scmp.lt.s32.totalorder %s637, 7
        %s639 = scalar_select %p638, %s637, 7
        %s640 = smul.addr %s639, 4
        %s641 = scalar_lea.vmem %s0, %s640
        %s642 = smul.u32 4, %s35
        %s643 = smul.u32 4, %s35
        %p644 = scmp.lt.s32.totalorder %s643, 7
        %s645 = scalar_select %p644, %s643, 7
        %s646 = smul.addr %s645, 8
        %s647 = scalar_lea.vmem %s1, %s646
        %s648 = smul.u32 4, %s35
        %s649 = smul.u32 4, %s35
        %v651 = vld [vmem:[%s641] sm:$0xf]
        %v652 = vld [vmem:[%s641 + $0x4] sm:$0xf]
        %v653 = vld [vmem:[%s641 + $0x8] sm:$0xf]
        %v654 = vld [vmem:[%s641 + $0xc] sm:$0xf]
        %v655 = vld [vmem:[%s647] sm:$0xff]
        %v656 = vld [vmem:[%s647 + $0x8] sm:$0xff]
        %v657 = vld [vmem:[%s647 + $0x10] sm:$0xff]
        %v658 = vld [vmem:[%s647 + $0x18] sm:$0xff]
        %v659 = vld [vmem:[#allocation2] sm:$0xff]
        %v660 = vld [vmem:[#allocation2 + $0x8] sm:$0xff]
        %v661 = vld [vmem:[#allocation2 + $0x10] sm:$0xff]
        %v662 = vld [vmem:[#allocation2 + $0x18] sm:$0xf]
        %v663 = vld [vmem:[#allocation2 + $0x1c] sm:$0xff]
        %v664 = vld [vmem:[#allocation2 + $0x24] sm:$0xff]
        %v665 = vld [vmem:[#allocation2 + $0x2c] sm:$0xff]
        %v666 = vld [vmem:[#allocation2 + $0x34] sm:$0xf]
        %v667 = vld [vmem:[#allocation2 + $0x38] sm:$0xff]
        %v668 = vld [vmem:[#allocation2 + $0x40] sm:$0xff]
        %v669 = vld [vmem:[#allocation2 + $0x48] sm:$0xff]
        %v670 = vld [vmem:[#allocation2 + $0x50] sm:$0xf]
        %v671 = vld [vmem:[#allocation2 + $0x54] sm:$0xff]
        %v672 = vld [vmem:[#allocation2 + $0x5c] sm:$0xff]
        %v673 = vld [vmem:[#allocation2 + $0x64] sm:$0xff]
        %v674 = vld [vmem:[#allocation2 + $0x6c] sm:$0xf]
        %v675 = vld [vmem:[#allocation2 + $0x70] sm:$0x11]
        %v676 = vld [vmem:[#allocation2 + $0x78] sm:$0x11]
        %v677 = vld [vmem:[#allocation2 + $0x80] sm:$0x11]
        %v678 = vld [vmem:[#allocation2 + $0x88] sm:$0x1]
        %v679 = vld [vmem:[#allocation5] sm:$0xff]
        %v681 = vlaneseq
        %v682 = vshrl.u32 %v681, 7
        %v683 = vsub.s32 0, %v682
        %v684 = vrot.slane %v679, %v683
        %v685 = vlaneseq
        %v686 = vshrl.u32 %v685, 7
        %v687 = vsub.s32 1, %v686
        %v688 = vrot.slane %v679, %v687
        %v689 = vlaneseq
        %v690 = vshrl.u32 %v689, 7
        %v691 = vsub.s32 2, %v690
        %v692 = vrot.slane %v679, %v691
        %v693 = vlaneseq
        %v694 = vshrl.u32 %v693, 7
        %v695 = vsub.s32 3, %v694
        %v696 = vrot.slane %v679, %v695
        %v697 = vlaneseq
        %v698 = vshrl.u32 %v697, 7
        %v699 = vsub.s32 4, %v698
        %v700 = vrot.slane %v679, %v699
        %v701 = vlaneseq
        %v702 = vshrl.u32 %v701, 7
        %v703 = vsub.s32 5, %v702
        %v704 = vrot.slane %v679, %v703
        %v705 = vlaneseq
        %v706 = vshrl.u32 %v705, 7
        %v707 = vsub.s32 6, %v706
        %v708 = vrot.slane %v679, %v707
        %v720 = vunpack.c.l.b16 %v651
        %v721 = vunpack.c.l.b16 %v652
        %v722 = vunpack.c.l.b16 %v653
        %v723 = vunpack.c.l.b16 %v654
        %v724 = vpack.c.b16 %v721, %v720
        %v725 = vpack.c.b16 %v723, %v722
        %v746 = vunpack.c.l.b16 %v659
        %v747 = vunpack.c.h.b16 %v659
        %v748 = vunpack.c.l.b16 %v660
        %v749 = vunpack.c.h.b16 %v660
        %v750 = vunpack.c.l.b16 %v661
        %v751 = vunpack.c.h.b16 %v661
        %v752 = vunpack.c.l.b16 %v662
        %v753 = vunpack.c.l.b16 %v663
        %v754 = vunpack.c.h.b16 %v663
        %v755 = vunpack.c.l.b16 %v664
        %v756 = vunpack.c.h.b16 %v664
        %v757 = vunpack.c.l.b16 %v665
        %v758 = vunpack.c.h.b16 %v665
        %v759 = vunpack.c.l.b16 %v666
        %v760 = vunpack.c.l.b16 %v667
        %v761 = vunpack.c.h.b16 %v667
        %v762 = vunpack.c.l.b16 %v668
        %v763 = vunpack.c.h.b16 %v668
        %v764 = vunpack.c.l.b16 %v669
        %v765 = vunpack.c.h.b16 %v669
        %v766 = vunpack.c.l.b16 %v670
        %v767 = vunpack.c.l.b16 %v671
        %v768 = vunpack.c.h.b16 %v671
        %v769 = vunpack.c.l.b16 %v672
        %v770 = vunpack.c.h.b16 %v672
        %v771 = vunpack.c.l.b16 %v673
        %v772 = vunpack.c.h.b16 %v673
        %v773 = vunpack.c.l.b16 %v674
        %v774 = vunpack.c.l.b16 %v675
        %v775 = vunpack.c.h.b16 %v675
        %v776 = vunpack.c.l.b16 %v676
        %v777 = vunpack.c.h.b16 %v676
        %v778 = vunpack.c.l.b16 %v677
        %v779 = vunpack.c.h.b16 %v677
        %v780 = vunpack.c.l.b16 %v678
        %v781 = vpack.c.b16 %v753, %v746
        %v782 = vpack.c.b16 %v754, %v747
        %v783 = vpack.c.b16 %v755, %v748
        %v784 = vpack.c.b16 %v756, %v749
        %v785 = vpack.c.b16 %v757, %v750
        %v786 = vpack.c.b16 %v758, %v751
        %v787 = vpack.c.b16 %v759, %v752
        %v788 = vpack.c.b16 %v767, %v760
        %v789 = vpack.c.b16 %v768, %v761
        %v790 = vpack.c.b16 %v769, %v762
        %v791 = vpack.c.b16 %v770, %v763
        %v792 = vpack.c.b16 %v771, %v764
        %v793 = vpack.c.b16 %v772, %v765
        %v794 = vpack.c.b16 %v773, %v766
        %v795 = vpack.c.b16 %v774, %v774
        %v796 = vpack.c.b16 %v775, %v775
        %v797 = vpack.c.b16 %v776, %v776
        %v798 = vpack.c.b16 %v777, %v777
        %v799 = vpack.c.b16 %v778, %v778
        %v800 = vpack.c.b16 %v779, %v779
        %v801 = vpack.c.b16 %v780, %v780
        %vm816 = vcmask 277504
        %v818 = vsel %vm816, %v724, 0
        %v821 = vsel %vm816, %v725, 0
        %vm823 = vcmask 1040384
        %v825 = vsel %vm823, %v795, 0
        %v828 = vsel %vm823, %v796, 0
        %v831 = vsel %vm823, %v797, 0
        %v834 = vsel %vm823, %v798, 0
        %v837 = vsel %vm823, %v799, 0
        %v840 = vsel %vm823, %v800, 0
        %v843 = vsel %vm823, %v801, 0
        %845 = vmatprep.subr.bf16.mxu0 0
        %846 = vmatpush1.bf16.msra.mxu0 0
        %847 = vmatprep.subr.bf16.mxu0 0
        %848 = vmatpush1.bf16.msra.mxu0 0
        %849 = vmatprep.subr.bf16.mxu0 0
        %850 = vmatpush1.bf16.msra.mxu0 0
        %851 = vmatprep.subr.bf16.mxu0 0
        %852 = vmatpush1.bf16.msra.mxu0 0
        %853 = vmatprep.subr.bf16.mxu0 0
        %854 = vmatpush1.bf16.msra.mxu0 0
        %855 = vmatprep.subr.bf16.mxu0 %v828
        %856 = vmatpush1.bf16.msra.mxu0 %v825
        %857 = vmatprep.subr.bf16.mxu0 %v789
        %858 = vmatpush1.bf16.msra.mxu0 %v788
        %859 = vmatprep.subr.bf16.mxu0 %v782
        %860 = vmatpush1.bf16.msra.mxu0 %v781
        %861 = vmatprep.subr.bf16.mxu0 0
        %862 = vmatpush2.bf16.msra.mxu0 0
        %863 = vmatprep.subr.bf16.mxu0 0
        %864 = vmatpush2.bf16.msra.mxu0 0
        %865 = vmatprep.subr.bf16.mxu0 0
        %866 = vmatpush2.bf16.msra.mxu0 0
        %867 = vmatprep.subr.bf16.mxu0 0
        %868 = vmatpush2.bf16.msra.mxu0 0
        %869 = vmatprep.subr.bf16.mxu0 0
        %870 = vmatpush2.bf16.msra.mxu0 0
        %871 = vmatprep.subr.bf16.mxu0 0
        %872 = vmatpush2.bf16.msra.mxu0 0
        %873 = vmatprep.subr.bf16.mxu0 0
        %874 = vmatpush2.bf16.msra.mxu0 0
        %875 = vmatprep.subr.bf16.mxu0 0
        %876 = vmatpush2.bf16.msra.mxu0 0
        %877 = vmatprep.mubr.bf16.mxu0 0
        %878 = vmatmul.mubr.bf16.gmra.mxu0 %v818
        %v879 = vpop.f32.mrf.mxu0
        %v880 = vadd.f32 %v684, %v879
        %v881 = vpop.f32.mrf.mxu0
        %v882 = vadd.f32 %v688, %v881
        %v883 = vpop.f32.mrf.mxu0
        %v884 = vadd.f32 %v684, %v883
        %v885 = vpop.f32.mrf.mxu0
        %v886 = vadd.f32 %v688, %v885
        %887 = vmatprep.mubr.bf16.mxu0 0
        %888 = vmatmul.mubr.bf16.gmra.mxu0 %v821
        %v889 = vpop.f32.mrf.mxu0
        %v890 = vadd.f32 %v684, %v889
        %v891 = vpop.f32.mrf.mxu0
        %v892 = vadd.f32 %v688, %v891
        %v893 = vpop.f32.mrf.mxu0
        %v894 = vadd.f32 %v684, %v893
        %v895 = vpop.f32.mrf.mxu0
        %v896 = vadd.f32 %v688, %v895
        %897 = vdwg.mxu0
        %898 = vmatprep.subr.bf16.mxu0 0
        %899 = vmatpush1.bf16.msra.mxu0 0
        %900 = vmatprep.subr.bf16.mxu0 0
        %901 = vmatpush1.bf16.msra.mxu0 0
        %902 = vmatprep.subr.bf16.mxu0 0
        %903 = vmatpush1.bf16.msra.mxu0 0
        %904 = vmatprep.subr.bf16.mxu0 0
        %905 = vmatpush1.bf16.msra.mxu0 0
        %906 = vmatprep.subr.bf16.mxu0 0
        %907 = vmatpush1.bf16.msra.mxu0 0
        %908 = vmatprep.subr.bf16.mxu0 %v834
        %909 = vmatpush1.bf16.msra.mxu0 %v831
        %910 = vmatprep.subr.bf16.mxu0 %v791
        %911 = vmatpush1.bf16.msra.mxu0 %v790
        %912 = vmatprep.subr.bf16.mxu0 %v784
        %913 = vmatpush1.bf16.msra.mxu0 %v783
        %914 = vmatprep.subr.bf16.mxu0 0
        %915 = vmatpush2.bf16.msra.mxu0 0
        %916 = vmatprep.subr.bf16.mxu0 0
        %917 = vmatpush2.bf16.msra.mxu0 0
        %918 = vmatprep.subr.bf16.mxu0 0
        %919 = vmatpush2.bf16.msra.mxu0 0
        %920 = vmatprep.subr.bf16.mxu0 0
        %921 = vmatpush2.bf16.msra.mxu0 0
        %922 = vmatprep.subr.bf16.mxu0 0
        %923 = vmatpush2.bf16.msra.mxu0 0
        %924 = vmatprep.subr.bf16.mxu0 0
        %925 = vmatpush2.bf16.msra.mxu0 0
        %926 = vmatprep.subr.bf16.mxu0 0
        %927 = vmatpush2.bf16.msra.mxu0 0
        %928 = vmatprep.subr.bf16.mxu0 0
        %929 = vmatpush2.bf16.msra.mxu0 0
        %930 = vmatprep.mubr.bf16.mxu0 0
        %931 = vmatmul.mubr.bf16.gmra.mxu0 %v818
        %v932 = vpop.f32.mrf.mxu0
        %v933 = vadd.f32 %v692, %v932
        %v934 = vpop.f32.mrf.mxu0
        %v935 = vadd.f32 %v696, %v934
        %v936 = vpop.f32.mrf.mxu0
        %v937 = vadd.f32 %v692, %v936
        %v938 = vpop.f32.mrf.mxu0
        %v939 = vadd.f32 %v696, %v938
        %940 = vmatprep.mubr.bf16.mxu0 0
        %941 = vmatmul.mubr.bf16.gmra.mxu0 %v821
        %v942 = vpop.f32.mrf.mxu0
        %v943 = vadd.f32 %v692, %v942
        %v944 = vpop.f32.mrf.mxu0
        %v945 = vadd.f32 %v696, %v944
        %v946 = vpop.f32.mrf.mxu0
        %v947 = vadd.f32 %v692, %v946
        %v948 = vpop.f32.mrf.mxu0
        %v949 = vadd.f32 %v696, %v948
        %950 = vdwg.mxu0
        %951 = vmatprep.subr.bf16.mxu0 0
        %952 = vmatpush1.bf16.msra.mxu0 0
        %953 = vmatprep.subr.bf16.mxu0 0
        %954 = vmatpush1.bf16.msra.mxu0 0
        %955 = vmatprep.subr.bf16.mxu0 0
        %956 = vmatpush1.bf16.msra.mxu0 0
        %957 = vmatprep.subr.bf16.mxu0 0
        %958 = vmatpush1.bf16.msra.mxu0 0
        %959 = vmatprep.subr.bf16.mxu0 0
        %960 = vmatpush1.bf16.msra.mxu0 0
        %961 = vmatprep.subr.bf16.mxu0 %v840
        %962 = vmatpush1.bf16.msra.mxu0 %v837
        %963 = vmatprep.subr.bf16.mxu0 %v793
        %964 = vmatpush1.bf16.msra.mxu0 %v792
        %965 = vmatprep.subr.bf16.mxu0 %v786
        %966 = vmatpush1.bf16.msra.mxu0 %v785
        %967 = vmatprep.subr.bf16.mxu0 0
        %968 = vmatpush2.bf16.msra.mxu0 0
        %969 = vmatprep.subr.bf16.mxu0 0
        %970 = vmatpush2.bf16.msra.mxu0 0
        %971 = vmatprep.subr.bf16.mxu0 0
        %972 = vmatpush2.bf16.msra.mxu0 0
        %973 = vmatprep.subr.bf16.mxu0 0
        %974 = vmatpush2.bf16.msra.mxu0 0
        %975 = vmatprep.subr.bf16.mxu0 0
        %976 = vmatpush2.bf16.msra.mxu0 0
        %977 = vmatprep.subr.bf16.mxu0 0
        %978 = vmatpush2.bf16.msra.mxu0 0
        %979 = vmatprep.subr.bf16.mxu0 0
        %980 = vmatpush2.bf16.msra.mxu0 0
        %981 = vmatprep.subr.bf16.mxu0 0
        %982 = vmatpush2.bf16.msra.mxu0 0
        %983 = vmatprep.mubr.bf16.mxu0 0
        %984 = vmatmul.mubr.bf16.gmra.mxu0 %v818
        %v985 = vpop.f32.mrf.mxu0
        %v986 = vadd.f32 %v700, %v985
        %v987 = vpop.f32.mrf.mxu0
        %v988 = vadd.f32 %v704, %v987
        %v989 = vpop.f32.mrf.mxu0
        %v990 = vadd.f32 %v700, %v989
        %v991 = vpop.f32.mrf.mxu0
        %v992 = vadd.f32 %v704, %v991
        %993 = vmatprep.mubr.bf16.mxu0 0
        %994 = vmatmul.mubr.bf16.gmra.mxu0 %v821
        %v995 = vpop.f32.mrf.mxu0
        %v996 = vadd.f32 %v700, %v995
        %v997 = vpop.f32.mrf.mxu0
        %v998 = vadd.f32 %v704, %v997
        %v999 = vpop.f32.mrf.mxu0
        %v1000 = vadd.f32 %v700, %v999
        %v1001 = vpop.f32.mrf.mxu0
        %v1002 = vadd.f32 %v704, %v1001
        %1003 = vdwg.mxu0
        %1004 = vmatprep.subr.bf16.mxu0 0
        %1005 = vmatpush1.bf16.msra.mxu0 0
        %1006 = vmatprep.subr.bf16.mxu0 0
        %1007 = vmatpush1.bf16.msra.mxu0 0
        %1008 = vmatprep.subr.bf16.mxu0 0
        %1009 = vmatpush1.bf16.msra.mxu0 0
        %1010 = vmatprep.subr.bf16.mxu0 0
        %1011 = vmatpush1.bf16.msra.mxu0 0
        %1012 = vmatprep.subr.bf16.mxu0 0
        %1013 = vmatpush1.bf16.msra.mxu0 0
        %1014 = vmatprep.subr.bf16.mxu0 0
        %1015 = vmatpush1.bf16.msra.mxu0 %v843
        %1016 = vmatprep.subr.bf16.mxu0 0
        %1017 = vmatpush1.bf16.msra.mxu0 %v794
        %1018 = vmatprep.subr.bf16.mxu0 0
        %1019 = vmatpush1.bf16.msra.mxu0 %v787
        %1020 = vmatprep.subr.bf16.mxu0 0
        %1021 = vmatpush2.bf16.msra.mxu0 0
        %1022 = vmatprep.subr.bf16.mxu0 0
        %1023 = vmatpush2.bf16.msra.mxu0 0
        %1024 = vmatprep.subr.bf16.mxu0 0
        %1025 = vmatpush2.bf16.msra.mxu0 0
        %1026 = vmatprep.subr.bf16.mxu0 0
        %1027 = vmatpush2.bf16.msra.mxu0 0
        %1028 = vmatprep.subr.bf16.mxu0 0
        %1029 = vmatpush2.bf16.msra.mxu0 0
        %1030 = vmatprep.subr.bf16.mxu0 0
        %1031 = vmatpush2.bf16.msra.mxu0 0
        %1032 = vmatprep.subr.bf16.mxu0 0
        %1033 = vmatpush2.bf16.msra.mxu0 0
        %1034 = vmatprep.subr.bf16.mxu0 0
        %1035 = vmatpush2.bf16.msra.mxu0 0
        %1036 = vmatprep.mubr.bf16.mxu0 0
        %1037 = vmatmul.mubr.bf16.gmra.mxu0 %v818
        %v1038 = vpop.f32.mrf.mxu0
        %v1039 = vadd.f32 %v708, %v1038
        %v1040 = vpop.f32.mrf.mxu0
        %v1041 = vpop.f32.mrf.mxu0
        %v1042 = vadd.f32 %v708, %v1041
        %v1043 = vpop.f32.mrf.mxu0
        %1044 = vmatprep.mubr.bf16.mxu0 0
        %1045 = vmatmul.mubr.bf16.gmra.mxu0 %v821
        %v1046 = vpop.f32.mrf.mxu0
        %v1047 = vadd.f32 %v708, %v1046
        %v1048 = vpop.f32.mrf.mxu0
        %v1049 = vpop.f32.mrf.mxu0
        %v1050 = vadd.f32 %v708, %v1049
        %v1051 = vpop.f32.mrf.mxu0
        %1052 = vdwg.mxu0
        %v1053 = vmax.f32 %v880, 0.0
        %v1054 = vmax.f32 %v882, 0.0
        %v1055 = vmax.f32 %v933, 0.0
        %v1056 = vmax.f32 %v935, 0.0
        %v1057 = vmax.f32 %v986, 0.0
        %v1058 = vmax.f32 %v988, 0.0
        %v1059 = vmax.f32 %v1039, 0.0
        %v1060 = vmax.f32 %v884, 0.0
        %v1061 = vmax.f32 %v886, 0.0
        %v1062 = vmax.f32 %v937, 0.0
        %v1063 = vmax.f32 %v939, 0.0
        %v1064 = vmax.f32 %v990, 0.0
        %v1065 = vmax.f32 %v992, 0.0
        %v1066 = vmax.f32 %v1042, 0.0
        %v1067 = vmax.f32 %v890, 0.0
        %v1068 = vmax.f32 %v892, 0.0
        %v1069 = vmax.f32 %v943, 0.0
        %v1070 = vmax.f32 %v945, 0.0
        %v1071 = vmax.f32 %v996, 0.0
        %v1072 = vmax.f32 %v998, 0.0
        %v1073 = vmax.f32 %v1047, 0.0
        %v1074 = vmax.f32 %v894, 0.0
        %v1075 = vmax.f32 %v896, 0.0
        %v1076 = vmax.f32 %v947, 0.0
        %v1077 = vmax.f32 %v949, 0.0
        %v1078 = vmax.f32 %v1000, 0.0
        %v1079 = vmax.f32 %v1002, 0.0
        %v1080 = vmax.f32 %v1050, 0.0
        %v1081 = vpack.c.bf16 %v1060, %v1053
        %v1082 = vpack.c.bf16 %v1061, %v1054
        %v1083 = vpack.c.bf16 %v1062, %v1055
        %v1084 = vpack.c.bf16 %v1063, %v1056
        %v1085 = vpack.c.bf16 %v1064, %v1057
        %v1086 = vpack.c.bf16 %v1065, %v1058
        %v1087 = vpack.c.bf16 %v1066, %v1059
        %v1088 = vpack.c.bf16 %v1074, %v1067
        %v1089 = vpack.c.bf16 %v1075, %v1068
        %v1090 = vpack.c.bf16 %v1076, %v1069
        %v1091 = vpack.c.bf16 %v1077, %v1070
        %v1092 = vpack.c.bf16 %v1078, %v1071
        %v1093 = vpack.c.bf16 %v1079, %v1072
        %v1094 = vpack.c.bf16 %v1080, %v1073
        %v1095 = vld [vmem:[#allocation7] sm:$0xff]
        %v1096 = vld [vmem:[#allocation7 + $0x8] sm:$0xff]
        %v1097 = vld [vmem:[#allocation7 + $0x10] sm:$0xff]
        %v1098 = vld [vmem:[#allocation7 + $0x18] sm:$0xf]
        %v1099 = vld [vmem:[#allocation7 + $0x1c] sm:$0xff]
        %v1100 = vld [vmem:[#allocation7 + $0x24] sm:$0xff]
        %v1101 = vld [vmem:[#allocation7 + $0x2c] sm:$0xff]
        %v1102 = vld [vmem:[#allocation7 + $0x34] sm:$0xf]
        %v1103 = vld [vmem:[#allocation7 + $0x38] sm:$0xff]
        %v1104 = vld [vmem:[#allocation7 + $0x40] sm:$0xff]
        %v1105 = vld [vmem:[#allocation7 + $0x48] sm:$0xff]
        %v1106 = vld [vmem:[#allocation7 + $0x50] sm:$0xf]
        %v1107 = vld [vmem:[#allocation7 + $0x54] sm:$0xff]
        %v1108 = vld [vmem:[#allocation7 + $0x5c] sm:$0xff]
        %v1109 = vld [vmem:[#allocation7 + $0x64] sm:$0xff]
        %v1110 = vld [vmem:[#allocation7 + $0x6c] sm:$0xf]
        %v1111 = vld [vmem:[#allocation7 + $0x70] sm:$0xff]
        %v1112 = vld [vmem:[#allocation7 + $0x78] sm:$0xff]
        %v1113 = vld [vmem:[#allocation7 + $0x80] sm:$0xff]
        %v1114 = vld [vmem:[#allocation7 + $0x88] sm:$0xf]
        %v1115 = vld [vmem:[#allocation7 + $0x8c] sm:$0xff]
        %v1116 = vld [vmem:[#allocation7 + $0x94] sm:$0xff]
        %v1117 = vld [vmem:[#allocation7 + $0x9c] sm:$0xff]
        %v1118 = vld [vmem:[#allocation7 + $0xa4] sm:$0xf]
        %v1119 = vld [vmem:[#allocation7 + $0xa8] sm:$0xff]
        %v1120 = vld [vmem:[#allocation7 + $0xb0] sm:$0xff]
        %v1121 = vld [vmem:[#allocation7 + $0xb8] sm:$0xff]
        %v1122 = vld [vmem:[#allocation7 + $0xc0] sm:$0xf]
        %v1123 = vld [vmem:[#allocation7 + $0xc4] sm:$0xff]
        %v1124 = vld [vmem:[#allocation7 + $0xcc] sm:$0xff]
        %v1125 = vld [vmem:[#allocation7 + $0xd4] sm:$0xff]
        %v1126 = vld [vmem:[#allocation7 + $0xdc] sm:$0xf]
        %v1127 = vld [vmem:[#allocation7 + $0xe0] sm:$0xff]
        %v1128 = vld [vmem:[#allocation7 + $0xe8] sm:$0xff]
        %v1129 = vld [vmem:[#allocation7 + $0xf0] sm:$0xff]
        %v1130 = vld [vmem:[#allocation7 + $0xf8] sm:$0xf]
        %v1131 = vld [vmem:[#allocation7 + $0xfc] sm:$0xff]
        %v1132 = vld [vmem:[#allocation7 + $0x104] sm:$0xff]
        %v1133 = vld [vmem:[#allocation7 + $0x10c] sm:$0xff]
        %v1134 = vld [vmem:[#allocation7 + $0x114] sm:$0xf]
        %v1135 = vld [vmem:[#allocation7 + $0x118] sm:$0xff]
        %v1136 = vld [vmem:[#allocation7 + $0x120] sm:$0xff]
        %v1137 = vld [vmem:[#allocation7 + $0x128] sm:$0xff]
        %v1138 = vld [vmem:[#allocation7 + $0x130] sm:$0xf]
        %v1139 = vld [vmem:[#allocation7 + $0x134] sm:$0xff]
        %v1140 = vld [vmem:[#allocation7 + $0x13c] sm:$0xff]
        %v1141 = vld [vmem:[#allocation7 + $0x144] sm:$0xff]
        %v1142 = vld [vmem:[#allocation7 + $0x14c] sm:$0xf]
        %v1143 = vld [vmem:[#allocation7 + $0x150] sm:$0xff]
        %v1144 = vld [vmem:[#allocation7 + $0x158] sm:$0xff]
        %v1145 = vld [vmem:[#allocation7 + $0x160] sm:$0xff]
        %v1146 = vld [vmem:[#allocation7 + $0x168] sm:$0xf]
        %v1147 = vld [vmem:[#allocation7 + $0x16c] sm:$0xff]
        %v1148 = vld [vmem:[#allocation7 + $0x174] sm:$0xff]
        %v1149 = vld [vmem:[#allocation7 + $0x17c] sm:$0xff]
        %v1150 = vld [vmem:[#allocation7 + $0x184] sm:$0xf]
        %v1151 = vld [vmem:[#allocation7 + $0x188] sm:$0xff]
        %v1152 = vld [vmem:[#allocation7 + $0x190] sm:$0xff]
        %v1153 = vld [vmem:[#allocation7 + $0x198] sm:$0xff]
        %v1154 = vld [vmem:[#allocation7 + $0x1a0] sm:$0xf]
        %v1155 = vld [vmem:[#allocation7 + $0x1a4] sm:$0xff]
        %v1156 = vld [vmem:[#allocation7 + $0x1ac] sm:$0xff]
        %v1157 = vld [vmem:[#allocation7 + $0x1b4] sm:$0xff]
        %v1158 = vld [vmem:[#allocation7 + $0x1bc] sm:$0xf]
        %v1159 = vld [vmem:[#allocation7 + $0x1c0] sm:$0xff]
        %v1160 = vld [vmem:[#allocation7 + $0x1c8] sm:$0xff]
        %v1161 = vld [vmem:[#allocation7 + $0x1d0] sm:$0xff]
        %v1162 = vld [vmem:[#allocation7 + $0x1d8] sm:$0xf]
        %v1163 = vld [vmem:[#allocation7 + $0x1dc] sm:$0xff]
        %v1164 = vld [vmem:[#allocation7 + $0x1e4] sm:$0xff]
        %v1165 = vld [vmem:[#allocation7 + $0x1ec] sm:$0xff]
        %v1166 = vld [vmem:[#allocation7 + $0x1f4] sm:$0xf]
        %v1167 = vld [vmem:[#allocation7 + $0x1f8] sm:$0xff]
        %v1168 = vld [vmem:[#allocation7 + $0x200] sm:$0xff]
        %v1169 = vld [vmem:[#allocation7 + $0x208] sm:$0xff]
        %v1170 = vld [vmem:[#allocation7 + $0x210] sm:$0xf]
        %v1171 = vld [vmem:[#allocation7 + $0x214] sm:$0xff]
        %v1172 = vld [vmem:[#allocation7 + $0x21c] sm:$0xff]
        %v1173 = vld [vmem:[#allocation7 + $0x224] sm:$0xff]
        %v1174 = vld [vmem:[#allocation7 + $0x22c] sm:$0xf]
        %v1175 = vld [vmem:[#allocation7 + $0x230] sm:$0xff]
        %v1176 = vld [vmem:[#allocation7 + $0x238] sm:$0xff]
        %v1177 = vld [vmem:[#allocation7 + $0x240] sm:$0xff]
        %v1178 = vld [vmem:[#allocation7 + $0x248] sm:$0xf]
        %v1179 = vld [vmem:[#allocation7 + $0x24c] sm:$0xff]
        %v1180 = vld [vmem:[#allocation7 + $0x254] sm:$0xff]
        %v1181 = vld [vmem:[#allocation7 + $0x25c] sm:$0xff]
        %v1182 = vld [vmem:[#allocation7 + $0x264] sm:$0xf]
        %v1183 = vld [vmem:[#allocation7 + $0x268] sm:$0xff]
        %v1184 = vld [vmem:[#allocation7 + $0x270] sm:$0xff]
        %v1185 = vld [vmem:[#allocation7 + $0x278] sm:$0xff]
        %v1186 = vld [vmem:[#allocation7 + $0x280] sm:$0xf]
        %v1187 = vld [vmem:[#allocation7 + $0x284] sm:$0xff]
        %v1188 = vld [vmem:[#allocation7 + $0x28c] sm:$0xff]
        %v1189 = vld [vmem:[#allocation7 + $0x294] sm:$0xff]
        %v1190 = vld [vmem:[#allocation7 + $0x29c] sm:$0xf]
        %v1191 = vld [vmem:[#allocation7 + $0x2a0] sm:$0xff]
        %v1192 = vld [vmem:[#allocation7 + $0x2a8] sm:$0xff]
        %v1193 = vld [vmem:[#allocation7 + $0x2b0] sm:$0xff]
        %v1194 = vld [vmem:[#allocation7 + $0x2b8] sm:$0xf]
        %v1195 = vld [vmem:[#allocation7 + $0x2bc] sm:$0xff]
        %v1196 = vld [vmem:[#allocation7 + $0x2c4] sm:$0xff]
        %v1197 = vld [vmem:[#allocation7 + $0x2cc] sm:$0xff]
        %v1198 = vld [vmem:[#allocation7 + $0x2d4] sm:$0xf]
        %v1199 = vld [vmem:[#allocation7 + $0x2d8] sm:$0xff]
        %v1200 = vld [vmem:[#allocation7 + $0x2e0] sm:$0xff]
        %v1201 = vld [vmem:[#allocation7 + $0x2e8] sm:$0xff]
        %v1202 = vld [vmem:[#allocation7 + $0x2f0] sm:$0xf]
        %v1203 = vld [vmem:[#allocation7 + $0x2f4] sm:$0xff]
        %v1204 = vld [vmem:[#allocation7 + $0x2fc] sm:$0xff]
        %v1205 = vld [vmem:[#allocation7 + $0x304] sm:$0xff]
        %v1206 = vld [vmem:[#allocation7 + $0x30c] sm:$0xf]
        %v1207 = vld [vmem:[#allocation7 + $0x310] sm:$0xff]
        %v1208 = vld [vmem:[#allocation7 + $0x318] sm:$0xff]
        %v1209 = vld [vmem:[#allocation7 + $0x320] sm:$0xff]
        %v1210 = vld [vmem:[#allocation7 + $0x328] sm:$0xf]
        %v1211 = vld [vmem:[#allocation7 + $0x32c] sm:$0xff]
        %v1212 = vld [vmem:[#allocation7 + $0x334] sm:$0xff]
        %v1213 = vld [vmem:[#allocation7 + $0x33c] sm:$0xff]
        %v1214 = vld [vmem:[#allocation7 + $0x344] sm:$0xf]
        %v1215 = vld [vmem:[#allocation7 + $0x348] sm:$0xff]
        %v1216 = vld [vmem:[#allocation7 + $0x350] sm:$0xff]
        %v1217 = vld [vmem:[#allocation7 + $0x358] sm:$0xff]
        %v1218 = vld [vmem:[#allocation7 + $0x360] sm:$0xf]
        %v1219 = vld [vmem:[#allocation7 + $0x364] sm:$0xff]
        %v1220 = vld [vmem:[#allocation7 + $0x36c] sm:$0xff]
        %v1221 = vld [vmem:[#allocation7 + $0x374] sm:$0xff]
        %v1222 = vld [vmem:[#allocation7 + $0x37c] sm:$0xf]
        %v1223 = vld [vmem:[#allocation7 + $0x380] sm:$0xff]
        %v1224 = vld [vmem:[#allocation7 + $0x388] sm:$0xff]
        %v1225 = vld [vmem:[#allocation7 + $0x390] sm:$0xff]
        %v1226 = vld [vmem:[#allocation7 + $0x398] sm:$0xf]
        %v1227 = vld [vmem:[#allocation7 + $0x39c] sm:$0xff]
        %v1228 = vld [vmem:[#allocation7 + $0x3a4] sm:$0xff]
        %v1229 = vld [vmem:[#allocation7 + $0x3ac] sm:$0xff]
        %v1230 = vld [vmem:[#allocation7 + $0x3b4] sm:$0xf]
        %v1231 = vld [vmem:[#allocation7 + $0x3b8] sm:$0xff]
        %v1232 = vld [vmem:[#allocation7 + $0x3c0] sm:$0xff]
        %v1233 = vld [vmem:[#allocation7 + $0x3c8] sm:$0xff]
        %v1234 = vld [vmem:[#allocation7 + $0x3d0] sm:$0xf]
        %v1235 = vld [vmem:[#allocation7 + $0x3d4] sm:$0xff]
        %v1236 = vld [vmem:[#allocation7 + $0x3dc] sm:$0xff]
        %v1237 = vld [vmem:[#allocation7 + $0x3e4] sm:$0xff]
        %v1238 = vld [vmem:[#allocation7 + $0x3ec] sm:$0xf]
        %v1239 = vld [vmem:[#allocation7 + $0x3f0] sm:$0xff]
        %v1240 = vld [vmem:[#allocation7 + $0x3f8] sm:$0xff]
        %v1241 = vld [vmem:[#allocation7 + $0x400] sm:$0xff]
        %v1242 = vld [vmem:[#allocation7 + $0x408] sm:$0xf]
        %v1243 = vld [vmem:[#allocation7 + $0x40c] sm:$0xff]
        %v1244 = vld [vmem:[#allocation7 + $0x414] sm:$0xff]
        %v1245 = vld [vmem:[#allocation7 + $0x41c] sm:$0xff]
        %v1246 = vld [vmem:[#allocation7 + $0x424] sm:$0xf]
        %v1247 = vld [vmem:[#allocation7 + $0x428] sm:$0xff]
        %v1248 = vld [vmem:[#allocation7 + $0x430] sm:$0xff]
        %v1249 = vld [vmem:[#allocation7 + $0x438] sm:$0xff]
        %v1250 = vld [vmem:[#allocation7 + $0x440] sm:$0xf]
        %v1251 = vld [vmem:[#allocation7 + $0x444] sm:$0xff]
        %v1252 = vld [vmem:[#allocation7 + $0x44c] sm:$0xff]
        %v1253 = vld [vmem:[#allocation7 + $0x454] sm:$0xff]
        %v1254 = vld [vmem:[#allocation7 + $0x45c] sm:$0xf]
        %v1255 = vld [vmem:[#allocation7 + $0x460] sm:$0xff]
        %v1256 = vld [vmem:[#allocation7 + $0x468] sm:$0xff]
        %v1257 = vld [vmem:[#allocation7 + $0x470] sm:$0xff]
        %v1258 = vld [vmem:[#allocation7 + $0x478] sm:$0xf]
        %v1259 = vld [vmem:[#allocation7 + $0x47c] sm:$0xff]
        %v1260 = vld [vmem:[#allocation7 + $0x484] sm:$0xff]
        %v1261 = vld [vmem:[#allocation7 + $0x48c] sm:$0xff]
        %v1262 = vld [vmem:[#allocation7 + $0x494] sm:$0xf]
        %v1263 = vld [vmem:[#allocation7 + $0x498] sm:$0xff]
        %v1264 = vld [vmem:[#allocation7 + $0x4a0] sm:$0xff]
        %v1265 = vld [vmem:[#allocation7 + $0x4a8] sm:$0xff]
        %v1266 = vld [vmem:[#allocation7 + $0x4b0] sm:$0xf]
        %v1267 = vld [vmem:[#allocation7 + $0x4b4] sm:$0xff]
        %v1268 = vld [vmem:[#allocation7 + $0x4bc] sm:$0xff]
        %v1269 = vld [vmem:[#allocation7 + $0x4c4] sm:$0xff]
        %v1270 = vld [vmem:[#allocation7 + $0x4cc] sm:$0xf]
        %v1271 = vld [vmem:[#allocation7 + $0x4d0] sm:$0xff]
        %v1272 = vld [vmem:[#allocation7 + $0x4d8] sm:$0xff]
        %v1273 = vld [vmem:[#allocation7 + $0x4e0] sm:$0xff]
        %v1274 = vld [vmem:[#allocation7 + $0x4e8] sm:$0xf]
        %v1275 = vld [vmem:[#allocation7 + $0x4ec] sm:$0xff]
        %v1276 = vld [vmem:[#allocation7 + $0x4f4] sm:$0xff]
        %v1277 = vld [vmem:[#allocation7 + $0x4fc] sm:$0xff]
        %v1278 = vld [vmem:[#allocation7 + $0x504] sm:$0xf]
        %v1279 = vld [vmem:[#allocation7 + $0x508] sm:$0xff]
        %v1280 = vld [vmem:[#allocation7 + $0x510] sm:$0xff]
        %v1281 = vld [vmem:[#allocation7 + $0x518] sm:$0xff]
        %v1282 = vld [vmem:[#allocation7 + $0x520] sm:$0xf]
        %v1283 = vld [vmem:[#allocation7 + $0x524] sm:$0xff]
        %v1284 = vld [vmem:[#allocation7 + $0x52c] sm:$0xff]
        %v1285 = vld [vmem:[#allocation7 + $0x534] sm:$0xff]
        %v1286 = vld [vmem:[#allocation7 + $0x53c] sm:$0xf]
        %v1287 = vld [vmem:[#allocation7 + $0x540] sm:$0xff]
        %v1288 = vld [vmem:[#allocation7 + $0x548] sm:$0xff]
        %v1289 = vld [vmem:[#allocation7 + $0x550] sm:$0xff]
        %v1290 = vld [vmem:[#allocation7 + $0x558] sm:$0xf]
        %v1291 = vld [vmem:[#allocation7 + $0x55c] sm:$0xff]
        %v1292 = vld [vmem:[#allocation7 + $0x564] sm:$0xff]
        %v1293 = vld [vmem:[#allocation7 + $0x56c] sm:$0xff]
        %v1294 = vld [vmem:[#allocation7 + $0x574] sm:$0xf]
        %v1295 = vld [vmem:[#allocation7 + $0x578] sm:$0xff]
        %v1296 = vld [vmem:[#allocation7 + $0x580] sm:$0xff]
        %v1297 = vld [vmem:[#allocation7 + $0x588] sm:$0xff]
        %v1298 = vld [vmem:[#allocation7 + $0x590] sm:$0xf]
        %v1299 = vld [vmem:[#allocation7 + $0x594] sm:$0xff]
        %v1300 = vld [vmem:[#allocation7 + $0x59c] sm:$0xff]
        %v1301 = vld [vmem:[#allocation7 + $0x5a4] sm:$0xff]
        %v1302 = vld [vmem:[#allocation7 + $0x5ac] sm:$0xf]
        %v1303 = vld [vmem:[#allocation7 + $0x5b0] sm:$0xff]
        %v1304 = vld [vmem:[#allocation7 + $0x5b8] sm:$0xff]
        %v1305 = vld [vmem:[#allocation7 + $0x5c0] sm:$0xff]
        %v1306 = vld [vmem:[#allocation7 + $0x5c8] sm:$0xf]
        %v1307 = vld [vmem:[#allocation7 + $0x5cc] sm:$0xff]
        %v1308 = vld [vmem:[#allocation7 + $0x5d4] sm:$0xff]
        %v1309 = vld [vmem:[#allocation7 + $0x5dc] sm:$0xff]
        %v1310 = vld [vmem:[#allocation7 + $0x5e4] sm:$0xf]
        %v1311 = vld [vmem:[#allocation7 + $0x5e8] sm:$0xff]
        %v1312 = vld [vmem:[#allocation7 + $0x5f0] sm:$0xff]
        %v1313 = vld [vmem:[#allocation7 + $0x5f8] sm:$0xff]
        %v1314 = vld [vmem:[#allocation7 + $0x600] sm:$0xf]
        %v1315 = vld [vmem:[#allocation7 + $0x604] sm:$0xff]
        %v1316 = vld [vmem:[#allocation7 + $0x60c] sm:$0xff]
        %v1317 = vld [vmem:[#allocation7 + $0x614] sm:$0xff]
        %v1318 = vld [vmem:[#allocation7 + $0x61c] sm:$0xf]
        %v1319 = vld [vmem:[#allocation7 + $0x620] sm:$0xff]
        %v1320 = vld [vmem:[#allocation7 + $0x628] sm:$0xff]
        %v1321 = vld [vmem:[#allocation7 + $0x630] sm:$0xff]
        %v1322 = vld [vmem:[#allocation7 + $0x638] sm:$0xf]
        %v1323 = vld [vmem:[#allocation7 + $0x63c] sm:$0xff]
        %v1324 = vld [vmem:[#allocation7 + $0x644] sm:$0xff]
        %v1325 = vld [vmem:[#allocation7 + $0x64c] sm:$0xff]
        %v1326 = vld [vmem:[#allocation7 + $0x654] sm:$0xf]
        %v1327 = vld [vmem:[#allocation7 + $0x658] sm:$0xff]
        %v1328 = vld [vmem:[#allocation7 + $0x660] sm:$0xff]
        %v1329 = vld [vmem:[#allocation7 + $0x668] sm:$0xff]
        %v1330 = vld [vmem:[#allocation7 + $0x670] sm:$0xf]
        %v1331 = vld [vmem:[#allocation7 + $0x674] sm:$0xff]
        %v1332 = vld [vmem:[#allocation7 + $0x67c] sm:$0xff]
        %v1333 = vld [vmem:[#allocation7 + $0x684] sm:$0xff]
        %v1334 = vld [vmem:[#allocation7 + $0x68c] sm:$0xf]
        %v1335 = vld [vmem:[#allocation7 + $0x690] sm:$0xff]
        %v1336 = vld [vmem:[#allocation7 + $0x698] sm:$0xff]
        %v1337 = vld [vmem:[#allocation7 + $0x6a0] sm:$0xff]
        %v1338 = vld [vmem:[#allocation7 + $0x6a8] sm:$0xf]
        %v1339 = vld [vmem:[#allocation7 + $0x6ac] sm:$0xff]
        %v1340 = vld [vmem:[#allocation7 + $0x6b4] sm:$0xff]
        %v1341 = vld [vmem:[#allocation7 + $0x6bc] sm:$0xff]
        %v1342 = vld [vmem:[#allocation7 + $0x6c4] sm:$0xf]
        %v1343 = vld [vmem:[#allocation7 + $0x6c8] sm:$0xff]
        %v1344 = vld [vmem:[#allocation7 + $0x6d0] sm:$0xff]
        %v1345 = vld [vmem:[#allocation7 + $0x6d8] sm:$0xff]
        %v1346 = vld [vmem:[#allocation7 + $0x6e0] sm:$0xf]
        %v1347 = vld [vmem:[#allocation7 + $0x6e4] sm:$0xff]
        %v1348 = vld [vmem:[#allocation7 + $0x6ec] sm:$0xff]
        %v1349 = vld [vmem:[#allocation7 + $0x6f4] sm:$0xff]
        %v1350 = vld [vmem:[#allocation7 + $0x6fc] sm:$0xf]
        %v1351 = vld [vmem:[#allocation7 + $0x700] sm:$0xff]
        %v1352 = vld [vmem:[#allocation7 + $0x708] sm:$0xff]
        %v1353 = vld [vmem:[#allocation7 + $0x710] sm:$0xff]
        %v1354 = vld [vmem:[#allocation7 + $0x718] sm:$0xf]
        %v1355 = vld [vmem:[#allocation7 + $0x71c] sm:$0xff]
        %v1356 = vld [vmem:[#allocation7 + $0x724] sm:$0xff]
        %v1357 = vld [vmem:[#allocation7 + $0x72c] sm:$0xff]
        %v1358 = vld [vmem:[#allocation7 + $0x734] sm:$0xf]
        %v1359 = vld [vmem:[#allocation7 + $0x738] sm:$0xff]
        %v1360 = vld [vmem:[#allocation7 + $0x740] sm:$0xff]
        %v1361 = vld [vmem:[#allocation7 + $0x748] sm:$0xff]
        %v1362 = vld [vmem:[#allocation7 + $0x750] sm:$0xf]
        %v1363 = vld [vmem:[#allocation7 + $0x754] sm:$0xff]
        %v1364 = vld [vmem:[#allocation7 + $0x75c] sm:$0xff]
        %v1365 = vld [vmem:[#allocation7 + $0x764] sm:$0xff]
        %v1366 = vld [vmem:[#allocation7 + $0x76c] sm:$0xf]
        %v1367 = vld [vmem:[#allocation7 + $0x770] sm:$0xff]
        %v1368 = vld [vmem:[#allocation7 + $0x778] sm:$0xff]
        %v1369 = vld [vmem:[#allocation7 + $0x780] sm:$0xff]
        %v1370 = vld [vmem:[#allocation7 + $0x788] sm:$0xf]
        %v1371 = vld [vmem:[#allocation7 + $0x78c] sm:$0xff]
        %v1372 = vld [vmem:[#allocation7 + $0x794] sm:$0xff]
        %v1373 = vld [vmem:[#allocation7 + $0x79c] sm:$0xff]
        %v1374 = vld [vmem:[#allocation7 + $0x7a4] sm:$0xf]
        %v1375 = vld [vmem:[#allocation7 + $0x7a8] sm:$0xff]
        %v1376 = vld [vmem:[#allocation7 + $0x7b0] sm:$0xff]
        %v1377 = vld [vmem:[#allocation7 + $0x7b8] sm:$0xff]
        %v1378 = vld [vmem:[#allocation7 + $0x7c0] sm:$0xf]
        %v1379 = vld [vmem:[#allocation7 + $0x7c4] sm:$0xff]
        %v1380 = vld [vmem:[#allocation7 + $0x7cc] sm:$0xff]
        %v1381 = vld [vmem:[#allocation7 + $0x7d4] sm:$0xff]
        %v1382 = vld [vmem:[#allocation7 + $0x7dc] sm:$0xf]
        %v1383 = vld [vmem:[#allocation7 + $0x7e0] sm:$0xff]
        %v1384 = vld [vmem:[#allocation7 + $0x7e8] sm:$0xff]
        %v1385 = vld [vmem:[#allocation7 + $0x7f0] sm:$0xff]
        %v1386 = vld [vmem:[#allocation7 + $0x7f8] sm:$0xf]
        %v1387 = vld [vmem:[#allocation7 + $0x7fc] sm:$0xff]
        %v1388 = vld [vmem:[#allocation7 + $0x804] sm:$0xff]
        %v1389 = vld [vmem:[#allocation7 + $0x80c] sm:$0xff]
        %v1390 = vld [vmem:[#allocation7 + $0x814] sm:$0xf]
        %v1391 = vld [vmem:[#allocation7 + $0x818] sm:$0xff]
        %v1392 = vld [vmem:[#allocation7 + $0x820] sm:$0xff]
        %v1393 = vld [vmem:[#allocation7 + $0x828] sm:$0xff]
        %v1394 = vld [vmem:[#allocation7 + $0x830] sm:$0xf]
        %v1395 = vld [vmem:[#allocation7 + $0x834] sm:$0xff]
        %v1396 = vld [vmem:[#allocation7 + $0x83c] sm:$0xff]
        %v1397 = vld [vmem:[#allocation7 + $0x844] sm:$0xff]
        %v1398 = vld [vmem:[#allocation7 + $0x84c] sm:$0xf]
        %v1399 = vld [vmem:[#allocation7 + $0x850] sm:$0xff]
        %v1400 = vld [vmem:[#allocation7 + $0x858] sm:$0xff]
        %v1401 = vld [vmem:[#allocation7 + $0x860] sm:$0xff]
        %v1402 = vld [vmem:[#allocation7 + $0x868] sm:$0xf]
        %v1403 = vld [vmem:[#allocation7 + $0x86c] sm:$0xff]
        %v1404 = vld [vmem:[#allocation7 + $0x874] sm:$0xff]
        %v1405 = vld [vmem:[#allocation7 + $0x87c] sm:$0xff]
        %v1406 = vld [vmem:[#allocation7 + $0x884] sm:$0xf]
        %v1407 = vld [vmem:[#allocation7 + $0x888] sm:$0xff]
        %v1408 = vld [vmem:[#allocation7 + $0x890] sm:$0xff]
        %v1409 = vld [vmem:[#allocation7 + $0x898] sm:$0xff]
        %v1410 = vld [vmem:[#allocation7 + $0x8a0] sm:$0xf]
        %v1411 = vld [vmem:[#allocation7 + $0x8a4] sm:$0xff]
        %v1412 = vld [vmem:[#allocation7 + $0x8ac] sm:$0xff]
        %v1413 = vld [vmem:[#allocation7 + $0x8b4] sm:$0xff]
        %v1414 = vld [vmem:[#allocation7 + $0x8bc] sm:$0xf]
        %v1415 = vld [vmem:[#allocation7 + $0x8c0] sm:$0xff]
        %v1416 = vld [vmem:[#allocation7 + $0x8c8] sm:$0xff]
        %v1417 = vld [vmem:[#allocation7 + $0x8d0] sm:$0xff]
        %v1418 = vld [vmem:[#allocation7 + $0x8d8] sm:$0xf]
        %v1419 = vld [vmem:[#allocation7 + $0x8dc] sm:$0xff]
        %v1420 = vld [vmem:[#allocation7 + $0x8e4] sm:$0xff]
        %v1421 = vld [vmem:[#allocation7 + $0x8ec] sm:$0xff]
        %v1422 = vld [vmem:[#allocation7 + $0x8f4] sm:$0xf]
        %v1423 = vld [vmem:[#allocation7 + $0x8f8] sm:$0xff]
        %v1424 = vld [vmem:[#allocation7 + $0x900] sm:$0xff]
        %v1425 = vld [vmem:[#allocation7 + $0x908] sm:$0xff]
        %v1426 = vld [vmem:[#allocation7 + $0x910] sm:$0xf]
        %v1427 = vld [vmem:[#allocation7 + $0x914] sm:$0xff]
        %v1428 = vld [vmem:[#allocation7 + $0x91c] sm:$0xff]
        %v1429 = vld [vmem:[#allocation7 + $0x924] sm:$0xff]
        %v1430 = vld [vmem:[#allocation7 + $0x92c] sm:$0xf]
        %v1431 = vld [vmem:[#allocation7 + $0x930] sm:$0xff]
        %v1432 = vld [vmem:[#allocation7 + $0x938] sm:$0xff]
        %v1433 = vld [vmem:[#allocation7 + $0x940] sm:$0xff]
        %v1434 = vld [vmem:[#allocation7 + $0x948] sm:$0xf]
        %v1435 = vld [vmem:[#allocation7 + $0x94c] sm:$0xff]
        %v1436 = vld [vmem:[#allocation7 + $0x954] sm:$0xff]
        %v1437 = vld [vmem:[#allocation7 + $0x95c] sm:$0xff]
        %v1438 = vld [vmem:[#allocation7 + $0x964] sm:$0xf]
        %v1439 = vld [vmem:[#allocation7 + $0x968] sm:$0xff]
        %v1440 = vld [vmem:[#allocation7 + $0x970] sm:$0xff]
        %v1441 = vld [vmem:[#allocation7 + $0x978] sm:$0xff]
        %v1442 = vld [vmem:[#allocation7 + $0x980] sm:$0xf]
        %v1443 = vld [vmem:[#allocation7 + $0x984] sm:$0xff]
        %v1444 = vld [vmem:[#allocation7 + $0x98c] sm:$0xff]
        %v1445 = vld [vmem:[#allocation7 + $0x994] sm:$0xff]
        %v1446 = vld [vmem:[#allocation7 + $0x99c] sm:$0xf]
        %v1447 = vld [vmem:[#allocation7 + $0x9a0] sm:$0xff]
        %v1448 = vld [vmem:[#allocation7 + $0x9a8] sm:$0xff]
        %v1449 = vld [vmem:[#allocation7 + $0x9b0] sm:$0xff]
        %v1450 = vld [vmem:[#allocation7 + $0x9b8] sm:$0xf]
        %v1451 = vld [vmem:[#allocation7 + $0x9bc] sm:$0xff]
        %v1452 = vld [vmem:[#allocation7 + $0x9c4] sm:$0xff]
        %v1453 = vld [vmem:[#allocation7 + $0x9cc] sm:$0xff]
        %v1454 = vld [vmem:[#allocation7 + $0x9d4] sm:$0xf]
        %v1455 = vld [vmem:[#allocation7 + $0x9d8] sm:$0xff]
        %v1456 = vld [vmem:[#allocation7 + $0x9e0] sm:$0xff]
        %v1457 = vld [vmem:[#allocation7 + $0x9e8] sm:$0xff]
        %v1458 = vld [vmem:[#allocation7 + $0x9f0] sm:$0xf]
        %v1459 = vld [vmem:[#allocation7 + $0x9f4] sm:$0xff]
        %v1460 = vld [vmem:[#allocation7 + $0x9fc] sm:$0xff]
        %v1461 = vld [vmem:[#allocation7 + $0xa04] sm:$0xff]
        %v1462 = vld [vmem:[#allocation7 + $0xa0c] sm:$0xf]
        %v1463 = vld [vmem:[#allocation7 + $0xa10] sm:$0xff]
        %v1464 = vld [vmem:[#allocation7 + $0xa18] sm:$0xff]
        %v1465 = vld [vmem:[#allocation7 + $0xa20] sm:$0xff]
        %v1466 = vld [vmem:[#allocation7 + $0xa28] sm:$0xf]
        %v1467 = vld [vmem:[#allocation7 + $0xa2c] sm:$0xff]
        %v1468 = vld [vmem:[#allocation7 + $0xa34] sm:$0xff]
        %v1469 = vld [vmem:[#allocation7 + $0xa3c] sm:$0xff]
        %v1470 = vld [vmem:[#allocation7 + $0xa44] sm:$0xf]
        %v1471 = vld [vmem:[#allocation7 + $0xa48] sm:$0xff]
        %v1472 = vld [vmem:[#allocation7 + $0xa50] sm:$0xff]
        %v1473 = vld [vmem:[#allocation7 + $0xa58] sm:$0xff]
        %v1474 = vld [vmem:[#allocation7 + $0xa60] sm:$0xf]
        %v1475 = vld [vmem:[#allocation7 + $0xa64] sm:$0xff]
        %v1476 = vld [vmem:[#allocation7 + $0xa6c] sm:$0xff]
        %v1477 = vld [vmem:[#allocation7 + $0xa74] sm:$0xff]
        %v1478 = vld [vmem:[#allocation7 + $0xa7c] sm:$0xf]
        %v1479 = vld [vmem:[#allocation7 + $0xa80] sm:$0xff]
        %v1480 = vld [vmem:[#allocation7 + $0xa88] sm:$0xff]
        %v1481 = vld [vmem:[#allocation7 + $0xa90] sm:$0xff]
        %v1482 = vld [vmem:[#allocation7 + $0xa98] sm:$0xf]
        %v1483 = vld [vmem:[#allocation7 + $0xa9c] sm:$0xff]
        %v1484 = vld [vmem:[#allocation7 + $0xaa4] sm:$0xff]
        %v1485 = vld [vmem:[#allocation7 + $0xaac] sm:$0xff]
        %v1486 = vld [vmem:[#allocation7 + $0xab4] sm:$0xf]
        %v1487 = vld [vmem:[#allocation7 + $0xab8] sm:$0xff]
        %v1488 = vld [vmem:[#allocation7 + $0xac0] sm:$0xff]
        %v1489 = vld [vmem:[#allocation7 + $0xac8] sm:$0xff]
        %v1490 = vld [vmem:[#allocation7 + $0xad0] sm:$0xf]
        %v1491 = vld [vmem:[#allocation7 + $0xad4] sm:$0xff]
        %v1492 = vld [vmem:[#allocation7 + $0xadc] sm:$0xff]
        %v1493 = vld [vmem:[#allocation7 + $0xae4] sm:$0xff]
        %v1494 = vld [vmem:[#allocation7 + $0xaec] sm:$0xf]
        %v1495 = vld [vmem:[#allocation7 + $0xaf0] sm:$0xff]
        %v1496 = vld [vmem:[#allocation7 + $0xaf8] sm:$0xff]
        %v1497 = vld [vmem:[#allocation7 + $0xb00] sm:$0xff]
        %v1498 = vld [vmem:[#allocation7 + $0xb08] sm:$0xf]
        %v1499 = vld [vmem:[#allocation7 + $0xb0c] sm:$0xff]
        %v1500 = vld [vmem:[#allocation7 + $0xb14] sm:$0xff]
        %v1501 = vld [vmem:[#allocation7 + $0xb1c] sm:$0xff]
        %v1502 = vld [vmem:[#allocation7 + $0xb24] sm:$0xf]
        %v1503 = vld [vmem:[#allocation7 + $0xb28] sm:$0xff]
        %v1504 = vld [vmem:[#allocation7 + $0xb30] sm:$0xff]
        %v1505 = vld [vmem:[#allocation7 + $0xb38] sm:$0xff]
        %v1506 = vld [vmem:[#allocation7 + $0xb40] sm:$0xf]
        %v1507 = vld [vmem:[#allocation7 + $0xb44] sm:$0xff]
        %v1508 = vld [vmem:[#allocation7 + $0xb4c] sm:$0xff]
        %v1509 = vld [vmem:[#allocation7 + $0xb54] sm:$0xff]
        %v1510 = vld [vmem:[#allocation7 + $0xb5c] sm:$0xf]
        %v1511 = vld [vmem:[#allocation7 + $0xb60] sm:$0xff]
        %v1512 = vld [vmem:[#allocation7 + $0xb68] sm:$0xff]
        %v1513 = vld [vmem:[#allocation7 + $0xb70] sm:$0xff]
        %v1514 = vld [vmem:[#allocation7 + $0xb78] sm:$0xf]
        %v1515 = vld [vmem:[#allocation7 + $0xb7c] sm:$0xff]
        %v1516 = vld [vmem:[#allocation7 + $0xb84] sm:$0xff]
        %v1517 = vld [vmem:[#allocation7 + $0xb8c] sm:$0xff]
        %v1518 = vld [vmem:[#allocation7 + $0xb94] sm:$0xf]
        %v1519 = vld [vmem:[#allocation7 + $0xb98] sm:$0xff]
        %v1520 = vld [vmem:[#allocation7 + $0xba0] sm:$0xff]
        %v1521 = vld [vmem:[#allocation7 + $0xba8] sm:$0xff]
        %v1522 = vld [vmem:[#allocation7 + $0xbb0] sm:$0xf]
        %v1523 = vld [vmem:[#allocation7 + $0xbb4] sm:$0xff]
        %v1524 = vld [vmem:[#allocation7 + $0xbbc] sm:$0xff]
        %v1525 = vld [vmem:[#allocation7 + $0xbc4] sm:$0xff]
        %v1526 = vld [vmem:[#allocation7 + $0xbcc] sm:$0xf]
        %v1527 = vld [vmem:[#allocation7 + $0xbd0] sm:$0xff]
        %v1528 = vld [vmem:[#allocation7 + $0xbd8] sm:$0xff]
        %v1529 = vld [vmem:[#allocation7 + $0xbe0] sm:$0xff]
        %v1530 = vld [vmem:[#allocation7 + $0xbe8] sm:$0xf]
        %v1531 = vld [vmem:[#allocation7 + $0xbec] sm:$0xff]
        %v1532 = vld [vmem:[#allocation7 + $0xbf4] sm:$0xff]
        %v1533 = vld [vmem:[#allocation7 + $0xbfc] sm:$0xff]
        %v1534 = vld [vmem:[#allocation7 + $0xc04] sm:$0xf]
        %v1535 = vld [vmem:[#allocation7 + $0xc08] sm:$0xff]
        %v1536 = vld [vmem:[#allocation7 + $0xc10] sm:$0xff]
        %v1537 = vld [vmem:[#allocation7 + $0xc18] sm:$0xff]
        %v1538 = vld [vmem:[#allocation7 + $0xc20] sm:$0xf]
        %v1539 = vld [vmem:[#allocation7 + $0xc24] sm:$0xff]
        %v1540 = vld [vmem:[#allocation7 + $0xc2c] sm:$0xff]
        %v1541 = vld [vmem:[#allocation7 + $0xc34] sm:$0xff]
        %v1542 = vld [vmem:[#allocation7 + $0xc3c] sm:$0xf]
        %v1543 = vld [vmem:[#allocation8] sm:$0xff]
        %v1545 = vlaneseq
        %v1546 = vshrl.u32 %v1545, 7
        %v1547 = vsub.s32 0, %v1546
        %v1548 = vrot.slane %v1543, %v1547
        %v1549 = vlaneseq
        %v1550 = vshrl.u32 %v1549, 7
        %v1551 = vsub.s32 1, %v1550
        %v1552 = vrot.slane %v1543, %v1551
        %v1553 = vlaneseq
        %v1554 = vshrl.u32 %v1553, 7
        %v1555 = vsub.s32 2, %v1554
        %v1556 = vrot.slane %v1543, %v1555
        %v1557 = vlaneseq
        %v1558 = vshrl.u32 %v1557, 7
        %v1559 = vsub.s32 3, %v1558
        %v1560 = vrot.slane %v1543, %v1559
        %v1561 = vlaneseq
        %v1562 = vshrl.u32 %v1561, 7
        %v1563 = vsub.s32 4, %v1562
        %v1564 = vrot.slane %v1543, %v1563
        %v1565 = vlaneseq
        %v1566 = vshrl.u32 %v1565, 7
        %v1567 = vsub.s32 5, %v1566
        %v1568 = vrot.slane %v1543, %v1567
        %v1569 = vlaneseq
        %v1570 = vshrl.u32 %v1569, 7
        %v1571 = vsub.s32 6, %v1570
        %v1572 = vrot.slane %v1543, %v1571
        %v2028 = vunpack.c.l.b16 %v1095
        %v2029 = vunpack.c.h.b16 %v1095
        %v2030 = vunpack.c.l.b16 %v1096
        %v2031 = vunpack.c.h.b16 %v1096
        %v2032 = vunpack.c.l.b16 %v1097
        %v2033 = vunpack.c.h.b16 %v1097
        %v2034 = vunpack.c.l.b16 %v1098
        %v2035 = vunpack.c.l.b16 %v1099
        %v2036 = vunpack.c.h.b16 %v1099
        %v2037 = vunpack.c.l.b16 %v1100
        %v2038 = vunpack.c.h.b16 %v1100
        %v2039 = vunpack.c.l.b16 %v1101
        %v2040 = vunpack.c.h.b16 %v1101
        %v2041 = vunpack.c.l.b16 %v1102
        %v2042 = vunpack.c.l.b16 %v1103
        %v2043 = vunpack.c.h.b16 %v1103
        %v2044 = vunpack.c.l.b16 %v1104
        %v2045 = vunpack.c.h.b16 %v1104
        %v2046 = vunpack.c.l.b16 %v1105
        %v2047 = vunpack.c.h.b16 %v1105
        %v2048 = vunpack.c.l.b16 %v1106
        %v2049 = vunpack.c.l.b16 %v1107
        %v2050 = vunpack.c.h.b16 %v1107
        %v2051 = vunpack.c.l.b16 %v1108
        %v2052 = vunpack.c.h.b16 %v1108
        %v2053 = vunpack.c.l.b16 %v1109
        %v2054 = vunpack.c.h.b16 %v1109
        %v2055 = vunpack.c.l.b16 %v1110
        %v2056 = vunpack.c.l.b16 %v1111
        %v2057 = vunpack.c.h.b16 %v1111
        %v2058 = vunpack.c.l.b16 %v1112
        %v2059 = vunpack.c.h.b16 %v1112
        %v2060 = vunpack.c.l.b16 %v1113
        %v2061 = vunpack.c.h.b16 %v1113
        %v2062 = vunpack.c.l.b16 %v1114
        %v2063 = vunpack.c.l.b16 %v1115
        %v2064 = vunpack.c.h.b16 %v1115
        %v2065 = vunpack.c.l.b16 %v1116
        %v2066 = vunpack.c.h.b16 %v1116
        %v2067 = vunpack.c.l.b16 %v1117
        %v2068 = vunpack.c.h.b16 %v1117
        %v2069 = vunpack.c.l.b16 %v1118
        %v2070 = vunpack.c.l.b16 %v1119
        %v2071 = vunpack.c.h.b16 %v1119
        %v2072 = vunpack.c.l.b16 %v1120
        %v2073 = vunpack.c.h.b16 %v1120
        %v2074 = vunpack.c.l.b16 %v1121
        %v2075 = vunpack.c.h.b16 %v1121
        %v2076 = vunpack.c.l.b16 %v1122
        %v2077 = vunpack.c.l.b16 %v1123
        %v2078 = vunpack.c.h.b16 %v1123
        %v2079 = vunpack.c.l.b16 %v1124
        %v2080 = vunpack.c.h.b16 %v1124
        %v2081 = vunpack.c.l.b16 %v1125
        %v2082 = vunpack.c.h.b16 %v1125
        %v2083 = vunpack.c.l.b16 %v1126
        %v2084 = vunpack.c.l.b16 %v1127
        %v2085 = vunpack.c.h.b16 %v1127
        %v2086 = vunpack.c.l.b16 %v1128
        %v2087 = vunpack.c.h.b16 %v1128
        %v2088 = vunpack.c.l.b16 %v1129
        %v2089 = vunpack.c.h.b16 %v1129
        %v2090 = vunpack.c.l.b16 %v1130
        %v2091 = vunpack.c.l.b16 %v1131
        %v2092 = vunpack.c.h.b16 %v1131
        %v2093 = vunpack.c.l.b16 %v1132
        %v2094 = vunpack.c.h.b16 %v1132
        %v2095 = vunpack.c.l.b16 %v1133
        %v2096 = vunpack.c.h.b16 %v1133
        %v2097 = vunpack.c.l.b16 %v1134
        %v2098 = vunpack.c.l.b16 %v1135
        %v2099 = vunpack.c.h.b16 %v1135
        %v2100 = vunpack.c.l.b16 %v1136
        %v2101 = vunpack.c.h.b16 %v1136
        %v2102 = vunpack.c.l.b16 %v1137
        %v2103 = vunpack.c.h.b16 %v1137
        %v2104 = vunpack.c.l.b16 %v1138
        %v2105 = vunpack.c.l.b16 %v1139
        %v2106 = vunpack.c.h.b16 %v1139
        %v2107 = vunpack.c.l.b16 %v1140
        %v2108 = vunpack.c.h.b16 %v1140
        %v2109 = vunpack.c.l.b16 %v1141
        %v2110 = vunpack.c.h.b16 %v1141
        %v2111 = vunpack.c.l.b16 %v1142
        %v2112 = vunpack.c.l.b16 %v1143
        %v2113 = vunpack.c.h.b16 %v1143
        %v2114 = vunpack.c.l.b16 %v1144
        %v2115 = vunpack.c.h.b16 %v1144
        %v2116 = vunpack.c.l.b16 %v1145
        %v2117 = vunpack.c.h.b16 %v1145
        %v2118 = vunpack.c.l.b16 %v1146
        %v2119 = vunpack.c.l.b16 %v1147
        %v2120 = vunpack.c.h.b16 %v1147
        %v2121 = vunpack.c.l.b16 %v1148
        %v2122 = vunpack.c.h.b16 %v1148
        %v2123 = vunpack.c.l.b16 %v1149
        %v2124 = vunpack.c.h.b16 %v1149
        %v2125 = vunpack.c.l.b16 %v1150
        %v2126 = vunpack.c.l.b16 %v1151
        %v2127 = vunpack.c.h.b16 %v1151
        %v2128 = vunpack.c.l.b16 %v1152
        %v2129 = vunpack.c.h.b16 %v1152
        %v2130 = vunpack.c.l.b16 %v1153
        %v2131 = vunpack.c.h.b16 %v1153
        %v2132 = vunpack.c.l.b16 %v1154
        %v2133 = vunpack.c.l.b16 %v1155
        %v2134 = vunpack.c.h.b16 %v1155
        %v2135 = vunpack.c.l.b16 %v1156
        %v2136 = vunpack.c.h.b16 %v1156
        %v2137 = vunpack.c.l.b16 %v1157
        %v2138 = vunpack.c.h.b16 %v1157
        %v2139 = vunpack.c.l.b16 %v1158
        %v2140 = vunpack.c.l.b16 %v1159
        %v2141 = vunpack.c.h.b16 %v1159
        %v2142 = vunpack.c.l.b16 %v1160
        %v2143 = vunpack.c.h.b16 %v1160
        %v2144 = vunpack.c.l.b16 %v1161
        %v2145 = vunpack.c.h.b16 %v1161
        %v2146 = vunpack.c.l.b16 %v1162
        %v2147 = vunpack.c.l.b16 %v1163
        %v2148 = vunpack.c.h.b16 %v1163
        %v2149 = vunpack.c.l.b16 %v1164
        %v2150 = vunpack.c.h.b16 %v1164
        %v2151 = vunpack.c.l.b16 %v1165
        %v2152 = vunpack.c.h.b16 %v1165
        %v2153 = vunpack.c.l.b16 %v1166
        %v2154 = vunpack.c.l.b16 %v1167
        %v2155 = vunpack.c.h.b16 %v1167
        %v2156 = vunpack.c.l.b16 %v1168
        %v2157 = vunpack.c.h.b16 %v1168
        %v2158 = vunpack.c.l.b16 %v1169
        %v2159 = vunpack.c.h.b16 %v1169
        %v2160 = vunpack.c.l.b16 %v1170
        %v2161 = vunpack.c.l.b16 %v1171
        %v2162 = vunpack.c.h.b16 %v1171
        %v2163 = vunpack.c.l.b16 %v1172
        %v2164 = vunpack.c.h.b16 %v1172
        %v2165 = vunpack.c.l.b16 %v1173
        %v2166 = vunpack.c.h.b16 %v1173
        %v2167 = vunpack.c.l.b16 %v1174
        %v2168 = vunpack.c.l.b16 %v1175
        %v2169 = vunpack.c.h.b16 %v1175
        %v2170 = vunpack.c.l.b16 %v1176
        %v2171 = vunpack.c.h.b16 %v1176
        %v2172 = vunpack.c.l.b16 %v1177
        %v2173 = vunpack.c.h.b16 %v1177
        %v2174 = vunpack.c.l.b16 %v1178
        %v2175 = vunpack.c.l.b16 %v1179
        %v2176 = vunpack.c.h.b16 %v1179
        %v2177 = vunpack.c.l.b16 %v1180
        %v2178 = vunpack.c.h.b16 %v1180
        %v2179 = vunpack.c.l.b16 %v1181
        %v2180 = vunpack.c.h.b16 %v1181
        %v2181 = vunpack.c.l.b16 %v1182
        %v2182 = vunpack.c.l.b16 %v1183
        %v2183 = vunpack.c.h.b16 %v1183
        %v2184 = vunpack.c.l.b16 %v1184
        %v2185 = vunpack.c.h.b16 %v1184
        %v2186 = vunpack.c.l.b16 %v1185
        %v2187 = vunpack.c.h.b16 %v1185
        %v2188 = vunpack.c.l.b16 %v1186
        %v2189 = vunpack.c.l.b16 %v1187
        %v2190 = vunpack.c.h.b16 %v1187
        %v2191 = vunpack.c.l.b16 %v1188
        %v2192 = vunpack.c.h.b16 %v1188
        %v2193 = vunpack.c.l.b16 %v1189
        %v2194 = vunpack.c.h.b16 %v1189
        %v2195 = vunpack.c.l.b16 %v1190
        %v2196 = vunpack.c.l.b16 %v1191
        %v2197 = vunpack.c.h.b16 %v1191
        %v2198 = vunpack.c.l.b16 %v1192
        %v2199 = vunpack.c.h.b16 %v1192
        %v2200 = vunpack.c.l.b16 %v1193
        %v2201 = vunpack.c.h.b16 %v1193
        %v2202 = vunpack.c.l.b16 %v1194
        %v2203 = vunpack.c.l.b16 %v1195
        %v2204 = vunpack.c.h.b16 %v1195
        %v2205 = vunpack.c.l.b16 %v1196
        %v2206 = vunpack.c.h.b16 %v1196
        %v2207 = vunpack.c.l.b16 %v1197
        %v2208 = vunpack.c.h.b16 %v1197
        %v2209 = vunpack.c.l.b16 %v1198
        %v2210 = vunpack.c.l.b16 %v1199
        %v2211 = vunpack.c.h.b16 %v1199
        %v2212 = vunpack.c.l.b16 %v1200
        %v2213 = vunpack.c.h.b16 %v1200
        %v2214 = vunpack.c.l.b16 %v1201
        %v2215 = vunpack.c.h.b16 %v1201
        %v2216 = vunpack.c.l.b16 %v1202
        %v2217 = vunpack.c.l.b16 %v1203
        %v2218 = vunpack.c.h.b16 %v1203
        %v2219 = vunpack.c.l.b16 %v1204
        %v2220 = vunpack.c.h.b16 %v1204
        %v2221 = vunpack.c.l.b16 %v1205
        %v2222 = vunpack.c.h.b16 %v1205
        %v2223 = vunpack.c.l.b16 %v1206
        %v2224 = vunpack.c.l.b16 %v1207
        %v2225 = vunpack.c.h.b16 %v1207
        %v2226 = vunpack.c.l.b16 %v1208
        %v2227 = vunpack.c.h.b16 %v1208
        %v2228 = vunpack.c.l.b16 %v1209
        %v2229 = vunpack.c.h.b16 %v1209
        %v2230 = vunpack.c.l.b16 %v1210
        %v2231 = vunpack.c.l.b16 %v1211
        %v2232 = vunpack.c.h.b16 %v1211
        %v2233 = vunpack.c.l.b16 %v1212
        %v2234 = vunpack.c.h.b16 %v1212
        %v2235 = vunpack.c.l.b16 %v1213
        %v2236 = vunpack.c.h.b16 %v1213
        %v2237 = vunpack.c.l.b16 %v1214
        %v2238 = vunpack.c.l.b16 %v1215
        %v2239 = vunpack.c.h.b16 %v1215
        %v2240 = vunpack.c.l.b16 %v1216
        %v2241 = vunpack.c.h.b16 %v1216
        %v2242 = vunpack.c.l.b16 %v1217
        %v2243 = vunpack.c.h.b16 %v1217
        %v2244 = vunpack.c.l.b16 %v1218
        %v2245 = vunpack.c.l.b16 %v1219
        %v2246 = vunpack.c.h.b16 %v1219
        %v2247 = vunpack.c.l.b16 %v1220
        %v2248 = vunpack.c.h.b16 %v1220
        %v2249 = vunpack.c.l.b16 %v1221
        %v2250 = vunpack.c.h.b16 %v1221
        %v2251 = vunpack.c.l.b16 %v1222
        %v2252 = vunpack.c.l.b16 %v1223
        %v2253 = vunpack.c.h.b16 %v1223
        %v2254 = vunpack.c.l.b16 %v1224
        %v2255 = vunpack.c.h.b16 %v1224
        %v2256 = vunpack.c.l.b16 %v1225
        %v2257 = vunpack.c.h.b16 %v1225
        %v2258 = vunpack.c.l.b16 %v1226
        %v2259 = vunpack.c.l.b16 %v1227
        %v2260 = vunpack.c.h.b16 %v1227
        %v2261 = vunpack.c.l.b16 %v1228
        %v2262 = vunpack.c.h.b16 %v1228
        %v2263 = vunpack.c.l.b16 %v1229
        %v2264 = vunpack.c.h.b16 %v1229
        %v2265 = vunpack.c.l.b16 %v1230
        %v2266 = vunpack.c.l.b16 %v1231
        %v2267 = vunpack.c.h.b16 %v1231
        %v2268 = vunpack.c.l.b16 %v1232
        %v2269 = vunpack.c.h.b16 %v1232
        %v2270 = vunpack.c.l.b16 %v1233
        %v2271 = vunpack.c.h.b16 %v1233
        %v2272 = vunpack.c.l.b16 %v1234
        %v2273 = vunpack.c.l.b16 %v1235
        %v2274 = vunpack.c.h.b16 %v1235
        %v2275 = vunpack.c.l.b16 %v1236
        %v2276 = vunpack.c.h.b16 %v1236
        %v2277 = vunpack.c.l.b16 %v1237
        %v2278 = vunpack.c.h.b16 %v1237
        %v2279 = vunpack.c.l.b16 %v1238
        %v2280 = vunpack.c.l.b16 %v1239
        %v2281 = vunpack.c.h.b16 %v1239
        %v2282 = vunpack.c.l.b16 %v1240
        %v2283 = vunpack.c.h.b16 %v1240
        %v2284 = vunpack.c.l.b16 %v1241
        %v2285 = vunpack.c.h.b16 %v1241
        %v2286 = vunpack.c.l.b16 %v1242
        %v2287 = vunpack.c.l.b16 %v1243
        %v2288 = vunpack.c.h.b16 %v1243
        %v2289 = vunpack.c.l.b16 %v1244
        %v2290 = vunpack.c.h.b16 %v1244
        %v2291 = vunpack.c.l.b16 %v1245
        %v2292 = vunpack.c.h.b16 %v1245
        %v2293 = vunpack.c.l.b16 %v1246
        %v2294 = vunpack.c.l.b16 %v1247
        %v2295 = vunpack.c.h.b16 %v1247
        %v2296 = vunpack.c.l.b16 %v1248
        %v2297 = vunpack.c.h.b16 %v1248
        %v2298 = vunpack.c.l.b16 %v1249
        %v2299 = vunpack.c.h.b16 %v1249
        %v2300 = vunpack.c.l.b16 %v1250
        %v2301 = vunpack.c.l.b16 %v1251
        %v2302 = vunpack.c.h.b16 %v1251
        %v2303 = vunpack.c.l.b16 %v1252
        %v2304 = vunpack.c.h.b16 %v1252
        %v2305 = vunpack.c.l.b16 %v1253
        %v2306 = vunpack.c.h.b16 %v1253
        %v2307 = vunpack.c.l.b16 %v1254
        %v2308 = vunpack.c.l.b16 %v1255
        %v2309 = vunpack.c.h.b16 %v1255
        %v2310 = vunpack.c.l.b16 %v1256
        %v2311 = vunpack.c.h.b16 %v1256
        %v2312 = vunpack.c.l.b16 %v1257
        %v2313 = vunpack.c.h.b16 %v1257
        %v2314 = vunpack.c.l.b16 %v1258
        %v2315 = vunpack.c.l.b16 %v1259
        %v2316 = vunpack.c.h.b16 %v1259
        %v2317 = vunpack.c.l.b16 %v1260
        %v2318 = vunpack.c.h.b16 %v1260
        %v2319 = vunpack.c.l.b16 %v1261
        %v2320 = vunpack.c.h.b16 %v1261
        %v2321 = vunpack.c.l.b16 %v1262
        %v2322 = vunpack.c.l.b16 %v1263
        %v2323 = vunpack.c.h.b16 %v1263
        %v2324 = vunpack.c.l.b16 %v1264
        %v2325 = vunpack.c.h.b16 %v1264
        %v2326 = vunpack.c.l.b16 %v1265
        %v2327 = vunpack.c.h.b16 %v1265
        %v2328 = vunpack.c.l.b16 %v1266
        %v2329 = vunpack.c.l.b16 %v1267
        %v2330 = vunpack.c.h.b16 %v1267
        %v2331 = vunpack.c.l.b16 %v1268
        %v2332 = vunpack.c.h.b16 %v1268
        %v2333 = vunpack.c.l.b16 %v1269
        %v2334 = vunpack.c.h.b16 %v1269
        %v2335 = vunpack.c.l.b16 %v1270
        %v2336 = vunpack.c.l.b16 %v1271
        %v2337 = vunpack.c.h.b16 %v1271
        %v2338 = vunpack.c.l.b16 %v1272
        %v2339 = vunpack.c.h.b16 %v1272
        %v2340 = vunpack.c.l.b16 %v1273
        %v2341 = vunpack.c.h.b16 %v1273
        %v2342 = vunpack.c.l.b16 %v1274
        %v2343 = vunpack.c.l.b16 %v1275
        %v2344 = vunpack.c.h.b16 %v1275
        %v2345 = vunpack.c.l.b16 %v1276
        %v2346 = vunpack.c.h.b16 %v1276
        %v2347 = vunpack.c.l.b16 %v1277
        %v2348 = vunpack.c.h.b16 %v1277
        %v2349 = vunpack.c.l.b16 %v1278
        %v2350 = vunpack.c.l.b16 %v1279
        %v2351 = vunpack.c.h.b16 %v1279
        %v2352 = vunpack.c.l.b16 %v1280
        %v2353 = vunpack.c.h.b16 %v1280
        %v2354 = vunpack.c.l.b16 %v1281
        %v2355 = vunpack.c.h.b16 %v1281
        %v2356 = vunpack.c.l.b16 %v1282
        %v2357 = vunpack.c.l.b16 %v1283
        %v2358 = vunpack.c.h.b16 %v1283
        %v2359 = vunpack.c.l.b16 %v1284
        %v2360 = vunpack.c.h.b16 %v1284
        %v2361 = vunpack.c.l.b16 %v1285
        %v2362 = vunpack.c.h.b16 %v1285
        %v2363 = vunpack.c.l.b16 %v1286
        %v2364 = vunpack.c.l.b16 %v1287
        %v2365 = vunpack.c.h.b16 %v1287
        %v2366 = vunpack.c.l.b16 %v1288
        %v2367 = vunpack.c.h.b16 %v1288
        %v2368 = vunpack.c.l.b16 %v1289
        %v2369 = vunpack.c.h.b16 %v1289
        %v2370 = vunpack.c.l.b16 %v1290
        %v2371 = vunpack.c.l.b16 %v1291
        %v2372 = vunpack.c.h.b16 %v1291
        %v2373 = vunpack.c.l.b16 %v1292
        %v2374 = vunpack.c.h.b16 %v1292
        %v2375 = vunpack.c.l.b16 %v1293
        %v2376 = vunpack.c.h.b16 %v1293
        %v2377 = vunpack.c.l.b16 %v1294
        %v2378 = vunpack.c.l.b16 %v1295
        %v2379 = vunpack.c.h.b16 %v1295
        %v2380 = vunpack.c.l.b16 %v1296
        %v2381 = vunpack.c.h.b16 %v1296
        %v2382 = vunpack.c.l.b16 %v1297
        %v2383 = vunpack.c.h.b16 %v1297
        %v2384 = vunpack.c.l.b16 %v1298
        %v2385 = vunpack.c.l.b16 %v1299
        %v2386 = vunpack.c.h.b16 %v1299
        %v2387 = vunpack.c.l.b16 %v1300
        %v2388 = vunpack.c.h.b16 %v1300
        %v2389 = vunpack.c.l.b16 %v1301
        %v2390 = vunpack.c.h.b16 %v1301
        %v2391 = vunpack.c.l.b16 %v1302
        %v2392 = vunpack.c.l.b16 %v1303
        %v2393 = vunpack.c.h.b16 %v1303
        %v2394 = vunpack.c.l.b16 %v1304
        %v2395 = vunpack.c.h.b16 %v1304
        %v2396 = vunpack.c.l.b16 %v1305
        %v2397 = vunpack.c.h.b16 %v1305
        %v2398 = vunpack.c.l.b16 %v1306
        %v2399 = vunpack.c.l.b16 %v1307
        %v2400 = vunpack.c.h.b16 %v1307
        %v2401 = vunpack.c.l.b16 %v1308
        %v2402 = vunpack.c.h.b16 %v1308
        %v2403 = vunpack.c.l.b16 %v1309
        %v2404 = vunpack.c.h.b16 %v1309
        %v2405 = vunpack.c.l.b16 %v1310
        %v2406 = vunpack.c.l.b16 %v1311
        %v2407 = vunpack.c.h.b16 %v1311
        %v2408 = vunpack.c.l.b16 %v1312
        %v2409 = vunpack.c.h.b16 %v1312
        %v2410 = vunpack.c.l.b16 %v1313
        %v2411 = vunpack.c.h.b16 %v1313
        %v2412 = vunpack.c.l.b16 %v1314
        %v2413 = vunpack.c.l.b16 %v1315
        %v2414 = vunpack.c.h.b16 %v1315
        %v2415 = vunpack.c.l.b16 %v1316
        %v2416 = vunpack.c.h.b16 %v1316
        %v2417 = vunpack.c.l.b16 %v1317
        %v2418 = vunpack.c.h.b16 %v1317
        %v2419 = vunpack.c.l.b16 %v1318
        %v2420 = vunpack.c.l.b16 %v1319
        %v2421 = vunpack.c.h.b16 %v1319
        %v2422 = vunpack.c.l.b16 %v1320
        %v2423 = vunpack.c.h.b16 %v1320
        %v2424 = vunpack.c.l.b16 %v1321
        %v2425 = vunpack.c.h.b16 %v1321
        %v2426 = vunpack.c.l.b16 %v1322
        %v2427 = vunpack.c.l.b16 %v1323
        %v2428 = vunpack.c.h.b16 %v1323
        %v2429 = vunpack.c.l.b16 %v1324
        %v2430 = vunpack.c.h.b16 %v1324
        %v2431 = vunpack.c.l.b16 %v1325
        %v2432 = vunpack.c.h.b16 %v1325
        %v2433 = vunpack.c.l.b16 %v1326
        %v2434 = vunpack.c.l.b16 %v1327
        %v2435 = vunpack.c.h.b16 %v1327
        %v2436 = vunpack.c.l.b16 %v1328
        %v2437 = vunpack.c.h.b16 %v1328
        %v2438 = vunpack.c.l.b16 %v1329
        %v2439 = vunpack.c.h.b16 %v1329
        %v2440 = vunpack.c.l.b16 %v1330
        %v2441 = vunpack.c.l.b16 %v1331
        %v2442 = vunpack.c.h.b16 %v1331
        %v2443 = vunpack.c.l.b16 %v1332
        %v2444 = vunpack.c.h.b16 %v1332
        %v2445 = vunpack.c.l.b16 %v1333
        %v2446 = vunpack.c.h.b16 %v1333
        %v2447 = vunpack.c.l.b16 %v1334
        %v2448 = vunpack.c.l.b16 %v1335
        %v2449 = vunpack.c.h.b16 %v1335
        %v2450 = vunpack.c.l.b16 %v1336
        %v2451 = vunpack.c.h.b16 %v1336
        %v2452 = vunpack.c.l.b16 %v1337
        %v2453 = vunpack.c.h.b16 %v1337
        %v2454 = vunpack.c.l.b16 %v1338
        %v2455 = vunpack.c.l.b16 %v1339
        %v2456 = vunpack.c.h.b16 %v1339
        %v2457 = vunpack.c.l.b16 %v1340
        %v2458 = vunpack.c.h.b16 %v1340
        %v2459 = vunpack.c.l.b16 %v1341
        %v2460 = vunpack.c.h.b16 %v1341
        %v2461 = vunpack.c.l.b16 %v1342
        %v2462 = vunpack.c.l.b16 %v1343
        %v2463 = vunpack.c.h.b16 %v1343
        %v2464 = vunpack.c.l.b16 %v1344
        %v2465 = vunpack.c.h.b16 %v1344
        %v2466 = vunpack.c.l.b16 %v1345
        %v2467 = vunpack.c.h.b16 %v1345
        %v2468 = vunpack.c.l.b16 %v1346
        %v2469 = vunpack.c.l.b16 %v1347
        %v2470 = vunpack.c.h.b16 %v1347
        %v2471 = vunpack.c.l.b16 %v1348
        %v2472 = vunpack.c.h.b16 %v1348
        %v2473 = vunpack.c.l.b16 %v1349
        %v2474 = vunpack.c.h.b16 %v1349
        %v2475 = vunpack.c.l.b16 %v1350
        %v2476 = vunpack.c.l.b16 %v1351
        %v2477 = vunpack.c.h.b16 %v1351
        %v2478 = vunpack.c.l.b16 %v1352
        %v2479 = vunpack.c.h.b16 %v1352
        %v2480 = vunpack.c.l.b16 %v1353
        %v2481 = vunpack.c.h.b16 %v1353
        %v2482 = vunpack.c.l.b16 %v1354
        %v2483 = vunpack.c.l.b16 %v1355
        %v2484 = vunpack.c.h.b16 %v1355
        %v2485 = vunpack.c.l.b16 %v1356
        %v2486 = vunpack.c.h.b16 %v1356
        %v2487 = vunpack.c.l.b16 %v1357
        %v2488 = vunpack.c.h.b16 %v1357
        %v2489 = vunpack.c.l.b16 %v1358
        %v2490 = vunpack.c.l.b16 %v1359
        %v2491 = vunpack.c.h.b16 %v1359
        %v2492 = vunpack.c.l.b16 %v1360
        %v2493 = vunpack.c.h.b16 %v1360
        %v2494 = vunpack.c.l.b16 %v1361
        %v2495 = vunpack.c.h.b16 %v1361
        %v2496 = vunpack.c.l.b16 %v1362
        %v2497 = vunpack.c.l.b16 %v1363
        %v2498 = vunpack.c.h.b16 %v1363
        %v2499 = vunpack.c.l.b16 %v1364
        %v2500 = vunpack.c.h.b16 %v1364
        %v2501 = vunpack.c.l.b16 %v1365
        %v2502 = vunpack.c.h.b16 %v1365
        %v2503 = vunpack.c.l.b16 %v1366
        %v2504 = vunpack.c.l.b16 %v1367
        %v2505 = vunpack.c.h.b16 %v1367
        %v2506 = vunpack.c.l.b16 %v1368
        %v2507 = vunpack.c.h.b16 %v1368
        %v2508 = vunpack.c.l.b16 %v1369
        %v2509 = vunpack.c.h.b16 %v1369
        %v2510 = vunpack.c.l.b16 %v1370
        %v2511 = vunpack.c.l.b16 %v1371
        %v2512 = vunpack.c.h.b16 %v1371
        %v2513 = vunpack.c.l.b16 %v1372
        %v2514 = vunpack.c.h.b16 %v1372
        %v2515 = vunpack.c.l.b16 %v1373
        %v2516 = vunpack.c.h.b16 %v1373
        %v2517 = vunpack.c.l.b16 %v1374
        %v2518 = vunpack.c.l.b16 %v1375
        %v2519 = vunpack.c.h.b16 %v1375
        %v2520 = vunpack.c.l.b16 %v1376
        %v2521 = vunpack.c.h.b16 %v1376
        %v2522 = vunpack.c.l.b16 %v1377
        %v2523 = vunpack.c.h.b16 %v1377
        %v2524 = vunpack.c.l.b16 %v1378
        %v2525 = vunpack.c.l.b16 %v1379
        %v2526 = vunpack.c.h.b16 %v1379
        %v2527 = vunpack.c.l.b16 %v1380
        %v2528 = vunpack.c.h.b16 %v1380
        %v2529 = vunpack.c.l.b16 %v1381
        %v2530 = vunpack.c.h.b16 %v1381
        %v2531 = vunpack.c.l.b16 %v1382
        %v2532 = vunpack.c.l.b16 %v1383
        %v2533 = vunpack.c.h.b16 %v1383
        %v2534 = vunpack.c.l.b16 %v1384
        %v2535 = vunpack.c.h.b16 %v1384
        %v2536 = vunpack.c.l.b16 %v1385
        %v2537 = vunpack.c.h.b16 %v1385
        %v2538 = vunpack.c.l.b16 %v1386
        %v2539 = vunpack.c.l.b16 %v1387
        %v2540 = vunpack.c.h.b16 %v1387
        %v2541 = vunpack.c.l.b16 %v1388
        %v2542 = vunpack.c.h.b16 %v1388
        %v2543 = vunpack.c.l.b16 %v1389
        %v2544 = vunpack.c.h.b16 %v1389
        %v2545 = vunpack.c.l.b16 %v1390
        %v2546 = vunpack.c.l.b16 %v1391
        %v2547 = vunpack.c.h.b16 %v1391
        %v2548 = vunpack.c.l.b16 %v1392
        %v2549 = vunpack.c.h.b16 %v1392
        %v2550 = vunpack.c.l.b16 %v1393
        %v2551 = vunpack.c.h.b16 %v1393
        %v2552 = vunpack.c.l.b16 %v1394
        %v2553 = vunpack.c.l.b16 %v1395
        %v2554 = vunpack.c.h.b16 %v1395
        %v2555 = vunpack.c.l.b16 %v1396
        %v2556 = vunpack.c.h.b16 %v1396
        %v2557 = vunpack.c.l.b16 %v1397
        %v2558 = vunpack.c.h.b16 %v1397
        %v2559 = vunpack.c.l.b16 %v1398
        %v2560 = vunpack.c.l.b16 %v1399
        %v2561 = vunpack.c.h.b16 %v1399
        %v2562 = vunpack.c.l.b16 %v1400
        %v2563 = vunpack.c.h.b16 %v1400
        %v2564 = vunpack.c.l.b16 %v1401
        %v2565 = vunpack.c.h.b16 %v1401
        %v2566 = vunpack.c.l.b16 %v1402
        %v2567 = vunpack.c.l.b16 %v1403
        %v2568 = vunpack.c.h.b16 %v1403
        %v2569 = vunpack.c.l.b16 %v1404
        %v2570 = vunpack.c.h.b16 %v1404
        %v2571 = vunpack.c.l.b16 %v1405
        %v2572 = vunpack.c.h.b16 %v1405
        %v2573 = vunpack.c.l.b16 %v1406
        %v2574 = vunpack.c.l.b16 %v1407
        %v2575 = vunpack.c.h.b16 %v1407
        %v2576 = vunpack.c.l.b16 %v1408
        %v2577 = vunpack.c.h.b16 %v1408
        %v2578 = vunpack.c.l.b16 %v1409
        %v2579 = vunpack.c.h.b16 %v1409
        %v2580 = vunpack.c.l.b16 %v1410
        %v2581 = vunpack.c.l.b16 %v1411
        %v2582 = vunpack.c.h.b16 %v1411
        %v2583 = vunpack.c.l.b16 %v1412
        %v2584 = vunpack.c.h.b16 %v1412
        %v2585 = vunpack.c.l.b16 %v1413
        %v2586 = vunpack.c.h.b16 %v1413
        %v2587 = vunpack.c.l.b16 %v1414
        %v2588 = vunpack.c.l.b16 %v1415
        %v2589 = vunpack.c.h.b16 %v1415
        %v2590 = vunpack.c.l.b16 %v1416
        %v2591 = vunpack.c.h.b16 %v1416
        %v2592 = vunpack.c.l.b16 %v1417
        %v2593 = vunpack.c.h.b16 %v1417
        %v2594 = vunpack.c.l.b16 %v1418
        %v2595 = vunpack.c.l.b16 %v1419
        %v2596 = vunpack.c.h.b16 %v1419
        %v2597 = vunpack.c.l.b16 %v1420
        %v2598 = vunpack.c.h.b16 %v1420
        %v2599 = vunpack.c.l.b16 %v1421
        %v2600 = vunpack.c.h.b16 %v1421
        %v2601 = vunpack.c.l.b16 %v1422
        %v2602 = vunpack.c.l.b16 %v1423
        %v2603 = vunpack.c.h.b16 %v1423
        %v2604 = vunpack.c.l.b16 %v1424
        %v2605 = vunpack.c.h.b16 %v1424
        %v2606 = vunpack.c.l.b16 %v1425
        %v2607 = vunpack.c.h.b16 %v1425
        %v2608 = vunpack.c.l.b16 %v1426
        %v2609 = vunpack.c.l.b16 %v1427
        %v2610 = vunpack.c.h.b16 %v1427
        %v2611 = vunpack.c.l.b16 %v1428
        %v2612 = vunpack.c.h.b16 %v1428
        %v2613 = vunpack.c.l.b16 %v1429
        %v2614 = vunpack.c.h.b16 %v1429
        %v2615 = vunpack.c.l.b16 %v1430
        %v2616 = vunpack.c.l.b16 %v1431
        %v2617 = vunpack.c.h.b16 %v1431
        %v2618 = vunpack.c.l.b16 %v1432
        %v2619 = vunpack.c.h.b16 %v1432
        %v2620 = vunpack.c.l.b16 %v1433
        %v2621 = vunpack.c.h.b16 %v1433
        %v2622 = vunpack.c.l.b16 %v1434
        %v2623 = vunpack.c.l.b16 %v1435
        %v2624 = vunpack.c.h.b16 %v1435
        %v2625 = vunpack.c.l.b16 %v1436
        %v2626 = vunpack.c.h.b16 %v1436
        %v2627 = vunpack.c.l.b16 %v1437
        %v2628 = vunpack.c.h.b16 %v1437
        %v2629 = vunpack.c.l.b16 %v1438
        %v2630 = vunpack.c.l.b16 %v1439
        %v2631 = vunpack.c.h.b16 %v1439
        %v2632 = vunpack.c.l.b16 %v1440
        %v2633 = vunpack.c.h.b16 %v1440
        %v2634 = vunpack.c.l.b16 %v1441
        %v2635 = vunpack.c.h.b16 %v1441
        %v2636 = vunpack.c.l.b16 %v1442
        %v2637 = vunpack.c.l.b16 %v1443
        %v2638 = vunpack.c.h.b16 %v1443
        %v2639 = vunpack.c.l.b16 %v1444
        %v2640 = vunpack.c.h.b16 %v1444
        %v2641 = vunpack.c.l.b16 %v1445
        %v2642 = vunpack.c.h.b16 %v1445
        %v2643 = vunpack.c.l.b16 %v1446
        %v2644 = vunpack.c.l.b16 %v1447
        %v2645 = vunpack.c.h.b16 %v1447
        %v2646 = vunpack.c.l.b16 %v1448
        %v2647 = vunpack.c.h.b16 %v1448
        %v2648 = vunpack.c.l.b16 %v1449
        %v2649 = vunpack.c.h.b16 %v1449
        %v2650 = vunpack.c.l.b16 %v1450
        %v2651 = vunpack.c.l.b16 %v1451
        %v2652 = vunpack.c.h.b16 %v1451
        %v2653 = vunpack.c.l.b16 %v1452
        %v2654 = vunpack.c.h.b16 %v1452
        %v2655 = vunpack.c.l.b16 %v1453
        %v2656 = vunpack.c.h.b16 %v1453
        %v2657 = vunpack.c.l.b16 %v1454
        %v2658 = vunpack.c.l.b16 %v1455
        %v2659 = vunpack.c.h.b16 %v1455
        %v2660 = vunpack.c.l.b16 %v1456
        %v2661 = vunpack.c.h.b16 %v1456
        %v2662 = vunpack.c.l.b16 %v1457
        %v2663 = vunpack.c.h.b16 %v1457
        %v2664 = vunpack.c.l.b16 %v1458
        %v2665 = vunpack.c.l.b16 %v1459
        %v2666 = vunpack.c.h.b16 %v1459
        %v2667 = vunpack.c.l.b16 %v1460
        %v2668 = vunpack.c.h.b16 %v1460
        %v2669 = vunpack.c.l.b16 %v1461
        %v2670 = vunpack.c.h.b16 %v1461
        %v2671 = vunpack.c.l.b16 %v1462
        %v2672 = vunpack.c.l.b16 %v1463
        %v2673 = vunpack.c.h.b16 %v1463
        %v2674 = vunpack.c.l.b16 %v1464
        %v2675 = vunpack.c.h.b16 %v1464
        %v2676 = vunpack.c.l.b16 %v1465
        %v2677 = vunpack.c.h.b16 %v1465
        %v2678 = vunpack.c.l.b16 %v1466
        %v2679 = vunpack.c.l.b16 %v1467
        %v2680 = vunpack.c.h.b16 %v1467
        %v2681 = vunpack.c.l.b16 %v1468
        %v2682 = vunpack.c.h.b16 %v1468
        %v2683 = vunpack.c.l.b16 %v1469
        %v2684 = vunpack.c.h.b16 %v1469
        %v2685 = vunpack.c.l.b16 %v1470
        %v2686 = vunpack.c.l.b16 %v1471
        %v2687 = vunpack.c.h.b16 %v1471
        %v2688 = vunpack.c.l.b16 %v1472
        %v2689 = vunpack.c.h.b16 %v1472
        %v2690 = vunpack.c.l.b16 %v1473
        %v2691 = vunpack.c.h.b16 %v1473
        %v2692 = vunpack.c.l.b16 %v1474
        %v2693 = vunpack.c.l.b16 %v1475
        %v2694 = vunpack.c.h.b16 %v1475
        %v2695 = vunpack.c.l.b16 %v1476
        %v2696 = vunpack.c.h.b16 %v1476
        %v2697 = vunpack.c.l.b16 %v1477
        %v2698 = vunpack.c.h.b16 %v1477
        %v2699 = vunpack.c.l.b16 %v1478
        %v2700 = vunpack.c.l.b16 %v1479
        %v2701 = vunpack.c.h.b16 %v1479
        %v2702 = vunpack.c.l.b16 %v1480
        %v2703 = vunpack.c.h.b16 %v1480
        %v2704 = vunpack.c.l.b16 %v1481
        %v2705 = vunpack.c.h.b16 %v1481
        %v2706 = vunpack.c.l.b16 %v1482
        %v2707 = vunpack.c.l.b16 %v1483
        %v2708 = vunpack.c.h.b16 %v1483
        %v2709 = vunpack.c.l.b16 %v1484
        %v2710 = vunpack.c.h.b16 %v1484
        %v2711 = vunpack.c.l.b16 %v1485
        %v2712 = vunpack.c.h.b16 %v1485
        %v2713 = vunpack.c.l.b16 %v1486
        %v2714 = vunpack.c.l.b16 %v1487
        %v2715 = vunpack.c.h.b16 %v1487
        %v2716 = vunpack.c.l.b16 %v1488
        %v2717 = vunpack.c.h.b16 %v1488
        %v2718 = vunpack.c.l.b16 %v1489
        %v2719 = vunpack.c.h.b16 %v1489
        %v2720 = vunpack.c.l.b16 %v1490
        %v2721 = vunpack.c.l.b16 %v1491
        %v2722 = vunpack.c.h.b16 %v1491
        %v2723 = vunpack.c.l.b16 %v1492
        %v2724 = vunpack.c.h.b16 %v1492
        %v2725 = vunpack.c.l.b16 %v1493
        %v2726 = vunpack.c.h.b16 %v1493
        %v2727 = vunpack.c.l.b16 %v1494
        %v2728 = vunpack.c.l.b16 %v1495
        %v2729 = vunpack.c.h.b16 %v1495
        %v2730 = vunpack.c.l.b16 %v1496
        %v2731 = vunpack.c.h.b16 %v1496
        %v2732 = vunpack.c.l.b16 %v1497
        %v2733 = vunpack.c.h.b16 %v1497
        %v2734 = vunpack.c.l.b16 %v1498
        %v2735 = vunpack.c.l.b16 %v1499
        %v2736 = vunpack.c.h.b16 %v1499
        %v2737 = vunpack.c.l.b16 %v1500
        %v2738 = vunpack.c.h.b16 %v1500
        %v2739 = vunpack.c.l.b16 %v1501
        %v2740 = vunpack.c.h.b16 %v1501
        %v2741 = vunpack.c.l.b16 %v1502
        %v2742 = vunpack.c.l.b16 %v1503
        %v2743 = vunpack.c.h.b16 %v1503
        %v2744 = vunpack.c.l.b16 %v1504
        %v2745 = vunpack.c.h.b16 %v1504
        %v2746 = vunpack.c.l.b16 %v1505
        %v2747 = vunpack.c.h.b16 %v1505
        %v2748 = vunpack.c.l.b16 %v1506
        %v2749 = vunpack.c.l.b16 %v1507
        %v2750 = vunpack.c.h.b16 %v1507
        %v2751 = vunpack.c.l.b16 %v1508
        %v2752 = vunpack.c.h.b16 %v1508
        %v2753 = vunpack.c.l.b16 %v1509
        %v2754 = vunpack.c.h.b16 %v1509
        %v2755 = vunpack.c.l.b16 %v1510
        %v2756 = vunpack.c.l.b16 %v1511
        %v2757 = vunpack.c.h.b16 %v1511
        %v2758 = vunpack.c.l.b16 %v1512
        %v2759 = vunpack.c.h.b16 %v1512
        %v2760 = vunpack.c.l.b16 %v1513
        %v2761 = vunpack.c.h.b16 %v1513
        %v2762 = vunpack.c.l.b16 %v1514
        %v2763 = vunpack.c.l.b16 %v1515
        %v2764 = vunpack.c.h.b16 %v1515
        %v2765 = vunpack.c.l.b16 %v1516
        %v2766 = vunpack.c.h.b16 %v1516
        %v2767 = vunpack.c.l.b16 %v1517
        %v2768 = vunpack.c.h.b16 %v1517
        %v2769 = vunpack.c.l.b16 %v1518
        %v2770 = vunpack.c.l.b16 %v1519
        %v2771 = vunpack.c.h.b16 %v1519
        %v2772 = vunpack.c.l.b16 %v1520
        %v2773 = vunpack.c.h.b16 %v1520
        %v2774 = vunpack.c.l.b16 %v1521
        %v2775 = vunpack.c.h.b16 %v1521
        %v2776 = vunpack.c.l.b16 %v1522
        %v2777 = vunpack.c.l.b16 %v1523
        %v2778 = vunpack.c.h.b16 %v1523
        %v2779 = vunpack.c.l.b16 %v1524
        %v2780 = vunpack.c.h.b16 %v1524
        %v2781 = vunpack.c.l.b16 %v1525
        %v2782 = vunpack.c.h.b16 %v1525
        %v2783 = vunpack.c.l.b16 %v1526
        %v2784 = vunpack.c.l.b16 %v1527
        %v2785 = vunpack.c.h.b16 %v1527
        %v2786 = vunpack.c.l.b16 %v1528
        %v2787 = vunpack.c.h.b16 %v1528
        %v2788 = vunpack.c.l.b16 %v1529
        %v2789 = vunpack.c.h.b16 %v1529
        %v2790 = vunpack.c.l.b16 %v1530
        %v2791 = vunpack.c.l.b16 %v1531
        %v2792 = vunpack.c.h.b16 %v1531
        %v2793 = vunpack.c.l.b16 %v1532
        %v2794 = vunpack.c.h.b16 %v1532
        %v2795 = vunpack.c.l.b16 %v1533
        %v2796 = vunpack.c.h.b16 %v1533
        %v2797 = vunpack.c.l.b16 %v1534
        %v2798 = vunpack.c.l.b16 %v1535
        %v2799 = vunpack.c.h.b16 %v1535
        %v2800 = vunpack.c.l.b16 %v1536
        %v2801 = vunpack.c.h.b16 %v1536
        %v2802 = vunpack.c.l.b16 %v1537
        %v2803 = vunpack.c.h.b16 %v1537
        %v2804 = vunpack.c.l.b16 %v1538
        %v2805 = vunpack.c.l.b16 %v1539
        %v2806 = vunpack.c.h.b16 %v1539
        %v2807 = vunpack.c.l.b16 %v1540
        %v2808 = vunpack.c.h.b16 %v1540
        %v2809 = vunpack.c.l.b16 %v1541
        %v2810 = vunpack.c.h.b16 %v1541
        %v2811 = vunpack.c.l.b16 %v1542
        %v2812 = vpack.c.b16 %v2035, %v2028
        %v2813 = vpack.c.b16 %v2036, %v2029
        %v2814 = vpack.c.b16 %v2037, %v2030
        %v2815 = vpack.c.b16 %v2038, %v2031
        %v2816 = vpack.c.b16 %v2039, %v2032
        %v2817 = vpack.c.b16 %v2040, %v2033
        %v2818 = vpack.c.b16 %v2041, %v2034
        %v2819 = vpack.c.b16 %v2049, %v2042
        %v2820 = vpack.c.b16 %v2050, %v2043
        %v2821 = vpack.c.b16 %v2051, %v2044
        %v2822 = vpack.c.b16 %v2052, %v2045
        %v2823 = vpack.c.b16 %v2053, %v2046
        %v2824 = vpack.c.b16 %v2054, %v2047
        %v2825 = vpack.c.b16 %v2055, %v2048
        %v2826 = vpack.c.b16 %v2063, %v2056
        %v2827 = vpack.c.b16 %v2064, %v2057
        %v2828 = vpack.c.b16 %v2065, %v2058
        %v2829 = vpack.c.b16 %v2066, %v2059
        %v2830 = vpack.c.b16 %v2067, %v2060
        %v2831 = vpack.c.b16 %v2068, %v2061
        %v2832 = vpack.c.b16 %v2069, %v2062
        %v2833 = vpack.c.b16 %v2077, %v2070
        %v2834 = vpack.c.b16 %v2078, %v2071
        %v2835 = vpack.c.b16 %v2079, %v2072
        %v2836 = vpack.c.b16 %v2080, %v2073
        %v2837 = vpack.c.b16 %v2081, %v2074
        %v2838 = vpack.c.b16 %v2082, %v2075
        %v2839 = vpack.c.b16 %v2083, %v2076
        %v2840 = vpack.c.b16 %v2091, %v2084
        %v2841 = vpack.c.b16 %v2092, %v2085
        %v2842 = vpack.c.b16 %v2093, %v2086
        %v2843 = vpack.c.b16 %v2094, %v2087
        %v2844 = vpack.c.b16 %v2095, %v2088
        %v2845 = vpack.c.b16 %v2096, %v2089
        %v2846 = vpack.c.b16 %v2097, %v2090
        %v2847 = vpack.c.b16 %v2105, %v2098
        %v2848 = vpack.c.b16 %v2106, %v2099
        %v2849 = vpack.c.b16 %v2107, %v2100
        %v2850 = vpack.c.b16 %v2108, %v2101
        %v2851 = vpack.c.b16 %v2109, %v2102
        %v2852 = vpack.c.b16 %v2110, %v2103
        %v2853 = vpack.c.b16 %v2111, %v2104
        %v2854 = vpack.c.b16 %v2119, %v2112
        %v2855 = vpack.c.b16 %v2120, %v2113
        %v2856 = vpack.c.b16 %v2121, %v2114
        %v2857 = vpack.c.b16 %v2122, %v2115
        %v2858 = vpack.c.b16 %v2123, %v2116
        %v2859 = vpack.c.b16 %v2124, %v2117
        %v2860 = vpack.c.b16 %v2125, %v2118
        %v2861 = vpack.c.b16 %v2133, %v2126
        %v2862 = vpack.c.b16 %v2134, %v2127
        %v2863 = vpack.c.b16 %v2135, %v2128
        %v2864 = vpack.c.b16 %v2136, %v2129
        %v2865 = vpack.c.b16 %v2137, %v2130
        %v2866 = vpack.c.b16 %v2138, %v2131
        %v2867 = vpack.c.b16 %v2139, %v2132
        %v2868 = vpack.c.b16 %v2147, %v2140
        %v2869 = vpack.c.b16 %v2148, %v2141
        %v2870 = vpack.c.b16 %v2149, %v2142
        %v2871 = vpack.c.b16 %v2150, %v2143
        %v2872 = vpack.c.b16 %v2151, %v2144
        %v2873 = vpack.c.b16 %v2152, %v2145
        %v2874 = vpack.c.b16 %v2153, %v2146
        %v2875 = vpack.c.b16 %v2161, %v2154
        %v2876 = vpack.c.b16 %v2162, %v2155
        %v2877 = vpack.c.b16 %v2163, %v2156
        %v2878 = vpack.c.b16 %v2164, %v2157
        %v2879 = vpack.c.b16 %v2165, %v2158
        %v2880 = vpack.c.b16 %v2166, %v2159
        %v2881 = vpack.c.b16 %v2167, %v2160
        %v2882 = vpack.c.b16 %v2175, %v2168
        %v2883 = vpack.c.b16 %v2176, %v2169
        %v2884 = vpack.c.b16 %v2177, %v2170
        %v2885 = vpack.c.b16 %v2178, %v2171
        %v2886 = vpack.c.b16 %v2179, %v2172
        %v2887 = vpack.c.b16 %v2180, %v2173
        %v2888 = vpack.c.b16 %v2181, %v2174
        %v2889 = vpack.c.b16 %v2189, %v2182
        %v2890 = vpack.c.b16 %v2190, %v2183
        %v2891 = vpack.c.b16 %v2191, %v2184
        %v2892 = vpack.c.b16 %v2192, %v2185
        %v2893 = vpack.c.b16 %v2193, %v2186
        %v2894 = vpack.c.b16 %v2194, %v2187
        %v2895 = vpack.c.b16 %v2195, %v2188
        %v2896 = vpack.c.b16 %v2203, %v2196
        %v2897 = vpack.c.b16 %v2204, %v2197
        %v2898 = vpack.c.b16 %v2205, %v2198
        %v2899 = vpack.c.b16 %v2206, %v2199
        %v2900 = vpack.c.b16 %v2207, %v2200
        %v2901 = vpack.c.b16 %v2208, %v2201
        %v2902 = vpack.c.b16 %v2209, %v2202
        %v2903 = vpack.c.b16 %v2217, %v2210
        %v2904 = vpack.c.b16 %v2218, %v2211
        %v2905 = vpack.c.b16 %v2219, %v2212
        %v2906 = vpack.c.b16 %v2220, %v2213
        %v2907 = vpack.c.b16 %v2221, %v2214
        %v2908 = vpack.c.b16 %v2222, %v2215
        %v2909 = vpack.c.b16 %v2223, %v2216
        %v2910 = vpack.c.b16 %v2231, %v2224
        %v2911 = vpack.c.b16 %v2232, %v2225
        %v2912 = vpack.c.b16 %v2233, %v2226
        %v2913 = vpack.c.b16 %v2234, %v2227
        %v2914 = vpack.c.b16 %v2235, %v2228
        %v2915 = vpack.c.b16 %v2236, %v2229
        %v2916 = vpack.c.b16 %v2237, %v2230
        %v2917 = vpack.c.b16 %v2245, %v2238
        %v2918 = vpack.c.b16 %v2246, %v2239
        %v2919 = vpack.c.b16 %v2247, %v2240
        %v2920 = vpack.c.b16 %v2248, %v2241
        %v2921 = vpack.c.b16 %v2249, %v2242
        %v2922 = vpack.c.b16 %v2250, %v2243
        %v2923 = vpack.c.b16 %v2251, %v2244
        %v2924 = vpack.c.b16 %v2259, %v2252
        %v2925 = vpack.c.b16 %v2260, %v2253
        %v2926 = vpack.c.b16 %v2261, %v2254
        %v2927 = vpack.c.b16 %v2262, %v2255
        %v2928 = vpack.c.b16 %v2263, %v2256
        %v2929 = vpack.c.b16 %v2264, %v2257
        %v2930 = vpack.c.b16 %v2265, %v2258
        %v2931 = vpack.c.b16 %v2273, %v2266
        %v2932 = vpack.c.b16 %v2274, %v2267
        %v2933 = vpack.c.b16 %v2275, %v2268
        %v2934 = vpack.c.b16 %v2276, %v2269
        %v2935 = vpack.c.b16 %v2277, %v2270
        %v2936 = vpack.c.b16 %v2278, %v2271
        %v2937 = vpack.c.b16 %v2279, %v2272
        %v2938 = vpack.c.b16 %v2287, %v2280
        %v2939 = vpack.c.b16 %v2288, %v2281
        %v2940 = vpack.c.b16 %v2289, %v2282
        %v2941 = vpack.c.b16 %v2290, %v2283
        %v2942 = vpack.c.b16 %v2291, %v2284
        %v2943 = vpack.c.b16 %v2292, %v2285
        %v2944 = vpack.c.b16 %v2293, %v2286
        %v2945 = vpack.c.b16 %v2301, %v2294
        %v2946 = vpack.c.b16 %v2302, %v2295
        %v2947 = vpack.c.b16 %v2303, %v2296
        %v2948 = vpack.c.b16 %v2304, %v2297
        %v2949 = vpack.c.b16 %v2305, %v2298
        %v2950 = vpack.c.b16 %v2306, %v2299
        %v2951 = vpack.c.b16 %v2307, %v2300
        %v2952 = vpack.c.b16 %v2315, %v2308
        %v2953 = vpack.c.b16 %v2316, %v2309
        %v2954 = vpack.c.b16 %v2317, %v2310
        %v2955 = vpack.c.b16 %v2318, %v2311
        %v2956 = vpack.c.b16 %v2319, %v2312
        %v2957 = vpack.c.b16 %v2320, %v2313
        %v2958 = vpack.c.b16 %v2321, %v2314
        %v2959 = vpack.c.b16 %v2329, %v2322
        %v2960 = vpack.c.b16 %v2330, %v2323
        %v2961 = vpack.c.b16 %v2331, %v2324
        %v2962 = vpack.c.b16 %v2332, %v2325
        %v2963 = vpack.c.b16 %v2333, %v2326
        %v2964 = vpack.c.b16 %v2334, %v2327
        %v2965 = vpack.c.b16 %v2335, %v2328
        %v2966 = vpack.c.b16 %v2343, %v2336
        %v2967 = vpack.c.b16 %v2344, %v2337
        %v2968 = vpack.c.b16 %v2345, %v2338
        %v2969 = vpack.c.b16 %v2346, %v2339
        %v2970 = vpack.c.b16 %v2347, %v2340
        %v2971 = vpack.c.b16 %v2348, %v2341
        %v2972 = vpack.c.b16 %v2349, %v2342
        %v2973 = vpack.c.b16 %v2357, %v2350
        %v2974 = vpack.c.b16 %v2358, %v2351
        %v2975 = vpack.c.b16 %v2359, %v2352
        %v2976 = vpack.c.b16 %v2360, %v2353
        %v2977 = vpack.c.b16 %v2361, %v2354
        %v2978 = vpack.c.b16 %v2362, %v2355
        %v2979 = vpack.c.b16 %v2363, %v2356
        %v2980 = vpack.c.b16 %v2371, %v2364
        %v2981 = vpack.c.b16 %v2372, %v2365
        %v2982 = vpack.c.b16 %v2373, %v2366
        %v2983 = vpack.c.b16 %v2374, %v2367
        %v2984 = vpack.c.b16 %v2375, %v2368
        %v2985 = vpack.c.b16 %v2376, %v2369
        %v2986 = vpack.c.b16 %v2377, %v2370
        %v2987 = vpack.c.b16 %v2385, %v2378
        %v2988 = vpack.c.b16 %v2386, %v2379
        %v2989 = vpack.c.b16 %v2387, %v2380
        %v2990 = vpack.c.b16 %v2388, %v2381
        %v2991 = vpack.c.b16 %v2389, %v2382
        %v2992 = vpack.c.b16 %v2390, %v2383
        %v2993 = vpack.c.b16 %v2391, %v2384
        %v2994 = vpack.c.b16 %v2399, %v2392
        %v2995 = vpack.c.b16 %v2400, %v2393
        %v2996 = vpack.c.b16 %v2401, %v2394
        %v2997 = vpack.c.b16 %v2402, %v2395
        %v2998 = vpack.c.b16 %v2403, %v2396
        %v2999 = vpack.c.b16 %v2404, %v2397
        %v3000 = vpack.c.b16 %v2405, %v2398
        %v3001 = vpack.c.b16 %v2413, %v2406
        %v3002 = vpack.c.b16 %v2414, %v2407
        %v3003 = vpack.c.b16 %v2415, %v2408
        %v3004 = vpack.c.b16 %v2416, %v2409
        %v3005 = vpack.c.b16 %v2417, %v2410
        %v3006 = vpack.c.b16 %v2418, %v2411
        %v3007 = vpack.c.b16 %v2419, %v2412
        %v3008 = vpack.c.b16 %v2427, %v2420
        %v3009 = vpack.c.b16 %v2428, %v2421
        %v3010 = vpack.c.b16 %v2429, %v2422
        %v3011 = vpack.c.b16 %v2430, %v2423
        %v3012 = vpack.c.b16 %v2431, %v2424
        %v3013 = vpack.c.b16 %v2432, %v2425
        %v3014 = vpack.c.b16 %v2433, %v2426
        %v3015 = vpack.c.b16 %v2441, %v2434
        %v3016 = vpack.c.b16 %v2442, %v2435
        %v3017 = vpack.c.b16 %v2443, %v2436
        %v3018 = vpack.c.b16 %v2444, %v2437
        %v3019 = vpack.c.b16 %v2445, %v2438
        %v3020 = vpack.c.b16 %v2446, %v2439
        %v3021 = vpack.c.b16 %v2447, %v2440
        %v3022 = vpack.c.b16 %v2455, %v2448
        %v3023 = vpack.c.b16 %v2456, %v2449
        %v3024 = vpack.c.b16 %v2457, %v2450
        %v3025 = vpack.c.b16 %v2458, %v2451
        %v3026 = vpack.c.b16 %v2459, %v2452
        %v3027 = vpack.c.b16 %v2460, %v2453
        %v3028 = vpack.c.b16 %v2461, %v2454
        %v3029 = vpack.c.b16 %v2469, %v2462
        %v3030 = vpack.c.b16 %v2470, %v2463
        %v3031 = vpack.c.b16 %v2471, %v2464
        %v3032 = vpack.c.b16 %v2472, %v2465
        %v3033 = vpack.c.b16 %v2473, %v2466
        %v3034 = vpack.c.b16 %v2474, %v2467
        %v3035 = vpack.c.b16 %v2475, %v2468
        %v3036 = vpack.c.b16 %v2483, %v2476
        %v3037 = vpack.c.b16 %v2484, %v2477
        %v3038 = vpack.c.b16 %v2485, %v2478
        %v3039 = vpack.c.b16 %v2486, %v2479
        %v3040 = vpack.c.b16 %v2487, %v2480
        %v3041 = vpack.c.b16 %v2488, %v2481
        %v3042 = vpack.c.b16 %v2489, %v2482
        %v3043 = vpack.c.b16 %v2497, %v2490
        %v3044 = vpack.c.b16 %v2498, %v2491
        %v3045 = vpack.c.b16 %v2499, %v2492
        %v3046 = vpack.c.b16 %v2500, %v2493
        %v3047 = vpack.c.b16 %v2501, %v2494
        %v3048 = vpack.c.b16 %v2502, %v2495
        %v3049 = vpack.c.b16 %v2503, %v2496
        %v3050 = vpack.c.b16 %v2511, %v2504
        %v3051 = vpack.c.b16 %v2512, %v2505
        %v3052 = vpack.c.b16 %v2513, %v2506
        %v3053 = vpack.c.b16 %v2514, %v2507
        %v3054 = vpack.c.b16 %v2515, %v2508
        %v3055 = vpack.c.b16 %v2516, %v2509
        %v3056 = vpack.c.b16 %v2517, %v2510
        %v3057 = vpack.c.b16 %v2525, %v2518
        %v3058 = vpack.c.b16 %v2526, %v2519
        %v3059 = vpack.c.b16 %v2527, %v2520
        %v3060 = vpack.c.b16 %v2528, %v2521
        %v3061 = vpack.c.b16 %v2529, %v2522
        %v3062 = vpack.c.b16 %v2530, %v2523
        %v3063 = vpack.c.b16 %v2531, %v2524
        %v3064 = vpack.c.b16 %v2539, %v2532
        %v3065 = vpack.c.b16 %v2540, %v2533
        %v3066 = vpack.c.b16 %v2541, %v2534
        %v3067 = vpack.c.b16 %v2542, %v2535
        %v3068 = vpack.c.b16 %v2543, %v2536
        %v3069 = vpack.c.b16 %v2544, %v2537
        %v3070 = vpack.c.b16 %v2545, %v2538
        %v3071 = vpack.c.b16 %v2553, %v2546
        %v3072 = vpack.c.b16 %v2554, %v2547
        %v3073 = vpack.c.b16 %v2555, %v2548
        %v3074 = vpack.c.b16 %v2556, %v2549
        %v3075 = vpack.c.b16 %v2557, %v2550
        %v3076 = vpack.c.b16 %v2558, %v2551
        %v3077 = vpack.c.b16 %v2559, %v2552
        %v3078 = vpack.c.b16 %v2567, %v2560
        %v3079 = vpack.c.b16 %v2568, %v2561
        %v3080 = vpack.c.b16 %v2569, %v2562
        %v3081 = vpack.c.b16 %v2570, %v2563
        %v3082 = vpack.c.b16 %v2571, %v2564
        %v3083 = vpack.c.b16 %v2572, %v2565
        %v3084 = vpack.c.b16 %v2573, %v2566
        %v3085 = vpack.c.b16 %v2581, %v2574
        %v3086 = vpack.c.b16 %v2582, %v2575
        %v3087 = vpack.c.b16 %v2583, %v2576
        %v3088 = vpack.c.b16 %v2584, %v2577
        %v3089 = vpack.c.b16 %v2585, %v2578
        %v3090 = vpack.c.b16 %v2586, %v2579
        %v3091 = vpack.c.b16 %v2587, %v2580
        %v3092 = vpack.c.b16 %v2595, %v2588
        %v3093 = vpack.c.b16 %v2596, %v2589
        %v3094 = vpack.c.b16 %v2597, %v2590
        %v3095 = vpack.c.b16 %v2598, %v2591
        %v3096 = vpack.c.b16 %v2599, %v2592
        %v3097 = vpack.c.b16 %v2600, %v2593
        %v3098 = vpack.c.b16 %v2601, %v2594
        %v3099 = vpack.c.b16 %v2609, %v2602
        %v3100 = vpack.c.b16 %v2610, %v2603
        %v3101 = vpack.c.b16 %v2611, %v2604
        %v3102 = vpack.c.b16 %v2612, %v2605
        %v3103 = vpack.c.b16 %v2613, %v2606
        %v3104 = vpack.c.b16 %v2614, %v2607
        %v3105 = vpack.c.b16 %v2615, %v2608
        %v3106 = vpack.c.b16 %v2623, %v2616
        %v3107 = vpack.c.b16 %v2624, %v2617
        %v3108 = vpack.c.b16 %v2625, %v2618
        %v3109 = vpack.c.b16 %v2626, %v2619
        %v3110 = vpack.c.b16 %v2627, %v2620
        %v3111 = vpack.c.b16 %v2628, %v2621
        %v3112 = vpack.c.b16 %v2629, %v2622
        %v3113 = vpack.c.b16 %v2637, %v2630
        %v3114 = vpack.c.b16 %v2638, %v2631
        %v3115 = vpack.c.b16 %v2639, %v2632
        %v3116 = vpack.c.b16 %v2640, %v2633
        %v3117 = vpack.c.b16 %v2641, %v2634
        %v3118 = vpack.c.b16 %v2642, %v2635
        %v3119 = vpack.c.b16 %v2643, %v2636
        %v3120 = vpack.c.b16 %v2651, %v2644
        %v3121 = vpack.c.b16 %v2652, %v2645
        %v3122 = vpack.c.b16 %v2653, %v2646
        %v3123 = vpack.c.b16 %v2654, %v2647
        %v3124 = vpack.c.b16 %v2655, %v2648
        %v3125 = vpack.c.b16 %v2656, %v2649
        %v3126 = vpack.c.b16 %v2657, %v2650
        %v3127 = vpack.c.b16 %v2665, %v2658
        %v3128 = vpack.c.b16 %v2666, %v2659
        %v3129 = vpack.c.b16 %v2667, %v2660
        %v3130 = vpack.c.b16 %v2668, %v2661
        %v3131 = vpack.c.b16 %v2669, %v2662
        %v3132 = vpack.c.b16 %v2670, %v2663
        %v3133 = vpack.c.b16 %v2671, %v2664
        %v3134 = vpack.c.b16 %v2679, %v2672
        %v3135 = vpack.c.b16 %v2680, %v2673
        %v3136 = vpack.c.b16 %v2681, %v2674
        %v3137 = vpack.c.b16 %v2682, %v2675
        %v3138 = vpack.c.b16 %v2683, %v2676
        %v3139 = vpack.c.b16 %v2684, %v2677
        %v3140 = vpack.c.b16 %v2685, %v2678
        %v3141 = vpack.c.b16 %v2693, %v2686
        %v3142 = vpack.c.b16 %v2694, %v2687
        %v3143 = vpack.c.b16 %v2695, %v2688
        %v3144 = vpack.c.b16 %v2696, %v2689
        %v3145 = vpack.c.b16 %v2697, %v2690
        %v3146 = vpack.c.b16 %v2698, %v2691
        %v3147 = vpack.c.b16 %v2699, %v2692
        %v3148 = vpack.c.b16 %v2707, %v2700
        %v3149 = vpack.c.b16 %v2708, %v2701
        %v3150 = vpack.c.b16 %v2709, %v2702
        %v3151 = vpack.c.b16 %v2710, %v2703
        %v3152 = vpack.c.b16 %v2711, %v2704
        %v3153 = vpack.c.b16 %v2712, %v2705
        %v3154 = vpack.c.b16 %v2713, %v2706
        %v3155 = vpack.c.b16 %v2721, %v2714
        %v3156 = vpack.c.b16 %v2722, %v2715
        %v3157 = vpack.c.b16 %v2723, %v2716
        %v3158 = vpack.c.b16 %v2724, %v2717
        %v3159 = vpack.c.b16 %v2725, %v2718
        %v3160 = vpack.c.b16 %v2726, %v2719
        %v3161 = vpack.c.b16 %v2727, %v2720
        %v3162 = vpack.c.b16 %v2735, %v2728
        %v3163 = vpack.c.b16 %v2736, %v2729
        %v3164 = vpack.c.b16 %v2737, %v2730
        %v3165 = vpack.c.b16 %v2738, %v2731
        %v3166 = vpack.c.b16 %v2739, %v2732
        %v3167 = vpack.c.b16 %v2740, %v2733
        %v3168 = vpack.c.b16 %v2741, %v2734
        %v3169 = vpack.c.b16 %v2749, %v2742
        %v3170 = vpack.c.b16 %v2750, %v2743
        %v3171 = vpack.c.b16 %v2751, %v2744
        %v3172 = vpack.c.b16 %v2752, %v2745
        %v3173 = vpack.c.b16 %v2753, %v2746
        %v3174 = vpack.c.b16 %v2754, %v2747
        %v3175 = vpack.c.b16 %v2755, %v2748
        %v3176 = vpack.c.b16 %v2763, %v2756
        %v3177 = vpack.c.b16 %v2764, %v2757
        %v3178 = vpack.c.b16 %v2765, %v2758
        %v3179 = vpack.c.b16 %v2766, %v2759
        %v3180 = vpack.c.b16 %v2767, %v2760
        %v3181 = vpack.c.b16 %v2768, %v2761
        %v3182 = vpack.c.b16 %v2769, %v2762
        %v3183 = vpack.c.b16 %v2777, %v2770
        %v3184 = vpack.c.b16 %v2778, %v2771
        %v3185 = vpack.c.b16 %v2779, %v2772
        %v3186 = vpack.c.b16 %v2780, %v2773
        %v3187 = vpack.c.b16 %v2781, %v2774
        %v3188 = vpack.c.b16 %v2782, %v2775
        %v3189 = vpack.c.b16 %v2783, %v2776
        %v3190 = vpack.c.b16 %v2791, %v2784
        %v3191 = vpack.c.b16 %v2792, %v2785
        %v3192 = vpack.c.b16 %v2793, %v2786
        %v3193 = vpack.c.b16 %v2794, %v2787
        %v3194 = vpack.c.b16 %v2795, %v2788
        %v3195 = vpack.c.b16 %v2796, %v2789
        %v3196 = vpack.c.b16 %v2797, %v2790
        %v3197 = vpack.c.b16 %v2805, %v2798
        %v3198 = vpack.c.b16 %v2806, %v2799
        %v3199 = vpack.c.b16 %v2807, %v2800
        %v3200 = vpack.c.b16 %v2808, %v2801
        %v3201 = vpack.c.b16 %v2809, %v2802
        %v3202 = vpack.c.b16 %v2810, %v2803
        %v3203 = vpack.c.b16 %v2811, %v2804
        %3596 = vmatprep.subr.bf16.mxu0 %v2862
        %3597 = vmatpush1.bf16.msra.mxu0 %v2861
        %3598 = vmatprep.subr.bf16.mxu0 %v2855
        %3599 = vmatpush1.bf16.msra.mxu0 %v2854
        %3600 = vmatprep.subr.bf16.mxu0 %v2848
        %3601 = vmatpush1.bf16.msra.mxu0 %v2847
        %3602 = vmatprep.subr.bf16.mxu0 %v2841
        %3603 = vmatpush1.bf16.msra.mxu0 %v2840
        %3604 = vmatprep.subr.bf16.mxu0 %v2834
        %3605 = vmatpush1.bf16.msra.mxu0 %v2833
        %3606 = vmatprep.subr.bf16.mxu0 %v2827
        %3607 = vmatpush1.bf16.msra.mxu0 %v2826
        %3608 = vmatprep.subr.bf16.mxu0 %v2820
        %3609 = vmatpush1.bf16.msra.mxu0 %v2819
        %3610 = vmatprep.subr.bf16.mxu0 %v2813
        %3611 = vmatpush1.bf16.msra.mxu0 %v2812
        %3612 = vmatprep.subr.bf16.mxu0 %v2918
        %3613 = vmatpush2.bf16.msra.mxu0 %v2917
        %3614 = vmatprep.subr.bf16.mxu0 %v2911
        %3615 = vmatpush2.bf16.msra.mxu0 %v2910
        %3616 = vmatprep.subr.bf16.mxu0 %v2904
        %3617 = vmatpush2.bf16.msra.mxu0 %v2903
        %3618 = vmatprep.subr.bf16.mxu0 %v2897
        %3619 = vmatpush2.bf16.msra.mxu0 %v2896
        %3620 = vmatprep.subr.bf16.mxu0 %v2890
        %3621 = vmatpush2.bf16.msra.mxu0 %v2889
        %3622 = vmatprep.subr.bf16.mxu0 %v2883
        %3623 = vmatpush2.bf16.msra.mxu0 %v2882
        %3624 = vmatprep.subr.bf16.mxu0 %v2876
        %3625 = vmatpush2.bf16.msra.mxu0 %v2875
        %3626 = vmatprep.subr.bf16.mxu0 %v2869
        %3627 = vmatpush2.bf16.msra.mxu0 %v2868
        %3628 = vmatprep.mubr.bf16.mxu0 %v1082
        %3629 = vmatmul.mubr.bf16.gmra.mxu0 %v1081
        %v3630 = vpop.f32.mrf.mxu0
        %v3631 = vadd.f32 %v1548, %v3630
        %v3632 = vpop.f32.mrf.mxu0
        %v3633 = vadd.f32 %v1552, %v3632
        %v3634 = vpop.f32.mrf.mxu0
        %v3635 = vadd.f32 %v1548, %v3634
        %v3636 = vpop.f32.mrf.mxu0
        %v3637 = vadd.f32 %v1552, %v3636
        %3638 = vmatprep.mubr.bf16.mxu0 %v1089
        %3639 = vmatmul.mubr.bf16.gmra.mxu0 %v1088
        %v3640 = vpop.f32.mrf.mxu0
        %v3641 = vadd.f32 %v1548, %v3640
        %v3642 = vpop.f32.mrf.mxu0
        %v3643 = vadd.f32 %v1552, %v3642
        %v3644 = vpop.f32.mrf.mxu0
        %v3645 = vadd.f32 %v1548, %v3644
        %v3646 = vpop.f32.mrf.mxu0
        %v3647 = vadd.f32 %v1552, %v3646
        %3648 = vdwg.mxu0
        %3649 = vmatprep.subr.bf16.mxu0 %v2974
        %3650 = vmatpush1.bf16.msra.mxu0 %v2973
        %3651 = vmatprep.subr.bf16.mxu0 %v2967
        %3652 = vmatpush1.bf16.msra.mxu0 %v2966
        %3653 = vmatprep.subr.bf16.mxu0 %v2960
        %3654 = vmatpush1.bf16.msra.mxu0 %v2959
        %3655 = vmatprep.subr.bf16.mxu0 %v2953
        %3656 = vmatpush1.bf16.msra.mxu0 %v2952
        %3657 = vmatprep.subr.bf16.mxu0 %v2946
        %3658 = vmatpush1.bf16.msra.mxu0 %v2945
        %3659 = vmatprep.subr.bf16.mxu0 %v2939
        %3660 = vmatpush1.bf16.msra.mxu0 %v2938
        %3661 = vmatprep.subr.bf16.mxu0 %v2932
        %3662 = vmatpush1.bf16.msra.mxu0 %v2931
        %3663 = vmatprep.subr.bf16.mxu0 %v2925
        %3664 = vmatpush1.bf16.msra.mxu0 %v2924
        %3665 = vmatprep.subr.bf16.mxu0 %v3030
        %3666 = vmatpush2.bf16.msra.mxu0 %v3029
        %3667 = vmatprep.subr.bf16.mxu0 %v3023
        %3668 = vmatpush2.bf16.msra.mxu0 %v3022
        %3669 = vmatprep.subr.bf16.mxu0 %v3016
        %3670 = vmatpush2.bf16.msra.mxu0 %v3015
        %3671 = vmatprep.subr.bf16.mxu0 %v3009
        %3672 = vmatpush2.bf16.msra.mxu0 %v3008
        %3673 = vmatprep.subr.bf16.mxu0 %v3002
        %3674 = vmatpush2.bf16.msra.mxu0 %v3001
        %3675 = vmatprep.subr.bf16.mxu0 %v2995
        %3676 = vmatpush2.bf16.msra.mxu0 %v2994
        %3677 = vmatprep.subr.bf16.mxu0 %v2988
        %3678 = vmatpush2.bf16.msra.mxu0 %v2987
        %3679 = vmatprep.subr.bf16.mxu0 %v2981
        %3680 = vmatpush2.bf16.msra.mxu0 %v2980
        %3681 = vmatprep.mubr.bf16.mxu0 %v1084
        %3682 = vmatmul.mubr.bf16.gmra.mxu0 %v1083
        %v3683 = vpop.f32.mrf.mxu0
        %v3684 = vadd.f32 %v3631, %v3683
        %v3685 = vpop.f32.mrf.mxu0
        %v3686 = vadd.f32 %v3633, %v3685
        %v3687 = vpop.f32.mrf.mxu0
        %v3688 = vadd.f32 %v3635, %v3687
        %v3689 = vpop.f32.mrf.mxu0
        %v3690 = vadd.f32 %v3637, %v3689
        %3691 = vmatprep.mubr.bf16.mxu0 %v1091
        %3692 = vmatmul.mubr.bf16.gmra.mxu0 %v1090
        %v3693 = vpop.f32.mrf.mxu0
        %v3694 = vadd.f32 %v3641, %v3693
        %v3695 = vpop.f32.mrf.mxu0
        %v3696 = vadd.f32 %v3643, %v3695
        %v3697 = vpop.f32.mrf.mxu0
        %v3698 = vadd.f32 %v3645, %v3697
        %v3699 = vpop.f32.mrf.mxu0
        %v3700 = vadd.f32 %v3647, %v3699
        %3701 = vdwg.mxu0
        %3702 = vmatprep.subr.bf16.mxu0 %v3086
        %3703 = vmatpush1.bf16.msra.mxu0 %v3085
        %3704 = vmatprep.subr.bf16.mxu0 %v3079
        %3705 = vmatpush1.bf16.msra.mxu0 %v3078
        %3706 = vmatprep.subr.bf16.mxu0 %v3072
        %3707 = vmatpush1.bf16.msra.mxu0 %v3071
        %3708 = vmatprep.subr.bf16.mxu0 %v3065
        %3709 = vmatpush1.bf16.msra.mxu0 %v3064
        %3710 = vmatprep.subr.bf16.mxu0 %v3058
        %3711 = vmatpush1.bf16.msra.mxu0 %v3057
        %3712 = vmatprep.subr.bf16.mxu0 %v3051
        %3713 = vmatpush1.bf16.msra.mxu0 %v3050
        %3714 = vmatprep.subr.bf16.mxu0 %v3044
        %3715 = vmatpush1.bf16.msra.mxu0 %v3043
        %3716 = vmatprep.subr.bf16.mxu0 %v3037
        %3717 = vmatpush1.bf16.msra.mxu0 %v3036
        %3718 = vmatprep.subr.bf16.mxu0 %v3142
        %3719 = vmatpush2.bf16.msra.mxu0 %v3141
        %3720 = vmatprep.subr.bf16.mxu0 %v3135
        %3721 = vmatpush2.bf16.msra.mxu0 %v3134
        %3722 = vmatprep.subr.bf16.mxu0 %v3128
        %3723 = vmatpush2.bf16.msra.mxu0 %v3127
        %3724 = vmatprep.subr.bf16.mxu0 %v3121
        %3725 = vmatpush2.bf16.msra.mxu0 %v3120
        %3726 = vmatprep.subr.bf16.mxu0 %v3114
        %3727 = vmatpush2.bf16.msra.mxu0 %v3113
        %3728 = vmatprep.subr.bf16.mxu0 %v3107
        %3729 = vmatpush2.bf16.msra.mxu0 %v3106
        %3730 = vmatprep.subr.bf16.mxu0 %v3100
        %3731 = vmatpush2.bf16.msra.mxu0 %v3099
        %3732 = vmatprep.subr.bf16.mxu0 %v3093
        %3733 = vmatpush2.bf16.msra.mxu0 %v3092
        %3734 = vmatprep.mubr.bf16.mxu0 %v1086
        %3735 = vmatmul.mubr.bf16.gmra.mxu0 %v1085
        %v3736 = vpop.f32.mrf.mxu0
        %v3737 = vadd.f32 %v3684, %v3736
        %v3738 = vpop.f32.mrf.mxu0
        %v3739 = vadd.f32 %v3686, %v3738
        %v3740 = vpop.f32.mrf.mxu0
        %v3741 = vadd.f32 %v3688, %v3740
        %v3742 = vpop.f32.mrf.mxu0
        %v3743 = vadd.f32 %v3690, %v3742
        %3744 = vmatprep.mubr.bf16.mxu0 %v1093
        %3745 = vmatmul.mubr.bf16.gmra.mxu0 %v1092
        %v3746 = vpop.f32.mrf.mxu0
        %v3747 = vadd.f32 %v3694, %v3746
        %v3748 = vpop.f32.mrf.mxu0
        %v3749 = vadd.f32 %v3696, %v3748
        %v3750 = vpop.f32.mrf.mxu0
        %v3751 = vadd.f32 %v3698, %v3750
        %v3752 = vpop.f32.mrf.mxu0
        %v3753 = vadd.f32 %v3700, %v3752
        %3754 = vdwg.mxu0
        %3755 = vmatprep.subr.bf16.mxu0 %v3198
        %3756 = vmatpush1.bf16.msra.mxu0 %v3197
        %3757 = vmatprep.subr.bf16.mxu0 %v3191
        %3758 = vmatpush1.bf16.msra.mxu0 %v3190
        %3759 = vmatprep.subr.bf16.mxu0 %v3184
        %3760 = vmatpush1.bf16.msra.mxu0 %v3183
        %3761 = vmatprep.subr.bf16.mxu0 %v3177
        %3762 = vmatpush1.bf16.msra.mxu0 %v3176
        %3763 = vmatprep.subr.bf16.mxu0 %v3170
        %3764 = vmatpush1.bf16.msra.mxu0 %v3169
        %3765 = vmatprep.subr.bf16.mxu0 %v3163
        %3766 = vmatpush1.bf16.msra.mxu0 %v3162
        %3767 = vmatprep.subr.bf16.mxu0 %v3156
        %3768 = vmatpush1.bf16.msra.mxu0 %v3155
        %3769 = vmatprep.subr.bf16.mxu0 %v3149
        %3770 = vmatpush1.bf16.msra.mxu0 %v3148
        %3771 = vmatprep.subr.bf16.mxu0 0
        %3772 = vmatpush2.bf16.msra.mxu0 0
        %3773 = vmatprep.subr.bf16.mxu0 0
        %3774 = vmatpush2.bf16.msra.mxu0 0
        %3775 = vmatprep.subr.bf16.mxu0 0
        %3776 = vmatpush2.bf16.msra.mxu0 0
        %3777 = vmatprep.subr.bf16.mxu0 0
        %3778 = vmatpush2.bf16.msra.mxu0 0
        %3779 = vmatprep.subr.bf16.mxu0 0
        %3780 = vmatpush2.bf16.msra.mxu0 0
        %3781 = vmatprep.subr.bf16.mxu0 0
        %3782 = vmatpush2.bf16.msra.mxu0 0
        %3783 = vmatprep.subr.bf16.mxu0 0
        %3784 = vmatpush2.bf16.msra.mxu0 0
        %3785 = vmatprep.subr.bf16.mxu0 0
        %3786 = vmatpush2.bf16.msra.mxu0 0
        %3787 = vmatprep.mubr.bf16.mxu0 0
        %3788 = vmatmul.mubr.bf16.gmra.mxu0 %v1087
        %v3789 = vpop.f32.mrf.mxu0
        %v3790 = vadd.f32 %v3737, %v3789
        %v3791 = vpop.f32.mrf.mxu0
        %v3792 = vadd.f32 %v3739, %v3791
        %v3793 = vpop.f32.mrf.mxu0
        %v3794 = vadd.f32 %v3741, %v3793
        %v3795 = vpop.f32.mrf.mxu0
        %v3796 = vadd.f32 %v3743, %v3795
        %3797 = vmatprep.mubr.bf16.mxu0 0
        %3798 = vmatmul.mubr.bf16.gmra.mxu0 %v1094
        %v3799 = vpop.f32.mrf.mxu0
        %v3800 = vadd.f32 %v3747, %v3799
        %v3801 = vpop.f32.mrf.mxu0
        %v3802 = vadd.f32 %v3749, %v3801
        %v3803 = vpop.f32.mrf.mxu0
        %v3804 = vadd.f32 %v3751, %v3803
        %v3805 = vpop.f32.mrf.mxu0
        %v3806 = vadd.f32 %v3753, %v3805
        %3807 = vdwg.mxu0
        %3808 = vmatprep.subr.bf16.mxu0 %v2864
        %3809 = vmatpush1.bf16.msra.mxu0 %v2863
        %3810 = vmatprep.subr.bf16.mxu0 %v2857
        %3811 = vmatpush1.bf16.msra.mxu0 %v2856
        %3812 = vmatprep.subr.bf16.mxu0 %v2850
        %3813 = vmatpush1.bf16.msra.mxu0 %v2849
        %3814 = vmatprep.subr.bf16.mxu0 %v2843
        %3815 = vmatpush1.bf16.msra.mxu0 %v2842
        %3816 = vmatprep.subr.bf16.mxu0 %v2836
        %3817 = vmatpush1.bf16.msra.mxu0 %v2835
        %3818 = vmatprep.subr.bf16.mxu0 %v2829
        %3819 = vmatpush1.bf16.msra.mxu0 %v2828
        %3820 = vmatprep.subr.bf16.mxu0 %v2822
        %3821 = vmatpush1.bf16.msra.mxu0 %v2821
        %3822 = vmatprep.subr.bf16.mxu0 %v2815
        %3823 = vmatpush1.bf16.msra.mxu0 %v2814
        %3824 = vmatprep.subr.bf16.mxu0 %v2920
        %3825 = vmatpush2.bf16.msra.mxu0 %v2919
        %3826 = vmatprep.subr.bf16.mxu0 %v2913
        %3827 = vmatpush2.bf16.msra.mxu0 %v2912
        %3828 = vmatprep.subr.bf16.mxu0 %v2906
        %3829 = vmatpush2.bf16.msra.mxu0 %v2905
        %3830 = vmatprep.subr.bf16.mxu0 %v2899
        %3831 = vmatpush2.bf16.msra.mxu0 %v2898
        %3832 = vmatprep.subr.bf16.mxu0 %v2892
        %3833 = vmatpush2.bf16.msra.mxu0 %v2891
        %3834 = vmatprep.subr.bf16.mxu0 %v2885
        %3835 = vmatpush2.bf16.msra.mxu0 %v2884
        %3836 = vmatprep.subr.bf16.mxu0 %v2878
        %3837 = vmatpush2.bf16.msra.mxu0 %v2877
        %3838 = vmatprep.subr.bf16.mxu0 %v2871
        %3839 = vmatpush2.bf16.msra.mxu0 %v2870
        %3840 = vmatprep.mubr.bf16.mxu0 %v1082
        %3841 = vmatmul.mubr.bf16.gmra.mxu0 %v1081
        %v3842 = vpop.f32.mrf.mxu0
        %v3843 = vadd.f32 %v1556, %v3842
        %v3844 = vpop.f32.mrf.mxu0
        %v3845 = vadd.f32 %v1560, %v3844
        %v3846 = vpop.f32.mrf.mxu0
        %v3847 = vadd.f32 %v1556, %v3846
        %v3848 = vpop.f32.mrf.mxu0
        %v3849 = vadd.f32 %v1560, %v3848
        %3850 = vmatprep.mubr.bf16.mxu0 %v1089
        %3851 = vmatmul.mubr.bf16.gmra.mxu0 %v1088
        %v3852 = vpop.f32.mrf.mxu0
        %v3853 = vadd.f32 %v1556, %v3852
        %v3854 = vpop.f32.mrf.mxu0
        %v3855 = vadd.f32 %v1560, %v3854
        %v3856 = vpop.f32.mrf.mxu0
        %v3857 = vadd.f32 %v1556, %v3856
        %v3858 = vpop.f32.mrf.mxu0
        %v3859 = vadd.f32 %v1560, %v3858
        %3860 = vdwg.mxu0
        %3861 = vmatprep.subr.bf16.mxu0 %v2976
        %3862 = vmatpush1.bf16.msra.mxu0 %v2975
        %3863 = vmatprep.subr.bf16.mxu0 %v2969
        %3864 = vmatpush1.bf16.msra.mxu0 %v2968
        %3865 = vmatprep.subr.bf16.mxu0 %v2962
        %3866 = vmatpush1.bf16.msra.mxu0 %v2961
        %3867 = vmatprep.subr.bf16.mxu0 %v2955
        %3868 = vmatpush1.bf16.msra.mxu0 %v2954
        %3869 = vmatprep.subr.bf16.mxu0 %v2948
        %3870 = vmatpush1.bf16.msra.mxu0 %v2947
        %3871 = vmatprep.subr.bf16.mxu0 %v2941
        %3872 = vmatpush1.bf16.msra.mxu0 %v2940
        %3873 = vmatprep.subr.bf16.mxu0 %v2934
        %3874 = vmatpush1.bf16.msra.mxu0 %v2933
        %3875 = vmatprep.subr.bf16.mxu0 %v2927
        %3876 = vmatpush1.bf16.msra.mxu0 %v2926
        %3877 = vmatprep.subr.bf16.mxu0 %v3032
        %3878 = vmatpush2.bf16.msra.mxu0 %v3031
        %3879 = vmatprep.subr.bf16.mxu0 %v3025
        %3880 = vmatpush2.bf16.msra.mxu0 %v3024
        %3881 = vmatprep.subr.bf16.mxu0 %v3018
        %3882 = vmatpush2.bf16.msra.mxu0 %v3017
        %3883 = vmatprep.subr.bf16.mxu0 %v3011
        %3884 = vmatpush2.bf16.msra.mxu0 %v3010
        %3885 = vmatprep.subr.bf16.mxu0 %v3004
        %3886 = vmatpush2.bf16.msra.mxu0 %v3003
        %3887 = vmatprep.subr.bf16.mxu0 %v2997
        %3888 = vmatpush2.bf16.msra.mxu0 %v2996
        %3889 = vmatprep.subr.bf16.mxu0 %v2990
        %3890 = vmatpush2.bf16.msra.mxu0 %v2989
        %3891 = vmatprep.subr.bf16.mxu0 %v2983
        %3892 = vmatpush2.bf16.msra.mxu0 %v2982
        %3893 = vmatprep.mubr.bf16.mxu0 %v1084
        %3894 = vmatmul.mubr.bf16.gmra.mxu0 %v1083
        %v3895 = vpop.f32.mrf.mxu0
        %v3896 = vadd.f32 %v3843, %v3895
        %v3897 = vpop.f32.mrf.mxu0
        %v3898 = vadd.f32 %v3845, %v3897
        %v3899 = vpop.f32.mrf.mxu0
        %v3900 = vadd.f32 %v3847, %v3899
        %v3901 = vpop.f32.mrf.mxu0
        %v3902 = vadd.f32 %v3849, %v3901
        %3903 = vmatprep.mubr.bf16.mxu0 %v1091
        %3904 = vmatmul.mubr.bf16.gmra.mxu0 %v1090
        %v3905 = vpop.f32.mrf.mxu0
        %v3906 = vadd.f32 %v3853, %v3905
        %v3907 = vpop.f32.mrf.mxu0
        %v3908 = vadd.f32 %v3855, %v3907
        %v3909 = vpop.f32.mrf.mxu0
        %v3910 = vadd.f32 %v3857, %v3909
        %v3911 = vpop.f32.mrf.mxu0
        %v3912 = vadd.f32 %v3859, %v3911
        %3913 = vdwg.mxu0
        %3914 = vmatprep.subr.bf16.mxu0 %v3088
        %3915 = vmatpush1.bf16.msra.mxu0 %v3087
        %3916 = vmatprep.subr.bf16.mxu0 %v3081
        %3917 = vmatpush1.bf16.msra.mxu0 %v3080
        %3918 = vmatprep.subr.bf16.mxu0 %v3074
        %3919 = vmatpush1.bf16.msra.mxu0 %v3073
        %3920 = vmatprep.subr.bf16.mxu0 %v3067
        %3921 = vmatpush1.bf16.msra.mxu0 %v3066
        %3922 = vmatprep.subr.bf16.mxu0 %v3060
        %3923 = vmatpush1.bf16.msra.mxu0 %v3059
        %3924 = vmatprep.subr.bf16.mxu0 %v3053
        %3925 = vmatpush1.bf16.msra.mxu0 %v3052
        %3926 = vmatprep.subr.bf16.mxu0 %v3046
        %3927 = vmatpush1.bf16.msra.mxu0 %v3045
        %3928 = vmatprep.subr.bf16.mxu0 %v3039
        %3929 = vmatpush1.bf16.msra.mxu0 %v3038
        %3930 = vmatprep.subr.bf16.mxu0 %v3144
        %3931 = vmatpush2.bf16.msra.mxu0 %v3143
        %3932 = vmatprep.subr.bf16.mxu0 %v3137
        %3933 = vmatpush2.bf16.msra.mxu0 %v3136
        %3934 = vmatprep.subr.bf16.mxu0 %v3130
        %3935 = vmatpush2.bf16.msra.mxu0 %v3129
        %3936 = vmatprep.subr.bf16.mxu0 %v3123
        %3937 = vmatpush2.bf16.msra.mxu0 %v3122
        %3938 = vmatprep.subr.bf16.mxu0 %v3116
        %3939 = vmatpush2.bf16.msra.mxu0 %v3115
        %3940 = vmatprep.subr.bf16.mxu0 %v3109
        %3941 = vmatpush2.bf16.msra.mxu0 %v3108
        %3942 = vmatprep.subr.bf16.mxu0 %v3102
        %3943 = vmatpush2.bf16.msra.mxu0 %v3101
        %3944 = vmatprep.subr.bf16.mxu0 %v3095
        %3945 = vmatpush2.bf16.msra.mxu0 %v3094
        %3946 = vmatprep.mubr.bf16.mxu0 %v1086
        %3947 = vmatmul.mubr.bf16.gmra.mxu0 %v1085
        %v3948 = vpop.f32.mrf.mxu0
        %v3949 = vadd.f32 %v3896, %v3948
        %v3950 = vpop.f32.mrf.mxu0
        %v3951 = vadd.f32 %v3898, %v3950
        %v3952 = vpop.f32.mrf.mxu0
        %v3953 = vadd.f32 %v3900, %v3952
        %v3954 = vpop.f32.mrf.mxu0
        %v3955 = vadd.f32 %v3902, %v3954
        %3956 = vmatprep.mubr.bf16.mxu0 %v1093
        %3957 = vmatmul.mubr.bf16.gmra.mxu0 %v1092
        %v3958 = vpop.f32.mrf.mxu0
        %v3959 = vadd.f32 %v3906, %v3958
        %v3960 = vpop.f32.mrf.mxu0
        %v3961 = vadd.f32 %v3908, %v3960
        %v3962 = vpop.f32.mrf.mxu0
        %v3963 = vadd.f32 %v3910, %v3962
        %v3964 = vpop.f32.mrf.mxu0
        %v3965 = vadd.f32 %v3912, %v3964
        %3966 = vdwg.mxu0
        %3967 = vmatprep.subr.bf16.mxu0 %v3200
        %3968 = vmatpush1.bf16.msra.mxu0 %v3199
        %3969 = vmatprep.subr.bf16.mxu0 %v3193
        %3970 = vmatpush1.bf16.msra.mxu0 %v3192
        %3971 = vmatprep.subr.bf16.mxu0 %v3186
        %3972 = vmatpush1.bf16.msra.mxu0 %v3185
        %3973 = vmatprep.subr.bf16.mxu0 %v3179
        %3974 = vmatpush1.bf16.msra.mxu0 %v3178
        %3975 = vmatprep.subr.bf16.mxu0 %v3172
        %3976 = vmatpush1.bf16.msra.mxu0 %v3171
        %3977 = vmatprep.subr.bf16.mxu0 %v3165
        %3978 = vmatpush1.bf16.msra.mxu0 %v3164
        %3979 = vmatprep.subr.bf16.mxu0 %v3158
        %3980 = vmatpush1.bf16.msra.mxu0 %v3157
        %3981 = vmatprep.subr.bf16.mxu0 %v3151
        %3982 = vmatpush1.bf16.msra.mxu0 %v3150
        %3983 = vmatprep.subr.bf16.mxu0 0
        %3984 = vmatpush2.bf16.msra.mxu0 0
        %3985 = vmatprep.subr.bf16.mxu0 0
        %3986 = vmatpush2.bf16.msra.mxu0 0
        %3987 = vmatprep.subr.bf16.mxu0 0
        %3988 = vmatpush2.bf16.msra.mxu0 0
        %3989 = vmatprep.subr.bf16.mxu0 0
        %3990 = vmatpush2.bf16.msra.mxu0 0
        %3991 = vmatprep.subr.bf16.mxu0 0
        %3992 = vmatpush2.bf16.msra.mxu0 0
        %3993 = vmatprep.subr.bf16.mxu0 0
        %3994 = vmatpush2.bf16.msra.mxu0 0
        %3995 = vmatprep.subr.bf16.mxu0 0
        %3996 = vmatpush2.bf16.msra.mxu0 0
        %3997 = vmatprep.subr.bf16.mxu0 0
        %3998 = vmatpush2.bf16.msra.mxu0 0
        %3999 = vmatprep.mubr.bf16.mxu0 0
        %4000 = vmatmul.mubr.bf16.gmra.mxu0 %v1087
        %v4001 = vpop.f32.mrf.mxu0
        %v4002 = vadd.f32 %v3949, %v4001
        %v4003 = vpop.f32.mrf.mxu0
        %v4004 = vadd.f32 %v3951, %v4003
        %v4005 = vpop.f32.mrf.mxu0
        %v4006 = vadd.f32 %v3953, %v4005
        %v4007 = vpop.f32.mrf.mxu0
        %v4008 = vadd.f32 %v3955, %v4007
        %4009 = vmatprep.mubr.bf16.mxu0 0
        %4010 = vmatmul.mubr.bf16.gmra.mxu0 %v1094
        %v4011 = vpop.f32.mrf.mxu0
        %v4012 = vadd.f32 %v3959, %v4011
        %v4013 = vpop.f32.mrf.mxu0
        %v4014 = vadd.f32 %v3961, %v4013
        %v4015 = vpop.f32.mrf.mxu0
        %v4016 = vadd.f32 %v3963, %v4015
        %v4017 = vpop.f32.mrf.mxu0
        %v4018 = vadd.f32 %v3965, %v4017
        %4019 = vdwg.mxu0
        %4020 = vmatprep.subr.bf16.mxu0 %v2866
        %4021 = vmatpush1.bf16.msra.mxu0 %v2865
        %4022 = vmatprep.subr.bf16.mxu0 %v2859
        %4023 = vmatpush1.bf16.msra.mxu0 %v2858
        %4024 = vmatprep.subr.bf16.mxu0 %v2852
        %4025 = vmatpush1.bf16.msra.mxu0 %v2851
        %4026 = vmatprep.subr.bf16.mxu0 %v2845
        %4027 = vmatpush1.bf16.msra.mxu0 %v2844
        %4028 = vmatprep.subr.bf16.mxu0 %v2838
        %4029 = vmatpush1.bf16.msra.mxu0 %v2837
        %4030 = vmatprep.subr.bf16.mxu0 %v2831
        %4031 = vmatpush1.bf16.msra.mxu0 %v2830
        %4032 = vmatprep.subr.bf16.mxu0 %v2824
        %4033 = vmatpush1.bf16.msra.mxu0 %v2823
        %4034 = vmatprep.subr.bf16.mxu0 %v2817
        %4035 = vmatpush1.bf16.msra.mxu0 %v2816
        %4036 = vmatprep.subr.bf16.mxu0 %v2922
        %4037 = vmatpush2.bf16.msra.mxu0 %v2921
        %4038 = vmatprep.subr.bf16.mxu0 %v2915
        %4039 = vmatpush2.bf16.msra.mxu0 %v2914
        %4040 = vmatprep.subr.bf16.mxu0 %v2908
        %4041 = vmatpush2.bf16.msra.mxu0 %v2907
        %4042 = vmatprep.subr.bf16.mxu0 %v2901
        %4043 = vmatpush2.bf16.msra.mxu0 %v2900
        %4044 = vmatprep.subr.bf16.mxu0 %v2894
        %4045 = vmatpush2.bf16.msra.mxu0 %v2893
        %4046 = vmatprep.subr.bf16.mxu0 %v2887
        %4047 = vmatpush2.bf16.msra.mxu0 %v2886
        %4048 = vmatprep.subr.bf16.mxu0 %v2880
        %4049 = vmatpush2.bf16.msra.mxu0 %v2879
        %4050 = vmatprep.subr.bf16.mxu0 %v2873
        %4051 = vmatpush2.bf16.msra.mxu0 %v2872
        %4052 = vmatprep.mubr.bf16.mxu0 %v1082
        %4053 = vmatmul.mubr.bf16.gmra.mxu0 %v1081
        %v4054 = vpop.f32.mrf.mxu0
        %v4055 = vadd.f32 %v1564, %v4054
        %v4056 = vpop.f32.mrf.mxu0
        %v4057 = vadd.f32 %v1568, %v4056
        %v4058 = vpop.f32.mrf.mxu0
        %v4059 = vadd.f32 %v1564, %v4058
        %v4060 = vpop.f32.mrf.mxu0
        %v4061 = vadd.f32 %v1568, %v4060
        %4062 = vmatprep.mubr.bf16.mxu0 %v1089
        %4063 = vmatmul.mubr.bf16.gmra.mxu0 %v1088
        %v4064 = vpop.f32.mrf.mxu0
        %v4065 = vadd.f32 %v1564, %v4064
        %v4066 = vpop.f32.mrf.mxu0
        %v4067 = vadd.f32 %v1568, %v4066
        %v4068 = vpop.f32.mrf.mxu0
        %v4069 = vadd.f32 %v1564, %v4068
        %v4070 = vpop.f32.mrf.mxu0
        %v4071 = vadd.f32 %v1568, %v4070
        %4072 = vdwg.mxu0
        %4073 = vmatprep.subr.bf16.mxu0 %v2978
        %4074 = vmatpush1.bf16.msra.mxu0 %v2977
        %4075 = vmatprep.subr.bf16.mxu0 %v2971
        %4076 = vmatpush1.bf16.msra.mxu0 %v2970
        %4077 = vmatprep.subr.bf16.mxu0 %v2964
        %4078 = vmatpush1.bf16.msra.mxu0 %v2963
        %4079 = vmatprep.subr.bf16.mxu0 %v2957
        %4080 = vmatpush1.bf16.msra.mxu0 %v2956
        %4081 = vmatprep.subr.bf16.mxu0 %v2950
        %4082 = vmatpush1.bf16.msra.mxu0 %v2949
        %4083 = vmatprep.subr.bf16.mxu0 %v2943
        %4084 = vmatpush1.bf16.msra.mxu0 %v2942
        %4085 = vmatprep.subr.bf16.mxu0 %v2936
        %4086 = vmatpush1.bf16.msra.mxu0 %v2935
        %4087 = vmatprep.subr.bf16.mxu0 %v2929
        %4088 = vmatpush1.bf16.msra.mxu0 %v2928
        %4089 = vmatprep.subr.bf16.mxu0 %v3034
        %4090 = vmatpush2.bf16.msra.mxu0 %v3033
        %4091 = vmatprep.subr.bf16.mxu0 %v3027
        %4092 = vmatpush2.bf16.msra.mxu0 %v3026
        %4093 = vmatprep.subr.bf16.mxu0 %v3020
        %4094 = vmatpush2.bf16.msra.mxu0 %v3019
        %4095 = vmatprep.subr.bf16.mxu0 %v3013
        %4096 = vmatpush2.bf16.msra.mxu0 %v3012
        %4097 = vmatprep.subr.bf16.mxu0 %v3006
        %4098 = vmatpush2.bf16.msra.mxu0 %v3005
        %4099 = vmatprep.subr.bf16.mxu0 %v2999
        %4100 = vmatpush2.bf16.msra.mxu0 %v2998
        %4101 = vmatprep.subr.bf16.mxu0 %v2992
        %4102 = vmatpush2.bf16.msra.mxu0 %v2991
        %4103 = vmatprep.subr.bf16.mxu0 %v2985
        %4104 = vmatpush2.bf16.msra.mxu0 %v2984
        %4105 = vmatprep.mubr.bf16.mxu0 %v1084
        %4106 = vmatmul.mubr.bf16.gmra.mxu0 %v1083
        %v4107 = vpop.f32.mrf.mxu0
        %v4108 = vadd.f32 %v4055, %v4107
        %v4109 = vpop.f32.mrf.mxu0
        %v4110 = vadd.f32 %v4057, %v4109
        %v4111 = vpop.f32.mrf.mxu0
        %v4112 = vadd.f32 %v4059, %v4111
        %v4113 = vpop.f32.mrf.mxu0
        %v4114 = vadd.f32 %v4061, %v4113
        %4115 = vmatprep.mubr.bf16.mxu0 %v1091
        %4116 = vmatmul.mubr.bf16.gmra.mxu0 %v1090
        %v4117 = vpop.f32.mrf.mxu0
        %v4118 = vadd.f32 %v4065, %v4117
        %v4119 = vpop.f32.mrf.mxu0
        %v4120 = vadd.f32 %v4067, %v4119
        %v4121 = vpop.f32.mrf.mxu0
        %v4122 = vadd.f32 %v4069, %v4121
        %v4123 = vpop.f32.mrf.mxu0
        %v4124 = vadd.f32 %v4071, %v4123
        %4125 = vdwg.mxu0
        %4126 = vmatprep.subr.bf16.mxu0 %v3090
        %4127 = vmatpush1.bf16.msra.mxu0 %v3089
        %4128 = vmatprep.subr.bf16.mxu0 %v3083
        %4129 = vmatpush1.bf16.msra.mxu0 %v3082
        %4130 = vmatprep.subr.bf16.mxu0 %v3076
        %4131 = vmatpush1.bf16.msra.mxu0 %v3075
        %4132 = vmatprep.subr.bf16.mxu0 %v3069
        %4133 = vmatpush1.bf16.msra.mxu0 %v3068
        %4134 = vmatprep.subr.bf16.mxu0 %v3062
        %4135 = vmatpush1.bf16.msra.mxu0 %v3061
        %4136 = vmatprep.subr.bf16.mxu0 %v3055
        %4137 = vmatpush1.bf16.msra.mxu0 %v3054
        %4138 = vmatprep.subr.bf16.mxu0 %v3048
        %4139 = vmatpush1.bf16.msra.mxu0 %v3047
        %4140 = vmatprep.subr.bf16.mxu0 %v3041
        %4141 = vmatpush1.bf16.msra.mxu0 %v3040
        %4142 = vmatprep.subr.bf16.mxu0 %v3146
        %4143 = vmatpush2.bf16.msra.mxu0 %v3145
        %4144 = vmatprep.subr.bf16.mxu0 %v3139
        %4145 = vmatpush2.bf16.msra.mxu0 %v3138
        %4146 = vmatprep.subr.bf16.mxu0 %v3132
        %4147 = vmatpush2.bf16.msra.mxu0 %v3131
        %4148 = vmatprep.subr.bf16.mxu0 %v3125
        %4149 = vmatpush2.bf16.msra.mxu0 %v3124
        %4150 = vmatprep.subr.bf16.mxu0 %v3118
        %4151 = vmatpush2.bf16.msra.mxu0 %v3117
        %4152 = vmatprep.subr.bf16.mxu0 %v3111
        %4153 = vmatpush2.bf16.msra.mxu0 %v3110
        %4154 = vmatprep.subr.bf16.mxu0 %v3104
        %4155 = vmatpush2.bf16.msra.mxu0 %v3103
        %4156 = vmatprep.subr.bf16.mxu0 %v3097
        %4157 = vmatpush2.bf16.msra.mxu0 %v3096
        %4158 = vmatprep.mubr.bf16.mxu0 %v1086
        %4159 = vmatmul.mubr.bf16.gmra.mxu0 %v1085
        %v4160 = vpop.f32.mrf.mxu0
        %v4161 = vadd.f32 %v4108, %v4160
        %v4162 = vpop.f32.mrf.mxu0
        %v4163 = vadd.f32 %v4110, %v4162
        %v4164 = vpop.f32.mrf.mxu0
        %v4165 = vadd.f32 %v4112, %v4164
        %v4166 = vpop.f32.mrf.mxu0
        %v4167 = vadd.f32 %v4114, %v4166
        %4168 = vmatprep.mubr.bf16.mxu0 %v1093
        %4169 = vmatmul.mubr.bf16.gmra.mxu0 %v1092
        %v4170 = vpop.f32.mrf.mxu0
        %v4171 = vadd.f32 %v4118, %v4170
        %v4172 = vpop.f32.mrf.mxu0
        %v4173 = vadd.f32 %v4120, %v4172
        %v4174 = vpop.f32.mrf.mxu0
        %v4175 = vadd.f32 %v4122, %v4174
        %v4176 = vpop.f32.mrf.mxu0
        %v4177 = vadd.f32 %v4124, %v4176
        %4178 = vdwg.mxu0
        %4179 = vmatprep.subr.bf16.mxu0 %v3202
        %4180 = vmatpush1.bf16.msra.mxu0 %v3201
        %4181 = vmatprep.subr.bf16.mxu0 %v3195
        %4182 = vmatpush1.bf16.msra.mxu0 %v3194
        %4183 = vmatprep.subr.bf16.mxu0 %v3188
        %4184 = vmatpush1.bf16.msra.mxu0 %v3187
        %4185 = vmatprep.subr.bf16.mxu0 %v3181
        %4186 = vmatpush1.bf16.msra.mxu0 %v3180
        %4187 = vmatprep.subr.bf16.mxu0 %v3174
        %4188 = vmatpush1.bf16.msra.mxu0 %v3173
        %4189 = vmatprep.subr.bf16.mxu0 %v3167
        %4190 = vmatpush1.bf16.msra.mxu0 %v3166
        %4191 = vmatprep.subr.bf16.mxu0 %v3160
        %4192 = vmatpush1.bf16.msra.mxu0 %v3159
        %4193 = vmatprep.subr.bf16.mxu0 %v3153
        %4194 = vmatpush1.bf16.msra.mxu0 %v3152
        %4195 = vmatprep.subr.bf16.mxu0 0
        %4196 = vmatpush2.bf16.msra.mxu0 0
        %4197 = vmatprep.subr.bf16.mxu0 0
        %4198 = vmatpush2.bf16.msra.mxu0 0
        %4199 = vmatprep.subr.bf16.mxu0 0
        %4200 = vmatpush2.bf16.msra.mxu0 0
        %4201 = vmatprep.subr.bf16.mxu0 0
        %4202 = vmatpush2.bf16.msra.mxu0 0
        %4203 = vmatprep.subr.bf16.mxu0 0
        %4204 = vmatpush2.bf16.msra.mxu0 0
        %4205 = vmatprep.subr.bf16.mxu0 0
        %4206 = vmatpush2.bf16.msra.mxu0 0
        %4207 = vmatprep.subr.bf16.mxu0 0
        %4208 = vmatpush2.bf16.msra.mxu0 0
        %4209 = vmatprep.subr.bf16.mxu0 0
        %4210 = vmatpush2.bf16.msra.mxu0 0
        %4211 = vmatprep.mubr.bf16.mxu0 0
        %4212 = vmatmul.mubr.bf16.gmra.mxu0 %v1087
        %v4213 = vpop.f32.mrf.mxu0
        %v4214 = vadd.f32 %v4161, %v4213
        %v4215 = vpop.f32.mrf.mxu0
        %v4216 = vadd.f32 %v4163, %v4215
        %v4217 = vpop.f32.mrf.mxu0
        %v4218 = vadd.f32 %v4165, %v4217
        %v4219 = vpop.f32.mrf.mxu0
        %v4220 = vadd.f32 %v4167, %v4219
        %4221 = vmatprep.mubr.bf16.mxu0 0
        %4222 = vmatmul.mubr.bf16.gmra.mxu0 %v1094
        %v4223 = vpop.f32.mrf.mxu0
        %v4224 = vadd.f32 %v4171, %v4223
        %v4225 = vpop.f32.mrf.mxu0
        %v4226 = vadd.f32 %v4173, %v4225
        %v4227 = vpop.f32.mrf.mxu0
        %v4228 = vadd.f32 %v4175, %v4227
        %v4229 = vpop.f32.mrf.mxu0
        %v4230 = vadd.f32 %v4177, %v4229
        %4231 = vdwg.mxu0
        %4232 = vmatprep.subr.bf16.mxu0 0
        %4233 = vmatpush1.bf16.msra.mxu0 %v2867
        %4234 = vmatprep.subr.bf16.mxu0 0
        %4235 = vmatpush1.bf16.msra.mxu0 %v2860
        %4236 = vmatprep.subr.bf16.mxu0 0
        %4237 = vmatpush1.bf16.msra.mxu0 %v2853
        %4238 = vmatprep.subr.bf16.mxu0 0
        %4239 = vmatpush1.bf16.msra.mxu0 %v2846
        %4240 = vmatprep.subr.bf16.mxu0 0
        %4241 = vmatpush1.bf16.msra.mxu0 %v2839
        %4242 = vmatprep.subr.bf16.mxu0 0
        %4243 = vmatpush1.bf16.msra.mxu0 %v2832
        %4244 = vmatprep.subr.bf16.mxu0 0
        %4245 = vmatpush1.bf16.msra.mxu0 %v2825
        %4246 = vmatprep.subr.bf16.mxu0 0
        %4247 = vmatpush1.bf16.msra.mxu0 %v2818
        %4248 = vmatprep.subr.bf16.mxu0 0
        %4249 = vmatpush2.bf16.msra.mxu0 %v2923
        %4250 = vmatprep.subr.bf16.mxu0 0
        %4251 = vmatpush2.bf16.msra.mxu0 %v2916
        %4252 = vmatprep.subr.bf16.mxu0 0
        %4253 = vmatpush2.bf16.msra.mxu0 %v2909
        %4254 = vmatprep.subr.bf16.mxu0 0
        %4255 = vmatpush2.bf16.msra.mxu0 %v2902
        %4256 = vmatprep.subr.bf16.mxu0 0
        %4257 = vmatpush2.bf16.msra.mxu0 %v2895
        %4258 = vmatprep.subr.bf16.mxu0 0
        %4259 = vmatpush2.bf16.msra.mxu0 %v2888
        %4260 = vmatprep.subr.bf16.mxu0 0
        %4261 = vmatpush2.bf16.msra.mxu0 %v2881
        %4262 = vmatprep.subr.bf16.mxu0 0
        %4263 = vmatpush2.bf16.msra.mxu0 %v2874
        %4264 = vmatprep.mubr.bf16.mxu0 %v1082
        %4265 = vmatmul.mubr.bf16.gmra.mxu0 %v1081
        %v4266 = vpop.f32.mrf.mxu0
        %v4267 = vadd.f32 %v1572, %v4266
        %v4268 = vpop.f32.mrf.mxu0
        %v4269 = vpop.f32.mrf.mxu0
        %v4270 = vadd.f32 %v1572, %v4269
        %v4271 = vpop.f32.mrf.mxu0
        %4272 = vmatprep.mubr.bf16.mxu0 %v1089
        %4273 = vmatmul.mubr.bf16.gmra.mxu0 %v1088
        %v4274 = vpop.f32.mrf.mxu0
        %v4275 = vadd.f32 %v1572, %v4274
        %v4276 = vpop.f32.mrf.mxu0
        %v4277 = vpop.f32.mrf.mxu0
        %v4278 = vadd.f32 %v1572, %v4277
        %v4279 = vpop.f32.mrf.mxu0
        %4280 = vdwg.mxu0
        %4281 = vmatprep.subr.bf16.mxu0 0
        %4282 = vmatpush1.bf16.msra.mxu0 %v2979
        %4283 = vmatprep.subr.bf16.mxu0 0
        %4284 = vmatpush1.bf16.msra.mxu0 %v2972
        %4285 = vmatprep.subr.bf16.mxu0 0
        %4286 = vmatpush1.bf16.msra.mxu0 %v2965
        %4287 = vmatprep.subr.bf16.mxu0 0
        %4288 = vmatpush1.bf16.msra.mxu0 %v2958
        %4289 = vmatprep.subr.bf16.mxu0 0
        %4290 = vmatpush1.bf16.msra.mxu0 %v2951
        %4291 = vmatprep.subr.bf16.mxu0 0
        %4292 = vmatpush1.bf16.msra.mxu0 %v2944
        %4293 = vmatprep.subr.bf16.mxu0 0
        %4294 = vmatpush1.bf16.msra.mxu0 %v2937
        %4295 = vmatprep.subr.bf16.mxu0 0
        %4296 = vmatpush1.bf16.msra.mxu0 %v2930
        %4297 = vmatprep.subr.bf16.mxu0 0
        %4298 = vmatpush2.bf16.msra.mxu0 %v3035
        %4299 = vmatprep.subr.bf16.mxu0 0
        %4300 = vmatpush2.bf16.msra.mxu0 %v3028
        %4301 = vmatprep.subr.bf16.mxu0 0
        %4302 = vmatpush2.bf16.msra.mxu0 %v3021
        %4303 = vmatprep.subr.bf16.mxu0 0
        %4304 = vmatpush2.bf16.msra.mxu0 %v3014
        %4305 = vmatprep.subr.bf16.mxu0 0
        %4306 = vmatpush2.bf16.msra.mxu0 %v3007
        %4307 = vmatprep.subr.bf16.mxu0 0
        %4308 = vmatpush2.bf16.msra.mxu0 %v3000
        %4309 = vmatprep.subr.bf16.mxu0 0
        %4310 = vmatpush2.bf16.msra.mxu0 %v2993
        %4311 = vmatprep.subr.bf16.mxu0 0
        %4312 = vmatpush2.bf16.msra.mxu0 %v2986
        %4313 = vmatprep.mubr.bf16.mxu0 %v1084
        %4314 = vmatmul.mubr.bf16.gmra.mxu0 %v1083
        %v4315 = vpop.f32.mrf.mxu0
        %v4316 = vadd.f32 %v4267, %v4315
        %v4317 = vpop.f32.mrf.mxu0
        %v4318 = vpop.f32.mrf.mxu0
        %v4319 = vadd.f32 %v4270, %v4318
        %v4320 = vpop.f32.mrf.mxu0
        %4321 = vmatprep.mubr.bf16.mxu0 %v1091
        %4322 = vmatmul.mubr.bf16.gmra.mxu0 %v1090
        %v4323 = vpop.f32.mrf.mxu0
        %v4324 = vadd.f32 %v4275, %v4323
        %v4325 = vpop.f32.mrf.mxu0
        %v4326 = vpop.f32.mrf.mxu0
        %v4327 = vadd.f32 %v4278, %v4326
        %v4328 = vpop.f32.mrf.mxu0
        %4329 = vdwg.mxu0
        %4330 = vmatprep.subr.bf16.mxu0 0
        %4331 = vmatpush1.bf16.msra.mxu0 %v3091
        %4332 = vmatprep.subr.bf16.mxu0 0
        %4333 = vmatpush1.bf16.msra.mxu0 %v3084
        %4334 = vmatprep.subr.bf16.mxu0 0
        %4335 = vmatpush1.bf16.msra.mxu0 %v3077
        %4336 = vmatprep.subr.bf16.mxu0 0
        %4337 = vmatpush1.bf16.msra.mxu0 %v3070
        %4338 = vmatprep.subr.bf16.mxu0 0
        %4339 = vmatpush1.bf16.msra.mxu0 %v3063
        %4340 = vmatprep.subr.bf16.mxu0 0
        %4341 = vmatpush1.bf16.msra.mxu0 %v3056
        %4342 = vmatprep.subr.bf16.mxu0 0
        %4343 = vmatpush1.bf16.msra.mxu0 %v3049
        %4344 = vmatprep.subr.bf16.mxu0 0
        %4345 = vmatpush1.bf16.msra.mxu0 %v3042
        %4346 = vmatprep.subr.bf16.mxu0 0
        %4347 = vmatpush2.bf16.msra.mxu0 %v3147
        %4348 = vmatprep.subr.bf16.mxu0 0
        %4349 = vmatpush2.bf16.msra.mxu0 %v3140
        %4350 = vmatprep.subr.bf16.mxu0 0
        %4351 = vmatpush2.bf16.msra.mxu0 %v3133
        %4352 = vmatprep.subr.bf16.mxu0 0
        %4353 = vmatpush2.bf16.msra.mxu0 %v3126
        %4354 = vmatprep.subr.bf16.mxu0 0
        %4355 = vmatpush2.bf16.msra.mxu0 %v3119
        %4356 = vmatprep.subr.bf16.mxu0 0
        %4357 = vmatpush2.bf16.msra.mxu0 %v3112
        %4358 = vmatprep.subr.bf16.mxu0 0
        %4359 = vmatpush2.bf16.msra.mxu0 %v3105
        %4360 = vmatprep.subr.bf16.mxu0 0
        %4361 = vmatpush2.bf16.msra.mxu0 %v3098
        %4362 = vmatprep.mubr.bf16.mxu0 %v1086
        %4363 = vmatmul.mubr.bf16.gmra.mxu0 %v1085
        %v4364 = vpop.f32.mrf.mxu0
        %v4365 = vadd.f32 %v4316, %v4364
        %v4366 = vpop.f32.mrf.mxu0
        %v4367 = vpop.f32.mrf.mxu0
        %v4368 = vadd.f32 %v4319, %v4367
        %v4369 = vpop.f32.mrf.mxu0
        %4370 = vmatprep.mubr.bf16.mxu0 %v1093
        %4371 = vmatmul.mubr.bf16.gmra.mxu0 %v1092
        %v4372 = vpop.f32.mrf.mxu0
        %v4373 = vadd.f32 %v4324, %v4372
        %v4374 = vpop.f32.mrf.mxu0
        %v4375 = vpop.f32.mrf.mxu0
        %v4376 = vadd.f32 %v4327, %v4375
        %v4377 = vpop.f32.mrf.mxu0
        %4378 = vdwg.mxu0
        %4379 = vmatprep.subr.bf16.mxu0 0
        %4380 = vmatpush1.bf16.msra.mxu0 %v3203
        %4381 = vmatprep.subr.bf16.mxu0 0
        %4382 = vmatpush1.bf16.msra.mxu0 %v3196
        %4383 = vmatprep.subr.bf16.mxu0 0
        %4384 = vmatpush1.bf16.msra.mxu0 %v3189
        %4385 = vmatprep.subr.bf16.mxu0 0
        %4386 = vmatpush1.bf16.msra.mxu0 %v3182
        %4387 = vmatprep.subr.bf16.mxu0 0
        %4388 = vmatpush1.bf16.msra.mxu0 %v3175
        %4389 = vmatprep.subr.bf16.mxu0 0
        %4390 = vmatpush1.bf16.msra.mxu0 %v3168
        %4391 = vmatprep.subr.bf16.mxu0 0
        %4392 = vmatpush1.bf16.msra.mxu0 %v3161
        %4393 = vmatprep.subr.bf16.mxu0 0
        %4394 = vmatpush1.bf16.msra.mxu0 %v3154
        %4395 = vmatprep.subr.bf16.mxu0 0
        %4396 = vmatpush2.bf16.msra.mxu0 0
        %4397 = vmatprep.subr.bf16.mxu0 0
        %4398 = vmatpush2.bf16.msra.mxu0 0
        %4399 = vmatprep.subr.bf16.mxu0 0
        %4400 = vmatpush2.bf16.msra.mxu0 0
        %4401 = vmatprep.subr.bf16.mxu0 0
        %4402 = vmatpush2.bf16.msra.mxu0 0
        %4403 = vmatprep.subr.bf16.mxu0 0
        %4404 = vmatpush2.bf16.msra.mxu0 0
        %4405 = vmatprep.subr.bf16.mxu0 0
        %4406 = vmatpush2.bf16.msra.mxu0 0
        %4407 = vmatprep.subr.bf16.mxu0 0
        %4408 = vmatpush2.bf16.msra.mxu0 0
        %4409 = vmatprep.subr.bf16.mxu0 0
        %4410 = vmatpush2.bf16.msra.mxu0 0
        %4411 = vmatprep.mubr.bf16.mxu0 0
        %4412 = vmatmul.mubr.bf16.gmra.mxu0 %v1087
        %v4413 = vpop.f32.mrf.mxu0
        %v4414 = vadd.f32 %v4365, %v4413
        %v4415 = vpop.f32.mrf.mxu0
        %v4416 = vpop.f32.mrf.mxu0
        %v4417 = vadd.f32 %v4368, %v4416
        %v4418 = vpop.f32.mrf.mxu0
        %4419 = vmatprep.mubr.bf16.mxu0 0
        %4420 = vmatmul.mubr.bf16.gmra.mxu0 %v1094
        %v4421 = vpop.f32.mrf.mxu0
        %v4422 = vadd.f32 %v4373, %v4421
        %v4423 = vpop.f32.mrf.mxu0
        %v4424 = vpop.f32.mrf.mxu0
        %v4425 = vadd.f32 %v4376, %v4424
        %v4426 = vpop.f32.mrf.mxu0
        %4427 = vdwg.mxu0
        %v4428 = vmax.f32 %v3790, 0.0
        %v4429 = vmax.f32 %v3792, 0.0
        %v4430 = vmax.f32 %v4002, 0.0
        %v4431 = vmax.f32 %v4004, 0.0
        %v4432 = vmax.f32 %v4214, 0.0
        %v4433 = vmax.f32 %v4216, 0.0
        %v4434 = vmax.f32 %v4414, 0.0
        %v4435 = vmax.f32 %v3794, 0.0
        %v4436 = vmax.f32 %v3796, 0.0
        %v4437 = vmax.f32 %v4006, 0.0
        %v4438 = vmax.f32 %v4008, 0.0
        %v4439 = vmax.f32 %v4218, 0.0
        %v4440 = vmax.f32 %v4220, 0.0
        %v4441 = vmax.f32 %v4417, 0.0
        %v4442 = vmax.f32 %v3800, 0.0
        %v4443 = vmax.f32 %v3802, 0.0
        %v4444 = vmax.f32 %v4012, 0.0
        %v4445 = vmax.f32 %v4014, 0.0
        %v4446 = vmax.f32 %v4224, 0.0
        %v4447 = vmax.f32 %v4226, 0.0
        %v4448 = vmax.f32 %v4422, 0.0
        %v4449 = vmax.f32 %v3804, 0.0
        %v4450 = vmax.f32 %v3806, 0.0
        %v4451 = vmax.f32 %v4016, 0.0
        %v4452 = vmax.f32 %v4018, 0.0
        %v4453 = vmax.f32 %v4228, 0.0
        %v4454 = vmax.f32 %v4230, 0.0
        %v4455 = vmax.f32 %v4425, 0.0
        %v4456 = vld [vmem:[#allocation10] sm:$0xff]
        %v4458 = vlaneseq
        %v4459 = vshrl.u32 %v4458, 7
        %v4460 = vsub.s32 0, %v4459
        %v4461 = vrot.slane %v4456, %v4460
        %v4462 = vlaneseq
        %v4463 = vshrl.u32 %v4462, 7
        %v4464 = vsub.s32 1, %v4463
        %v4465 = vrot.slane %v4456, %v4464
        %v4466 = vlaneseq
        %v4467 = vshrl.u32 %v4466, 7
        %v4468 = vsub.s32 2, %v4467
        %v4469 = vrot.slane %v4456, %v4468
        %v4470 = vlaneseq
        %v4471 = vshrl.u32 %v4470, 7
        %v4472 = vsub.s32 3, %v4471
        %v4473 = vrot.slane %v4456, %v4472
        %v4474 = vlaneseq
        %v4475 = vshrl.u32 %v4474, 7
        %v4476 = vsub.s32 4, %v4475
        %v4477 = vrot.slane %v4456, %v4476
        %v4478 = vlaneseq
        %v4479 = vshrl.u32 %v4478, 7
        %v4480 = vsub.s32 5, %v4479
        %v4481 = vrot.slane %v4456, %v4480
        %v4482 = vlaneseq
        %v4483 = vshrl.u32 %v4482, 7
        %v4484 = vsub.s32 6, %v4483
        %v4485 = vrot.slane %v4456, %v4484
        %v4493 = vmul.f32 %v4428, %v4461
        %v4494 = vmul.f32 %v4429, %v4465
        %v4495 = vmul.f32 %v4430, %v4469
        %v4496 = vmul.f32 %v4431, %v4473
        %v4497 = vmul.f32 %v4432, %v4477
        %v4498 = vmul.f32 %v4433, %v4481
        %v4499 = vmul.f32 %v4434, %v4485
        %v4500 = vmul.f32 %v4435, %v4461
        %v4501 = vmul.f32 %v4436, %v4465
        %v4502 = vmul.f32 %v4437, %v4469
        %v4503 = vmul.f32 %v4438, %v4473
        %v4504 = vmul.f32 %v4439, %v4477
        %v4505 = vmul.f32 %v4440, %v4481
        %v4506 = vmul.f32 %v4441, %v4485
        %v4507 = vmul.f32 %v4442, %v4461
        %v4508 = vmul.f32 %v4443, %v4465
        %v4509 = vmul.f32 %v4444, %v4469
        %v4510 = vmul.f32 %v4445, %v4473
        %v4511 = vmul.f32 %v4446, %v4477
        %v4512 = vmul.f32 %v4447, %v4481
        %v4513 = vmul.f32 %v4448, %v4485
        %v4514 = vmul.f32 %v4449, %v4461
        %v4515 = vmul.f32 %v4450, %v4465
        %v4516 = vmul.f32 %v4451, %v4469
        %v4517 = vmul.f32 %v4452, %v4473
        %v4518 = vmul.f32 %v4453, %v4477
        %v4519 = vmul.f32 %v4454, %v4481
        %v4520 = vmul.f32 %v4455, %v4485
        %v4521 = vadd.f32 %v4493, %v4494
        %v4522 = vadd.f32 %v4521, %v4495
        %v4523 = vadd.f32 %v4522, %v4496
        %v4524 = vadd.f32 %v4523, %v4497
        %v4525 = vadd.f32 %v4524, %v4498
        %v4526 = vadd.f32 %v4525, %v4499
        %4527 = vadd.xlane.f32.xlu0 %v4526
        %v4528 = vpop.xlane.xlu0 %4527
        %v4529 = vadd.f32 %v4500, %v4501
        %v4530 = vadd.f32 %v4529, %v4502
        %v4531 = vadd.f32 %v4530, %v4503
        %v4532 = vadd.f32 %v4531, %v4504
        %v4533 = vadd.f32 %v4532, %v4505
        %v4534 = vadd.f32 %v4533, %v4506
        %4535 = vadd.xlane.f32.xlu0 %v4534
        %v4536 = vpop.xlane.xlu0 %4535
        %v4537 = vadd.f32 %v4507, %v4508
        %v4538 = vadd.f32 %v4537, %v4509
        %v4539 = vadd.f32 %v4538, %v4510
        %v4540 = vadd.f32 %v4539, %v4511
        %v4541 = vadd.f32 %v4540, %v4512
        %v4542 = vadd.f32 %v4541, %v4513
        %4543 = vadd.xlane.f32.xlu0 %v4542
        %v4544 = vpop.xlane.xlu0 %4543
        %v4545 = vadd.f32 %v4514, %v4515
        %v4546 = vadd.f32 %v4545, %v4516
        %v4547 = vadd.f32 %v4546, %v4517
        %v4548 = vadd.f32 %v4547, %v4518
        %v4549 = vadd.f32 %v4548, %v4519
        %v4550 = vadd.f32 %v4549, %v4520
        %4551 = vadd.xlane.f32.xlu0 %v4550
        %v4552 = vpop.xlane.xlu0 %4551
        %v4553 = vld [vmem:[#allocation11] sm:$0xff]
        %v4554 = vld [vmem:[#allocation11 + $0x8] sm:$0xff]
        %v4555 = vld [vmem:[#allocation11 + $0x10] sm:$0xff]
        %v4556 = vld [vmem:[#allocation11 + $0x18] sm:$0xff]
        %v4557 = vld [vmem:[#allocation11 + $0x20] sm:$0x11]
        %v4558 = vld [vmem:[#allocation13] sm:$0x3]
        %4560 = vset.pattern.permute.xlu0 0
        %4561 = vperm.xlu0 %4560, %v655
        %v4562 = vpop.permute.xlu0 %4561
        %4565 = vset.pattern.permute.xlu0 0
        %4566 = vperm.xlu0 %4565, %v656
        %v4567 = vpop.permute.xlu0 %4566
        %4570 = vset.pattern.permute.xlu0 0
        %4571 = vperm.xlu0 %4570, %v657
        %v4572 = vpop.permute.xlu0 %4571
        %4575 = vset.pattern.permute.xlu0 0
        %4576 = vperm.xlu0 %4575, %v658
        %v4577 = vpop.permute.xlu0 %4576
        %v4580 = vlaneseq
        %v4581 = vshrl.u32 %v4580, 7
        %v4582 = vsub.s32 0, %v4581
        %v4583 = vrot.slane %v4558, %v4582
        %v4584 = vlaneseq
        %v4585 = vshrl.u32 %v4584, 7
        %v4586 = vsub.s32 1, %v4585
        %v4587 = vrot.slane %v4558, %v4586
        %v4590 = vmul.f32 %v4562, %v4583
        %v4591 = vmul.f32 %v4562, %v4587
        %v4592 = vmul.f32 %v4567, %v4583
        %v4593 = vmul.f32 %v4567, %v4587
        %v4594 = vmul.f32 %v4572, %v4583
        %v4595 = vmul.f32 %v4572, %v4587
        %v4596 = vmul.f32 %v4577, %v4583
        %v4597 = vmul.f32 %v4577, %v4587
        %v4603 = vunpack.c.l.b16 %v4553
        %v4604 = vunpack.c.h.b16 %v4553
        %v4605 = vunpack.c.l.b16 %v4554
        %v4606 = vunpack.c.h.b16 %v4554
        %v4607 = vunpack.c.l.b16 %v4555
        %v4608 = vunpack.c.h.b16 %v4555
        %v4609 = vunpack.c.l.b16 %v4556
        %v4610 = vunpack.c.h.b16 %v4556
        %v4611 = vunpack.c.l.b16 %v4557
        %v4612 = vunpack.c.h.b16 %v4557
        %v4613 = vpack.c.b16 %v4605, %v4603
        %v4614 = vpack.c.b16 %v4606, %v4604
        %v4615 = vpack.c.b16 %v4609, %v4607
        %v4616 = vpack.c.b16 %v4610, %v4608
        %v4617 = vpack.c.b16 %v4611, %v4611
        %v4618 = vpack.c.b16 %v4612, %v4612
        %v4624 = vsel %vm823, %v4617, 0
        %v4627 = vsel %vm823, %v4618, 0
        %4629 = vmatprep.subr.bf16.mxu0 0
        %4630 = vmatpush1.bf16.msra.mxu0 0
        %4631 = vmatprep.subr.bf16.mxu0 0
        %4632 = vmatpush1.bf16.msra.mxu0 0
        %4633 = vmatprep.subr.bf16.mxu0 0
        %4634 = vmatpush1.bf16.msra.mxu0 0
        %4635 = vmatprep.subr.bf16.mxu0 0
        %4636 = vmatpush1.bf16.msra.mxu0 0
        %4637 = vmatprep.subr.bf16.mxu0 0
        %4638 = vmatpush1.bf16.msra.mxu0 0
        %4639 = vmatprep.subr.bf16.mxu0 %v4627
        %4640 = vmatpush1.bf16.msra.mxu0 %v4624
        %4641 = vmatprep.subr.bf16.mxu0 %v4616
        %4642 = vmatpush1.bf16.msra.mxu0 %v4615
        %4643 = vmatprep.subr.bf16.mxu0 %v4614
        %4644 = vmatpush1.bf16.msra.mxu0 %v4613
        %4645 = vmatprep.subr.bf16.mxu0 0
        %4646 = vmatpush2.bf16.msra.mxu0 0
        %4647 = vmatprep.subr.bf16.mxu0 0
        %4648 = vmatpush2.bf16.msra.mxu0 0
        %4649 = vmatprep.subr.bf16.mxu0 0
        %4650 = vmatpush2.bf16.msra.mxu0 0
        %4651 = vmatprep.subr.bf16.mxu0 0
        %4652 = vmatpush2.bf16.msra.mxu0 0
        %4653 = vmatprep.subr.bf16.mxu0 0
        %4654 = vmatpush2.bf16.msra.mxu0 0
        %4655 = vmatprep.subr.bf16.mxu0 0
        %4656 = vmatpush2.bf16.msra.mxu0 0
        %4657 = vmatprep.subr.bf16.mxu0 0
        %4658 = vmatpush2.bf16.msra.mxu0 0
        %4659 = vmatprep.subr.bf16.mxu0 0
        %4660 = vmatpush2.bf16.msra.mxu0 0
        %4661 = vmatprep.mubr.bf16.mxu0 0
        %4662 = vmatmul.mubr.bf16.gmra.mxu0 %v818
        %v4663 = vpop.f32.mrf.mxu0
        %v4664 = vadd.f32 %v4590, %v4663
        %v4665 = vpop.f32.mrf.mxu0
        %v4666 = vadd.f32 %v4591, %v4665
        %v4667 = vpop.f32.mrf.mxu0
        %v4668 = vadd.f32 %v4592, %v4667
        %v4669 = vpop.f32.mrf.mxu0
        %v4670 = vadd.f32 %v4593, %v4669
        %4671 = vmatprep.mubr.bf16.mxu0 0
        %4672 = vmatmul.mubr.bf16.gmra.mxu0 %v821
        %v4673 = vpop.f32.mrf.mxu0
        %v4674 = vadd.f32 %v4594, %v4673
        %v4675 = vpop.f32.mrf.mxu0
        %v4676 = vadd.f32 %v4595, %v4675
        %v4677 = vpop.f32.mrf.mxu0
        %v4678 = vadd.f32 %v4596, %v4677
        %v4679 = vpop.f32.mrf.mxu0
        %v4680 = vadd.f32 %v4597, %v4679
        %4681 = vdwg.mxu0
        %v4682 = vld [vmem:[#allocation14] sm:$0x3]
        %v4684 = vlaneseq
        %v4685 = vshrl.u32 %v4684, 7
        %v4686 = vsub.s32 0, %v4685
        %v4687 = vrot.slane %v4682, %v4686
        %v4688 = vlaneseq
        %v4689 = vshrl.u32 %v4688, 7
        %v4690 = vsub.s32 1, %v4689
        %v4691 = vrot.slane %v4682, %v4690
        %v4694 = vadd.f32 %v4664, %v4687
        %v4695 = vadd.f32 %v4666, %v4691
        %v4696 = vadd.f32 %v4668, %v4687
        %v4697 = vadd.f32 %v4670, %v4691
        %v4698 = vadd.f32 %v4674, %v4687
        %v4699 = vadd.f32 %v4676, %v4691
        %v4700 = vadd.f32 %v4678, %v4687
        %v4701 = vadd.f32 %v4680, %v4691
        %v4702 = vmax.f32 %v4694, 0.0
        %v4703 = vmax.f32 %v4695, 0.0
        %v4704 = vmax.f32 %v4696, 0.0
        %v4705 = vmax.f32 %v4697, 0.0
        %v4706 = vmax.f32 %v4698, 0.0
        %v4707 = vmax.f32 %v4699, 0.0
        %v4708 = vmax.f32 %v4700, 0.0
        %v4709 = vmax.f32 %v4701, 0.0
        %v4710 = vpack.c.bf16 %v4704, %v4702
        %v4711 = vpack.c.bf16 %v4705, %v4703
        %v4712 = vpack.c.bf16 %v4708, %v4706
        %v4713 = vpack.c.bf16 %v4709, %v4707
        %v4714 = vld [vmem:[#allocation16] sm:$0xff]
        %v4715 = vld [vmem:[#allocation16 + $0x8] sm:$0xff]
        %v4716 = vld [vmem:[#allocation16 + $0x10] sm:$0xff]
        %v4717 = vld [vmem:[#allocation16 + $0x18] sm:$0xff]
        %v4718 = vld [vmem:[#allocation16 + $0x20] sm:$0xff]
        %v4719 = vld [vmem:[#allocation16 + $0x28] sm:$0xff]
        %v4720 = vld [vmem:[#allocation16 + $0x30] sm:$0xff]
        %v4721 = vld [vmem:[#allocation16 + $0x38] sm:$0xff]
        %v4722 = vld [vmem:[#allocation16 + $0x40] sm:$0xff]
        %v4723 = vld [vmem:[#allocation16 + $0x48] sm:$0xff]
        %v4724 = vld [vmem:[#allocation16 + $0x50] sm:$0xff]
        %v4725 = vld [vmem:[#allocation16 + $0x58] sm:$0xff]
        %v4726 = vld [vmem:[#allocation16 + $0x60] sm:$0xff]
        %v4727 = vld [vmem:[#allocation16 + $0x68] sm:$0xff]
        %v4728 = vld [vmem:[#allocation16 + $0x70] sm:$0xff]
        %v4729 = vld [vmem:[#allocation16 + $0x78] sm:$0xff]
        %v4730 = vld [vmem:[#allocation16 + $0x80] sm:$0xff]
        %v4731 = vld [vmem:[#allocation16 + $0x88] sm:$0xff]
        %v4732 = vld [vmem:[#allocation16 + $0x90] sm:$0xff]
        %v4733 = vld [vmem:[#allocation16 + $0x98] sm:$0xff]
        %v4734 = vld [vmem:[#allocation16 + $0xa0] sm:$0xff]
        %v4735 = vld [vmem:[#allocation16 + $0xa8] sm:$0xff]
        %v4736 = vld [vmem:[#allocation16 + $0xb0] sm:$0xff]
        %v4737 = vld [vmem:[#allocation16 + $0xb8] sm:$0xff]
        %v4738 = vld [vmem:[#allocation16 + $0xc0] sm:$0xff]
        %v4739 = vld [vmem:[#allocation16 + $0xc8] sm:$0xff]
        %v4740 = vld [vmem:[#allocation16 + $0xd0] sm:$0xff]
        %v4741 = vld [vmem:[#allocation16 + $0xd8] sm:$0xff]
        %v4742 = vld [vmem:[#allocation16 + $0xe0] sm:$0xff]
        %v4743 = vld [vmem:[#allocation16 + $0xe8] sm:$0xff]
        %v4744 = vld [vmem:[#allocation16 + $0xf0] sm:$0xff]
        %v4745 = vld [vmem:[#allocation16 + $0xf8] sm:$0xff]
        %v4746 = vld [vmem:[#allocation17] sm:$0x3]
        %v4748 = vlaneseq
        %v4749 = vshrl.u32 %v4748, 7
        %v4750 = vsub.s32 0, %v4749
        %v4751 = vrot.slane %v4746, %v4750
        %v4752 = vlaneseq
        %v4753 = vshrl.u32 %v4752, 7
        %v4754 = vsub.s32 1, %v4753
        %v4755 = vrot.slane %v4746, %v4754
        %v4790 = vunpack.c.l.b16 %v4714
        %v4791 = vunpack.c.h.b16 %v4714
        %v4792 = vunpack.c.l.b16 %v4715
        %v4793 = vunpack.c.h.b16 %v4715
        %v4794 = vunpack.c.l.b16 %v4716
        %v4795 = vunpack.c.h.b16 %v4716
        %v4796 = vunpack.c.l.b16 %v4717
        %v4797 = vunpack.c.h.b16 %v4717
        %v4798 = vunpack.c.l.b16 %v4718
        %v4799 = vunpack.c.h.b16 %v4718
        %v4800 = vunpack.c.l.b16 %v4719
        %v4801 = vunpack.c.h.b16 %v4719
        %v4802 = vunpack.c.l.b16 %v4720
        %v4803 = vunpack.c.h.b16 %v4720
        %v4804 = vunpack.c.l.b16 %v4721
        %v4805 = vunpack.c.h.b16 %v4721
        %v4806 = vunpack.c.l.b16 %v4722
        %v4807 = vunpack.c.h.b16 %v4722
        %v4808 = vunpack.c.l.b16 %v4723
        %v4809 = vunpack.c.h.b16 %v4723
        %v4810 = vunpack.c.l.b16 %v4724
        %v4811 = vunpack.c.h.b16 %v4724
        %v4812 = vunpack.c.l.b16 %v4725
        %v4813 = vunpack.c.h.b16 %v4725
        %v4814 = vunpack.c.l.b16 %v4726
        %v4815 = vunpack.c.h.b16 %v4726
        %v4816 = vunpack.c.l.b16 %v4727
        %v4817 = vunpack.c.h.b16 %v4727
        %v4818 = vunpack.c.l.b16 %v4728
        %v4819 = vunpack.c.h.b16 %v4728
        %v4820 = vunpack.c.l.b16 %v4729
        %v4821 = vunpack.c.h.b16 %v4729
        %v4822 = vunpack.c.l.b16 %v4730
        %v4823 = vunpack.c.h.b16 %v4730
        %v4824 = vunpack.c.l.b16 %v4731
        %v4825 = vunpack.c.h.b16 %v4731
        %v4826 = vunpack.c.l.b16 %v4732
        %v4827 = vunpack.c.h.b16 %v4732
        %v4828 = vunpack.c.l.b16 %v4733
        %v4829 = vunpack.c.h.b16 %v4733
        %v4830 = vunpack.c.l.b16 %v4734
        %v4831 = vunpack.c.h.b16 %v4734
        %v4832 = vunpack.c.l.b16 %v4735
        %v4833 = vunpack.c.h.b16 %v4735
        %v4834 = vunpack.c.l.b16 %v4736
        %v4835 = vunpack.c.h.b16 %v4736
        %v4836 = vunpack.c.l.b16 %v4737
        %v4837 = vunpack.c.h.b16 %v4737
        %v4838 = vunpack.c.l.b16 %v4738
        %v4839 = vunpack.c.h.b16 %v4738
        %v4840 = vunpack.c.l.b16 %v4739
        %v4841 = vunpack.c.h.b16 %v4739
        %v4842 = vunpack.c.l.b16 %v4740
        %v4843 = vunpack.c.h.b16 %v4740
        %v4844 = vunpack.c.l.b16 %v4741
        %v4845 = vunpack.c.h.b16 %v4741
        %v4846 = vunpack.c.l.b16 %v4742
        %v4847 = vunpack.c.h.b16 %v4742
        %v4848 = vunpack.c.l.b16 %v4743
        %v4849 = vunpack.c.h.b16 %v4743
        %v4850 = vunpack.c.l.b16 %v4744
        %v4851 = vunpack.c.h.b16 %v4744
        %v4852 = vunpack.c.l.b16 %v4745
        %v4853 = vunpack.c.h.b16 %v4745
        %v4854 = vpack.c.b16 %v4792, %v4790
        %v4855 = vpack.c.b16 %v4793, %v4791
        %v4856 = vpack.c.b16 %v4796, %v4794
        %v4857 = vpack.c.b16 %v4797, %v4795
        %v4858 = vpack.c.b16 %v4800, %v4798
        %v4859 = vpack.c.b16 %v4801, %v4799
        %v4860 = vpack.c.b16 %v4804, %v4802
        %v4861 = vpack.c.b16 %v4805, %v4803
        %v4862 = vpack.c.b16 %v4808, %v4806
        %v4863 = vpack.c.b16 %v4809, %v4807
        %v4864 = vpack.c.b16 %v4812, %v4810
        %v4865 = vpack.c.b16 %v4813, %v4811
        %v4866 = vpack.c.b16 %v4816, %v4814
        %v4867 = vpack.c.b16 %v4817, %v4815
        %v4868 = vpack.c.b16 %v4820, %v4818
        %v4869 = vpack.c.b16 %v4821, %v4819
        %v4870 = vpack.c.b16 %v4824, %v4822
        %v4871 = vpack.c.b16 %v4825, %v4823
        %v4872 = vpack.c.b16 %v4828, %v4826
        %v4873 = vpack.c.b16 %v4829, %v4827
        %v4874 = vpack.c.b16 %v4832, %v4830
        %v4875 = vpack.c.b16 %v4833, %v4831
        %v4876 = vpack.c.b16 %v4836, %v4834
        %v4877 = vpack.c.b16 %v4837, %v4835
        %v4878 = vpack.c.b16 %v4840, %v4838
        %v4879 = vpack.c.b16 %v4841, %v4839
        %v4880 = vpack.c.b16 %v4844, %v4842
        %v4881 = vpack.c.b16 %v4845, %v4843
        %v4882 = vpack.c.b16 %v4848, %v4846
        %v4883 = vpack.c.b16 %v4849, %v4847
        %v4884 = vpack.c.b16 %v4852, %v4850
        %v4885 = vpack.c.b16 %v4853, %v4851
        %4918 = vmatprep.subr.bf16.mxu0 %v4869
        %4919 = vmatpush1.bf16.msra.mxu0 %v4868
        %4920 = vmatprep.subr.bf16.mxu0 %v4867
        %4921 = vmatpush1.bf16.msra.mxu0 %v4866
        %4922 = vmatprep.subr.bf16.mxu0 %v4865
        %4923 = vmatpush1.bf16.msra.mxu0 %v4864
        %4924 = vmatprep.subr.bf16.mxu0 %v4863
        %4925 = vmatpush1.bf16.msra.mxu0 %v4862
        %4926 = vmatprep.subr.bf16.mxu0 %v4861
        %4927 = vmatpush1.bf16.msra.mxu0 %v4860
        %4928 = vmatprep.subr.bf16.mxu0 %v4859
        %4929 = vmatpush1.bf16.msra.mxu0 %v4858
        %4930 = vmatprep.subr.bf16.mxu0 %v4857
        %4931 = vmatpush1.bf16.msra.mxu0 %v4856
        %4932 = vmatprep.subr.bf16.mxu0 %v4855
        %4933 = vmatpush1.bf16.msra.mxu0 %v4854
        %4934 = vmatprep.subr.bf16.mxu0 %v4885
        %4935 = vmatpush2.bf16.msra.mxu0 %v4884
        %4936 = vmatprep.subr.bf16.mxu0 %v4883
        %4937 = vmatpush2.bf16.msra.mxu0 %v4882
        %4938 = vmatprep.subr.bf16.mxu0 %v4881
        %4939 = vmatpush2.bf16.msra.mxu0 %v4880
        %4940 = vmatprep.subr.bf16.mxu0 %v4879
        %4941 = vmatpush2.bf16.msra.mxu0 %v4878
        %4942 = vmatprep.subr.bf16.mxu0 %v4877
        %4943 = vmatpush2.bf16.msra.mxu0 %v4876
        %4944 = vmatprep.subr.bf16.mxu0 %v4875
        %4945 = vmatpush2.bf16.msra.mxu0 %v4874
        %4946 = vmatprep.subr.bf16.mxu0 %v4873
        %4947 = vmatpush2.bf16.msra.mxu0 %v4872
        %4948 = vmatprep.subr.bf16.mxu0 %v4871
        %4949 = vmatpush2.bf16.msra.mxu0 %v4870
        %4950 = vmatprep.mubr.bf16.mxu0 %v4711
        %4951 = vmatmul.mubr.bf16.gmra.mxu0 %v4710
        %v4952 = vpop.f32.mrf.mxu0
        %v4953 = vadd.f32 %v4751, %v4952
        %v4954 = vpop.f32.mrf.mxu0
        %v4955 = vadd.f32 %v4755, %v4954
        %v4956 = vpop.f32.mrf.mxu0
        %v4957 = vadd.f32 %v4751, %v4956
        %v4958 = vpop.f32.mrf.mxu0
        %v4959 = vadd.f32 %v4755, %v4958
        %4960 = vmatprep.mubr.bf16.mxu0 %v4713
        %4961 = vmatmul.mubr.bf16.gmra.mxu0 %v4712
        %v4962 = vpop.f32.mrf.mxu0
        %v4963 = vadd.f32 %v4751, %v4962
        %v4964 = vpop.f32.mrf.mxu0
        %v4965 = vadd.f32 %v4755, %v4964
        %v4966 = vpop.f32.mrf.mxu0
        %v4967 = vadd.f32 %v4751, %v4966
        %v4968 = vpop.f32.mrf.mxu0
        %v4969 = vadd.f32 %v4755, %v4968
        %4970 = vdwg.mxu0
        %v4971 = vmax.f32 %v4953, 0.0
        %v4972 = vmax.f32 %v4955, 0.0
        %v4973 = vmax.f32 %v4957, 0.0
        %v4974 = vmax.f32 %v4959, 0.0
        %v4975 = vmax.f32 %v4963, 0.0
        %v4976 = vmax.f32 %v4965, 0.0
        %v4977 = vmax.f32 %v4967, 0.0
        %v4978 = vmax.f32 %v4969, 0.0
        %v4979 = vld [vmem:[#allocation19] sm:$0x3]
        %v4981 = vlaneseq
        %v4982 = vshrl.u32 %v4981, 7
        %v4983 = vsub.s32 0, %v4982
        %v4984 = vrot.slane %v4979, %v4983
        %v4985 = vlaneseq
        %v4986 = vshrl.u32 %v4985, 7
        %v4987 = vsub.s32 1, %v4986
        %v4988 = vrot.slane %v4979, %v4987
        %v4991 = vmul.f32 %v4971, %v4984
        %v4992 = vmul.f32 %v4972, %v4988
        %v4993 = vmul.f32 %v4973, %v4984
        %v4994 = vmul.f32 %v4974, %v4988
        %v4995 = vmul.f32 %v4975, %v4984
        %v4996 = vmul.f32 %v4976, %v4988
        %v4997 = vmul.f32 %v4977, %v4984
        %v4998 = vmul.f32 %v4978, %v4988
        %v4999 = vadd.f32 %v4991, %v4992
        %5000 = vadd.xlane.f32.xlu0 %v4999
        %v5001 = vpop.xlane.xlu0 %5000
        %v5002 = vadd.f32 %v4993, %v4994
        %5003 = vadd.xlane.f32.xlu0 %v5002
        %v5004 = vpop.xlane.xlu0 %5003
        %v5005 = vadd.f32 %v4995, %v4996
        %5006 = vadd.xlane.f32.xlu0 %v5005
        %v5007 = vpop.xlane.xlu0 %5006
        %v5008 = vadd.f32 %v4997, %v4998
        %5009 = vadd.xlane.f32.xlu0 %v5008
        %v5010 = vpop.xlane.xlu0 %5009
        %v5011 = vlaneseq
        %v5012 = vand.u32 %v5011, 127
        %vm5013 = vcmp.eq.s32.totalorder %v5012, 0
        %vm5014 = vcmp.eq.s32.totalorder %v5012, 1
        %v5015 = vsel %vm5014, %v5001, 0.0
        %v5016 = vsel %vm5014, %v5004, 0.0
        %v5017 = vsel %vm5014, %v5007, 0.0
        %v5018 = vsel %vm5014, %v5010, 0.0
        %v5019 = vsel %vm5013, %v4528, %v5015
        %v5020 = vsel %vm5013, %v4536, %v5016
        %v5021 = vsel %vm5013, %v4544, %v5017
        %v5022 = vsel %vm5013, %v4552, %v5018
        %v5023 = vld [vmem:[#allocation20] sm:$0x1]
        %v5025 = vlaneseq
        %v5026 = vshrl.u32 %v5025, 7
        %v5027 = vsub.s32 0, %v5026
        %v5028 = vrot.slane %v5023, %v5027
        %v5030 = vadd.f32 %v5019, %v5028
        %v5031 = vadd.f32 %v5020, %v5028
        %v5032 = vadd.f32 %v5021, %v5028
        %v5033 = vadd.f32 %v5022, %v5028
        %v5034 = vand.u32 2147483647, %v5030
        %v5035 = vand.u32 2147483647, %v5031
        %v5036 = vand.u32 2147483647, %v5032
        %v5037 = vand.u32 2147483647, %v5033
        %5038 = vst [vmem:[%s636] sm:$0xff] %v5034
        %5039 = vst [vmem:[%s636 + $0x8] sm:$0xff] %v5035
        %5040 = vst [vmem:[%s636 + $0x10] sm:$0xff] %v5036
        %5041 = vst [vmem:[%s636 + $0x18] sm:$0xff] %v5037
        %s5042 = sand.u32 %s347, 1
        %s5043 = scalar_lea.sflag [#allocation4], %s5042
        %s5044 = sand.u32 %s347, 1
        %s5045 = smul.addr %s5044, 32
        %s5046 = scalar_lea.vmem [#allocation22], %s5045
        // Predicated region
        $region125: #{tpu_custom_call.1} parent=75 // pred_check
          %p5047 = pneg %p357
        $region126: #{tpu_custom_call.1} parent=75 // pred_check_branch
          %5049 = sbr.rel (%p5047) target = $region128
        $region127: #{tpu_custom_call.1} parent=75 // pred_region
          %s5050 = smul.u32 4, %s35
          %s5052 = ssub.s32 512, 512
          %5053 = vsyncadd %s5043, %s5052
          %s5054 = smul.addr %s5050, 128
          %s5055 = scalar_lea.hbm %s14, %s5054
          %s5056 = sshll.u32 %s5046, 4
          %s5057 = int_to_ptr.vmem [resolvable:$true] %s5056
          %5062 = dma.vmem_to_hbm [thread:$0]  %s5057, 512, %s5055, %s5043, 128, 128, 8
        $region128: #{tpu_custom_call.1} parent=75 // pred_fallthru
          _
      $region76: #{tpu_custom_call.1} parent=5 // pred_fallthru
        _
      %p5063 = scmp.le.s32.totalorder 2, %s30
      // Predicated region
      $region129: #{tpu_custom_call.1} parent=5 // pred_check
        %p5064 = pneg %p5063
      $region130: #{tpu_custom_call.1} parent=5 // pred_check_branch
        %5066 = sbr.rel (%p5064) target = $region132
      $region131: #{tpu_custom_call.1} parent=5 // pred_region
        %s5067 = ssub.s32 %s30, 2
        // Predicated region
        $region133: #{tpu_custom_call.1} parent=131 // pred_check
          %p5068 = pneg %p363
        $region134: #{tpu_custom_call.1} parent=131 // pred_check_branch
          %5070 = sbr.rel (%p5068) target = $region136
        $region135: #{tpu_custom_call.1} parent=131 // pred_region
          %s5071 = sand.u32 %s348, 1
          %s5072 = scalar_lea.sflag [#allocation4], %s5071
          %s5073 = sand.u32 %s348, 1
          %s5074 = smul.addr %s5073, 32
          %s5075 = scalar_lea.vmem [#allocation22], %s5074
          %5076 = dma.done %s5072, 512
        $region136: #{tpu_custom_call.1} parent=131 // pred_fallthru
          _
      $region132: #{tpu_custom_call.1} parent=5 // pred_fallthru
        _
    $region6: #{tpu_custom_call.1} parent=1 // loop_footer
      %s34 = sadd.s32 1, %s30
    $region7: #{tpu_custom_call.1} parent=1 // loop_footer_branch
      %29 = sbr.rel target = $region3
    $region8: #{tpu_custom_call.1} parent=1 // loop_exit
      _
    %5077 = vsyncpa [#allocation3], 1
    %s5078 = scalar_lea.sflag [#allocation3], 1
    %5079 = vsyncpa %s5078, 1
    %5080 = vsyncpa [#allocation6], 1
    %5081 = vsyncpa [#allocation9], 1
    %5082 = vsyncpa [#allocation12], 1
    %5083 = vsyncpa [#allocation15], 1
    %5084 = vsyncpa [#allocation18], 1
    %5085 = vsyncpa [#allocation21], 1
    %5086 = vsyncpa [#allocation4], 1
    %s5087 = scalar_lea.sflag [#allocation4], 1
    %5088 = vsyncpa %s5087, 1

</llo_original>
